<compile_context>
chip_gen: v6e
topology: v6e:2x2x1
jax: 0.10.0
libtpu: 0.0.40
codegen_flags: <defaults>
</compile_context>

<pallas_src>
import functools
import math

import jax
import jax.numpy as jnp
import numpy as np
from jax.experimental import pallas as pl
from jax.experimental.pallas import tpu as pltpu

# ----------------------------- problem sizes --------------------------------
N = 2            # batch
C_IN = 4         # input_dim
H = 8            # h_x
W = 8            # w_x
EMBED_DIM = 32   # embed_dim (small for the test)
NUM_HEADS = 4    # num_heads
HIDDEN = EMBED_DIM * NUM_HEADS   # 128
S = H * W                        # 64
COND_DIM = 256                   # linear1 input features (fixed in the module)


# ------------------------------ fused kernel ---------------------------------
def _fused_kernel(x_ref, cemb_ref, wlin_ref, blin_ref, selr_ref, selc_ref,
                  shift_ref, wqkv_ref, bqkv_ref, wp_ref, bp_ref, o_ref,
                  *, n_head, e_dim, s, hidden):
    f32 = jnp.float32

    # ---- linear1 + F.normalize(dim=-1) --------------------------------------
    z = jnp.dot(cemb_ref[0], wlin_ref[...],
                preferred_element_type=f32) + blin_ref[...]           # (1, C*S)
    ss = jnp.sum(z * z, axis=-1, keepdims=True)                       # (1, 1)
    cflat = z * jax.lax.rsqrt(jnp.maximum(ss, 1e-24))                 # (1, C*S)

    # ---- scatter the CHW-flat vector into a pixel-major (S, C) image --------
    # c_mat[sp, ci] = cflat[ci*S + sp]; done with constant selection matrices
    # (broadcast-multiply + one matmul; no lane->sublane reshapes needed).
    c_mat = jnp.dot(cflat * selr_ref[...], selc_ref[...],
                    preferred_element_type=f32)                       # (S, C)

    # ---- im2col for the Q / K / V convs (x- and c-patches built together) ---
    xc = jnp.concatenate([x_ref[0], c_mat], axis=-1)                  # (S, 2C)
    taps = [jnp.dot(shift_ref[t], xc, preferred_element_type=f32)
            for t in range(9)]
    patches_xc = jnp.concatenate(taps, axis=-1)                       # (S, 18C)

    # ---- Q | K | V convs as a single matmul ----------------------------------
    qkv = jnp.dot(patches_xc, wqkv_ref[...],
                  preferred_element_type=f32) + bqkv_ref[...]         # (S, 3*HID)
    q = qkv[:, 0 * hidden:1 * hidden]                                 # (S, HID)
    k = qkv[:, 1 * hidden:2 * hidden]
    v = qkv[:, 2 * hidden:3 * hidden]

    # ---- cross-head attention, full 128-lane width ---------------------------
    #   dot[e, h, g] = scale * sum_s Q[s, h*E+e] * K[s, g*E+e]
    #   A = softmax over g ;  Y[s, h*E+e] = sum_g A[e, h, g] * V[s, g*E+e]
    # Rotating K/V by d*E lanes enumerates, for every output column, a unique
    # partner head g (same bijection for K and V, so the roll direction is
    # immaterial).  Everything stays (S, 128)-wide and lane-dense.
    scale = 1.0 / math.sqrt(e_dim / n_head)
    k_rolls = [k] + [pltpu.roll(k, d * e_dim, axis=1)
                     for d in range(1, n_head)]
    # Fold the 4 per-pair reductions over S into ONE ones-row MXU matmul.
    qk = jnp.concatenate([q * kr for kr in k_rolls], axis=-1)         # (S, 4*HID)
    ones_row = jnp.ones((1, s), f32)
    logits_all = jnp.dot(ones_row, qk,
                         preferred_element_type=f32) * scale          # (1, 4*HID)
    logits = [logits_all[:, d * hidden:(d + 1) * hidden]
              for d in range(n_head)]

    m = logits[0]
    for d in range(1, n_head):
        m = jnp.maximum(m, logits[d])
    ps = [jnp.exp(l - m) for l in logits]
    denom = ps[0]
    for d in range(1, n_head):
        denom = denom + ps[d]
    inv = pl.reciprocal(denom, approx=True)                           # EUP
    y = (ps[0] * inv) * v                                             # (S, HID)
    for d in range(1, n_head):
        y = y + (ps[d] * inv) * pltpu.roll(v, d * e_dim, axis=1)

    # ---- output projection conv (im2col via shifts, lane-dense output) -------
    ytaps = [jnp.dot(shift_ref[t], y, preferred_element_type=f32)
             for t in range(9)]
    patches_y = jnp.concatenate(ytaps, axis=-1)                       # (S, 9*HID)
    out = jnp.dot(patches_y, wp_ref[...],
                  preferred_element_type=f32) + bp_ref[...]           # (S, HID)
    o_ref[0] = out.astype(o_ref.dtype)


# --------------------------- constant operand prep ---------------------------
def _conv_taps(w_oihw):
    """(Cout, Cin, 3, 3) OIHW -> (9, Cin, Cout), tap index t = dy*3 + dx."""
    cout, cin = w_oihw.shape[0], w_oihw.shape[1]
    return jnp.transpose(w_oihw, (2, 3, 1, 0)).reshape(9, cin, cout)


def _build_shift_matrices(h, w):
    """(9, S, S) 0/1 matrices: Shift[t] @ img == zero-padded 3x3 tap t of img."""
    s = h * w
    m = np.zeros((9, s, s), np.float32)
    for dy in range(3):
        for dx in range(3):
            t = dy * 3 + dx
            for y in range(h):
                yy = y + dy - 1
                if not 0 <= yy < h:
                    continue
                for x in range(w):
                    xx = x + dx - 1
                    if 0 <= xx < w:
                        m[t, y * w + x, yy * w + xx] = 1.0
    return jnp.asarray(m)


def _build_selection_matrices(c, s):
    """(cflat * sel_row) @ sel_col turns the CHW-flat linear output (index
    ci*s + sp) into a pixel-major (s, c) image."""
    j = np.arange(c * s)
    sel_row = (j[None, :] % s == np.arange(s)[:, None]).astype(np.float32)
    sel_col = (j[:, None] // s == np.arange(c)[None, :]).astype(np.float32)
    return jnp.asarray(sel_row), jnp.asarray(sel_col)


def prepare_operands(params, c=C_IN, h=H, w=W):
    """One-time rearrangement of weights into kernel-friendly operators."""
    s = h * w
    hid = HIDDEN

    sel_row, sel_col = _build_selection_matrices(c, s)
    shift = _build_shift_matrices(h, w)

    # fused Q|K|V conv weight: rows interleave x-patch and c-patch channels
    wq_t = _conv_taps(params["wq"])                                   # (9, C, HID)
    wk_t = _conv_taps(params["wk"])
    wv_t = _conv_taps(params["wv"])
    rows_x = jnp.concatenate(
        [wq_t, jnp.zeros((9, c, 2 * hid), jnp.float32)], axis=-1)     # (9, C, 3H)
    rows_c = jnp.concatenate(
        [jnp.zeros((9, c, hid), jnp.float32), wk_t, wv_t], axis=-1)   # (9, C, 3H)
    w_qkv = jnp.concatenate([rows_x, rows_c], axis=1).reshape(9 * 2 * c, 3 * hid)
    b_qkv = jnp.concatenate(
        [params["bq"], params["bk"], params["bv"]]).reshape(1, 3 * hid)

    # projection conv weight, output channels zero-padded 4 -> 128 (lane-dense)
    wp_t = _conv_taps(params["wp"]).reshape(9 * hid, c)               # (1152, C)
    w_proj = jnp.concatenate(
        [wp_t, jnp.zeros((9 * hid, hid - c), jnp.float32)], axis=-1)  # (1152, HID)
    b_proj = jnp.concatenate(
        [params["bp"], jnp.zeros((hid - c,), jnp.float32)]).reshape(1, hid)

    return {
        "wlin_t": params["w_lin"].T,                                  # (256, C*S)
        "blin": params["b_lin"].reshape(1, c * s),
        "sel_row": sel_row, "sel_col": sel_col, "shift": shift,
        "w_qkv": w_qkv, "b_qkv": b_qkv,
        "w_proj": w_proj, "b_proj": b_proj,
    }


# ------------------------------- full forward --------------------------------
@jax.jit
def cross_attention_forward(x_nchw, c_emb, ops):
    n, c, h, w = x_nchw.shape
    s = h * w
    hid = HIDDEN

    # channels-last / pixel-major views of the inputs (tiny XLA glue)
    x_mat = jnp.transpose(x_nchw.reshape(n, c, s), (0, 2, 1))         # (N, S, C)
    c_emb3 = c_emb.reshape(n, 1, COND_DIM)                            # (N, 1, 256)

    kern = functools.partial(_fused_kernel, n_head=NUM_HEADS, e_dim=EMBED_DIM,
                             s=s, hidden=hid)

    out_slab = pl.pallas_call(
        kern,
        out_shape=jax.ShapeDtypeStruct((n, s, hid), jnp.float32),
        grid=(n,),
        in_specs=[
            pl.BlockSpec((1, s, c), lambda i: (i, 0, 0)),             # x_mat
            pl.BlockSpec((1, 1, COND_DIM), lambda i: (i, 0, 0)),      # c_emb
            pl.BlockSpec((COND_DIM, c * s), lambda i: (0, 0)),        # wlin_t
            pl.BlockSpec((1, c * s), lambda i: (0, 0)),               # blin
            pl.BlockSpec((s, c * s), lambda i: (0, 0)),               # sel_row
            pl.BlockSpec((c * s, c), lambda i: (0, 0)),               # sel_col
            pl.BlockSpec((9, s, s), lambda i: (0, 0, 0)),             # shift
            pl.BlockSpec((9 * 2 * c, 3 * hid), lambda i: (0, 0)),     # w_qkv
            pl.BlockSpec((1, 3 * hid), lambda i: (0, 0)),             # b_qkv
            pl.BlockSpec((9 * hid, hid), lambda i: (0, 0)),           # w_proj
            pl.BlockSpec((1, hid), lambda i: (0, 0)),                 # b_proj
        ],
        out_specs=pl.BlockSpec((1, s, hid), lambda i: (i, 0, 0)),
        compiler_params=pltpu.CompilerParams(
            dimension_semantics=("parallel",)),
    )(x_mat, c_emb3, ops["wlin_t"], ops["blin"], ops["sel_row"], ops["sel_col"],
      ops["shift"], ops["w_qkv"], ops["b_qkv"], ops["w_proj"], ops["b_proj"])

    out = out_slab[..., :c]                                           # (N, S, C)
    return jnp.transpose(out, (0, 2, 1)).reshape(n, c, h, w)          # NCHW


# ------------------------------ pure-JAX reference ---------------------------
def reference(x_nchw, c_emb, params):
    n, c, h, w = x_nchw.shape
    y = c_emb @ params["w_lin"].T + params["b_lin"]
    y = y / jnp.maximum(jnp.linalg.norm(y, axis=-1, keepdims=True), 1e-12)
    c_img = y.reshape(n, c, h, w)

    def conv(x, w_oihw, b):
        o = jax.lax.conv_general_dilated(
            x, w_oihw, (1, 1), ((1, 1), (1, 1)),
            dimension_numbers=("NCHW", "OIHW", "NCHW"))
        return o + b[None, :, None, None]

    Q = conv(x_nchw, params["wq"], params["bq"])
    K = conv(c_img, params["wk"], params["bk"])
    V = conv(c_img, params["wv"], params["bv"])
    nh, E, s = NUM_HEADS, EMBED_DIM, h * w
    Qr = Q.reshape(n, nh, E, s)
    Kr = K.reshape(n, nh, E, s)
    Vr = V.reshape(n, nh, E, s)
    newQ = jnp.transpose(Qr, (0, 2, 1, 3))
    newK = jnp.transpose(Kr, (0, 2, 3, 1))
    newV = jnp.transpose(Vr, (0, 2, 1, 3))
    dot = jnp.matmul(newQ, newK) / (E / nh) ** 0.5
    A = jax.nn.softmax(dot, axis=-1)
    Y = jnp.matmul(A, newV)                                            # (N,E,nh,S)
    newY = jnp.transpose(Y, (0, 2, 1, 3)).reshape(n, nh * E, h, w)
    return conv(newY, params["wp"], params["bp"])


# ----------------------------------- main ------------------------------------
if __name__ == "__main__":
    key = jax.random.PRNGKey(0)
    ks = jax.random.split(key, 12)
    params = {
        "w_lin": 0.05 * jax.random.normal(ks[0], (C_IN * H * W, COND_DIM), jnp.float32),
        "b_lin": 0.05 * jax.random.normal(ks[1], (C_IN * H * W,), jnp.float32),
        "wq": 0.1 * jax.random.normal(ks[2], (HIDDEN, C_IN, 3, 3), jnp.float32),
        "bq": 0.05 * jax.random.normal(ks[3], (HIDDEN,), jnp.float32),
        "wk": 0.1 * jax.random.normal(ks[4], (HIDDEN, C_IN, 3, 3), jnp.float32),
        "bk": 0.05 * jax.random.normal(ks[5], (HIDDEN,), jnp.float32),
        "wv": 0.1 * jax.random.normal(ks[6], (HIDDEN, C_IN, 3, 3), jnp.float32),
        "bv": 0.05 * jax.random.normal(ks[7], (HIDDEN,), jnp.float32),
        "wp": 0.1 * jax.random.normal(ks[8], (C_IN, HIDDEN, 3, 3), jnp.float32),
        "bp": 0.05 * jax.random.normal(ks[9], (C_IN,), jnp.float32),
    }
    x = jax.random.normal(ks[10], (N, C_IN, H, W), jnp.float32)
    c_emb = jax.random.normal(ks[11], (N, COND_DIM), jnp.float32)

    ops = jax.tree_util.tree_map(jax.block_until_ready, prepare_operands(params))

    out = jax.block_until_ready(cross_attention_forward(x, c_emb, ops))
    ref = jax.block_until_ready(reference(x, c_emb, params))

    assert out.shape == (N, C_IN, H, W), out.shape
    np.testing.assert_allclose(np.asarray(out), np.asarray(ref),
                               rtol=2e-2, atol=2e-2)
    print("KERNEL_OK")
</pallas_src>

<mosaic_0001>
module attributes {stable_mosaic.version = 11 : i64} {
  func.func @_fused_kernel(%arg0: i32, %arg1: memref<1x64x4xf32, #tpu.memory_space<vmem>>, %arg2: memref<1x1x256xf32, #tpu.memory_space<vmem>>, %arg3: memref<256x256xf32, #tpu.memory_space<vmem>>, %arg4: memref<1x256xf32, #tpu.memory_space<vmem>>, %arg5: memref<64x256xf32, #tpu.memory_space<vmem>>, %arg6: memref<256x4xf32, #tpu.memory_space<vmem>>, %arg7: memref<9x64x64xf32, #tpu.memory_space<vmem>>, %arg8: memref<72x384xf32, #tpu.memory_space<vmem>>, %arg9: memref<1x384xf32, #tpu.memory_space<vmem>>, %arg10: memref<1152x128xf32, #tpu.memory_space<vmem>>, %arg11: memref<1x128xf32, #tpu.memory_space<vmem>>, %arg12: memref<1x64x128xf32, #tpu.memory_space<vmem>>) attributes {dimension_semantics = [#tpu.dimension_semantics<parallel>], iteration_bounds = array<i64: 2>, scalar_prefetch = 0 : i64, scratch_operands = 0 : i64, tpu.core_type = #tpu.core_type<tc>, window_params = [{transform_indices = @transform_0, window_bounds = array<i64: 1, 64, 4>}, {transform_indices = @transform_1, window_bounds = array<i64: 1, 1, 256>}, {pipeline_mode = #tpu.pipeline_mode<synchronous>, transform_indices = @transform_2, window_bounds = array<i64: 256, 256>}, {pipeline_mode = #tpu.pipeline_mode<synchronous>, transform_indices = @transform_3, window_bounds = array<i64: 1, 256>}, {pipeline_mode = #tpu.pipeline_mode<synchronous>, transform_indices = @transform_4, window_bounds = array<i64: 64, 256>}, {pipeline_mode = #tpu.pipeline_mode<synchronous>, transform_indices = @transform_5, window_bounds = array<i64: 256, 4>}, {pipeline_mode = #tpu.pipeline_mode<synchronous>, transform_indices = @transform_6, window_bounds = array<i64: 9, 64, 64>}, {pipeline_mode = #tpu.pipeline_mode<synchronous>, transform_indices = @transform_7, window_bounds = array<i64: 72, 384>}, {pipeline_mode = #tpu.pipeline_mode<synchronous>, transform_indices = @transform_8, window_bounds = array<i64: 1, 384>}, {pipeline_mode = #tpu.pipeline_mode<synchronous>, transform_indices = @transform_9, window_bounds = array<i64: 1152, 128>}, {pipeline_mode = #tpu.pipeline_mode<synchronous>, transform_indices = @transform_10, window_bounds = array<i64: 1, 128>}, {transform_indices = @transform_11, window_bounds = array<i64: 1, 64, 128>}]} {
    %c0 = arith.constant 0 : index
    %c0_0 = arith.constant 0 : index
    %c0_1 = arith.constant 0 : index
    %0 = vector.load %arg2[%c0, %c0_0, %c0_1] : memref<1x1x256xf32, #tpu.memory_space<vmem>>, vector<1x1x256xf32>
    %1 = vector.shape_cast %0 : vector<1x1x256xf32> to vector<1x256xf32>
    %c0_2 = arith.constant 0 : index
    %c0_3 = arith.constant 0 : index
    %2 = vector.load %arg3[%c0_2, %c0_3] : memref<256x256xf32, #tpu.memory_space<vmem>>, vector<256x256xf32>
    %cst = arith.constant dense<0.000000e+00> : vector<1x256xf32>
    %3 = tpu.matmul %1, %2, %cst {dimension_numbers = #tpu.dot_dimension_numbers<[1], [0], [0], [1], [0, 0, 1, 1], [], []>} : vector<1x256xf32>, vector<256x256xf32>, vector<1x256xf32> -> vector<1x256xf32>
    %c0_4 = arith.constant 0 : index
    %c0_5 = arith.constant 0 : index
    %4 = vector.load %arg4[%c0_4, %c0_5] : memref<1x256xf32, #tpu.memory_space<vmem>>, vector<1x256xf32>
    %5 = arith.addf %3, %4 : vector<1x256xf32>
    %6 = arith.mulf %5, %5 : vector<1x256xf32>
    %cst_6 = arith.constant dense<0.000000e+00> : vector<1xf32>
    %7 = vector.multi_reduction <add>, %6, %cst_6 [1] : vector<1x256xf32> to vector<1xf32>
    %8 = vector.shape_cast %7 : vector<1xf32> to vector<1x1xf32>
    %cst_7 = arith.constant 1.000000e-24 : f32
    %9 = vector.broadcast %cst_7 : f32 to vector<1x1xf32>
    %10 = arith.maximumf %8, %9 : vector<1x1xf32>
    %11 = math.rsqrt %10 : vector<1x1xf32>
    %12 = vector.broadcast %11 : vector<1x1xf32> to vector<1x256xf32>
    %13 = arith.mulf %5, %12 : vector<1x256xf32>
    %c0_8 = arith.constant 0 : index
    %c0_9 = arith.constant 0 : index
    %14 = vector.load %arg5[%c0_8, %c0_9] : memref<64x256xf32, #tpu.memory_space<vmem>>, vector<64x256xf32>
    %15 = vector.broadcast %13 : vector<1x256xf32> to vector<64x256xf32>
    %16 = arith.mulf %15, %14 : vector<64x256xf32>
    %c0_10 = arith.constant 0 : index
    %c0_11 = arith.constant 0 : index
    %17 = vector.load %arg6[%c0_10, %c0_11] : memref<256x4xf32, #tpu.memory_space<vmem>>, vector<256x4xf32>
    %cst_12 = arith.constant dense<0.000000e+00> : vector<64x4xf32>
    %18 = tpu.matmul %16, %17, %cst_12 {dimension_numbers = #tpu.dot_dimension_numbers<[1], [0], [0], [1], [0, 0, 1, 1], [], []>} : vector<64x256xf32>, vector<256x4xf32>, vector<64x4xf32> -> vector<64x4xf32>
    %c0_13 = arith.constant 0 : index
    %c0_14 = arith.constant 0 : index
    %c0_15 = arith.constant 0 : index
    %19 = vector.load %arg1[%c0_13, %c0_14, %c0_15] : memref<1x64x4xf32, #tpu.memory_space<vmem>>, vector<1x64x4xf32>
    %20 = vector.shape_cast %19 : vector<1x64x4xf32> to vector<64x4xf32>
    %21 = tpu.concatenate %20, %18 in 1 : vector<64x4xf32>, vector<64x4xf32> -> vector<64x8xf32>
    %c0_16 = arith.constant 0 : index
    %c0_17 = arith.constant 0 : index
    %c0_18 = arith.constant 0 : index
    %22 = vector.load %arg7[%c0_16, %c0_17, %c0_18] : memref<9x64x64xf32, #tpu.memory_space<vmem>>, vector<1x64x64xf32>
    %23 = vector.shape_cast %22 : vector<1x64x64xf32> to vector<64x64xf32>
    %cst_19 = arith.constant dense<0.000000e+00> : vector<64x8xf32>
    %24 = tpu.matmul %23, %21, %cst_19 {dimension_numbers = #tpu.dot_dimension_numbers<[1], [0], [0], [1], [0, 0, 1, 1], [], []>} : vector<64x64xf32>, vector<64x8xf32>, vector<64x8xf32> -> vector<64x8xf32>
    %c1 = arith.constant 1 : index
    %c0_20 = arith.constant 0 : index
    %c0_21 = arith.constant 0 : index
    %25 = vector.load %arg7[%c1, %c0_20, %c0_21] : memref<9x64x64xf32, #tpu.memory_space<vmem>>, vector<1x64x64xf32>
    %26 = vector.shape_cast %25 : vector<1x64x64xf32> to vector<64x64xf32>
    %cst_22 = arith.constant dense<0.000000e+00> : vector<64x8xf32>
    %27 = tpu.matmul %26, %21, %cst_22 {dimension_numbers = #tpu.dot_dimension_numbers<[1], [0], [0], [1], [0, 0, 1, 1], [], []>} : vector<64x64xf32>, vector<64x8xf32>, vector<64x8xf32> -> vector<64x8xf32>
    %c2 = arith.constant 2 : index
    %c0_23 = arith.constant 0 : index
    %c0_24 = arith.constant 0 : index
    %28 = vector.load %arg7[%c2, %c0_23, %c0_24] : memref<9x64x64xf32, #tpu.memory_space<vmem>>, vector<1x64x64xf32>
    %29 = vector.shape_cast %28 : vector<1x64x64xf32> to vector<64x64xf32>
    %cst_25 = arith.constant dense<0.000000e+00> : vector<64x8xf32>
    %30 = tpu.matmul %29, %21, %cst_25 {dimension_numbers = #tpu.dot_dimension_numbers<[1], [0], [0], [1], [0, 0, 1, 1], [], []>} : vector<64x64xf32>, vector<64x8xf32>, vector<64x8xf32> -> vector<64x8xf32>
    %c3 = arith.constant 3 : index
    %c0_26 = arith.constant 0 : index
    %c0_27 = arith.constant 0 : index
    %31 = vector.load %arg7[%c3, %c0_26, %c0_27] : memref<9x64x64xf32, #tpu.memory_space<vmem>>, vector<1x64x64xf32>
    %32 = vector.shape_cast %31 : vector<1x64x64xf32> to vector<64x64xf32>
    %cst_28 = arith.constant dense<0.000000e+00> : vector<64x8xf32>
    %33 = tpu.matmul %32, %21, %cst_28 {dimension_numbers = #tpu.dot_dimension_numbers<[1], [0], [0], [1], [0, 0, 1, 1], [], []>} : vector<64x64xf32>, vector<64x8xf32>, vector<64x8xf32> -> vector<64x8xf32>
    %c4 = arith.constant 4 : index
    %c0_29 = arith.constant 0 : index
    %c0_30 = arith.constant 0 : index
    %34 = vector.load %arg7[%c4, %c0_29, %c0_30] : memref<9x64x64xf32, #tpu.memory_space<vmem>>, vector<1x64x64xf32>
    %35 = vector.shape_cast %34 : vector<1x64x64xf32> to vector<64x64xf32>
    %cst_31 = arith.constant dense<0.000000e+00> : vector<64x8xf32>
    %36 = tpu.matmul %35, %21, %cst_31 {dimension_numbers = #tpu.dot_dimension_numbers<[1], [0], [0], [1], [0, 0, 1, 1], [], []>} : vector<64x64xf32>, vector<64x8xf32>, vector<64x8xf32> -> vector<64x8xf32>
    %c5 = arith.constant 5 : index
    %c0_32 = arith.constant 0 : index
    %c0_33 = arith.constant 0 : index
    %37 = vector.load %arg7[%c5, %c0_32, %c0_33] : memref<9x64x64xf32, #tpu.memory_space<vmem>>, vector<1x64x64xf32>
    %38 = vector.shape_cast %37 : vector<1x64x64xf32> to vector<64x64xf32>
    %cst_34 = arith.constant dense<0.000000e+00> : vector<64x8xf32>
    %39 = tpu.matmul %38, %21, %cst_34 {dimension_numbers = #tpu.dot_dimension_numbers<[1], [0], [0], [1], [0, 0, 1, 1], [], []>} : vector<64x64xf32>, vector<64x8xf32>, vector<64x8xf32> -> vector<64x8xf32>
    %c6 = arith.constant 6 : index
    %c0_35 = arith.constant 0 : index
    %c0_36 = arith.constant 0 : index
    %40 = vector.load %arg7[%c6, %c0_35, %c0_36] : memref<9x64x64xf32, #tpu.memory_space<vmem>>, vector<1x64x64xf32>
    %41 = vector.shape_cast %40 : vector<1x64x64xf32> to vector<64x64xf32>
    %cst_37 = arith.constant dense<0.000000e+00> : vector<64x8xf32>
    %42 = tpu.matmul %41, %21, %cst_37 {dimension_numbers = #tpu.dot_dimension_numbers<[1], [0], [0], [1], [0, 0, 1, 1], [], []>} : vector<64x64xf32>, vector<64x8xf32>, vector<64x8xf32> -> vector<64x8xf32>
    %c7 = arith.constant 7 : index
    %c0_38 = arith.constant 0 : index
    %c0_39 = arith.constant 0 : index
    %43 = vector.load %arg7[%c7, %c0_38, %c0_39] : memref<9x64x64xf32, #tpu.memory_space<vmem>>, vector<1x64x64xf32>
    %44 = vector.shape_cast %43 : vector<1x64x64xf32> to vector<64x64xf32>
    %cst_40 = arith.constant dense<0.000000e+00> : vector<64x8xf32>
    %45 = tpu.matmul %44, %21, %cst_40 {dimension_numbers = #tpu.dot_dimension_numbers<[1], [0], [0], [1], [0, 0, 1, 1], [], []>} : vector<64x64xf32>, vector<64x8xf32>, vector<64x8xf32> -> vector<64x8xf32>
    %c8 = arith.constant 8 : index
    %c0_41 = arith.constant 0 : index
    %c0_42 = arith.constant 0 : index
    %46 = vector.load %arg7[%c8, %c0_41, %c0_42] : memref<9x64x64xf32, #tpu.memory_space<vmem>>, vector<1x64x64xf32>
    %47 = vector.shape_cast %46 : vector<1x64x64xf32> to vector<64x64xf32>
    %cst_43 = arith.constant dense<0.000000e+00> : vector<64x8xf32>
    %48 = tpu.matmul %47, %21, %cst_43 {dimension_numbers = #tpu.dot_dimension_numbers<[1], [0], [0], [1], [0, 0, 1, 1], [], []>} : vector<64x64xf32>, vector<64x8xf32>, vector<64x8xf32> -> vector<64x8xf32>
    %49 = tpu.concatenate %24, %27, %30, %33, %36, %39, %42, %45, %48 in 1 : vector<64x8xf32>, vector<64x8xf32>, vector<64x8xf32>, vector<64x8xf32>, vector<64x8xf32>, vector<64x8xf32>, vector<64x8xf32>, vector<64x8xf32>, vector<64x8xf32> -> vector<64x72xf32>
    %c0_44 = arith.constant 0 : index
    %c0_45 = arith.constant 0 : index
    %50 = vector.load %arg8[%c0_44, %c0_45] : memref<72x384xf32, #tpu.memory_space<vmem>>, vector<72x384xf32>
    %cst_46 = arith.constant dense<0.000000e+00> : vector<64x384xf32>
    %51 = tpu.matmul %49, %50, %cst_46 {dimension_numbers = #tpu.dot_dimension_numbers<[1], [0], [0], [1], [0, 0, 1, 1], [], []>} : vector<64x72xf32>, vector<72x384xf32>, vector<64x384xf32> -> vector<64x384xf32>
    %c0_47 = arith.constant 0 : index
    %c0_48 = arith.constant 0 : index
    %52 = vector.load %arg9[%c0_47, %c0_48] : memref<1x384xf32, #tpu.memory_space<vmem>>, vector<1x384xf32>
    %53 = vector.broadcast %52 : vector<1x384xf32> to vector<64x384xf32>
    %54 = arith.addf %51, %53 : vector<64x384xf32>
    %55 = vector.extract_strided_slice %54 {offsets = [0, 0], sizes = [64, 128], strides = [1, 1]} : vector<64x384xf32> to vector<64x128xf32>
    %56 = vector.extract_strided_slice %54 {offsets = [0, 128], sizes = [64, 128], strides = [1, 1]} : vector<64x384xf32> to vector<64x128xf32>
    %57 = vector.extract_strided_slice %54 {offsets = [0, 256], sizes = [64, 128], strides = [1, 1]} : vector<64x384xf32> to vector<64x128xf32>
    %c32_i32 = arith.constant 32 : i32
    %58 = tpu.dynamic_rotate %56 by %c32_i32 dim 1 : vector<64x128xf32>, i32 -> vector<64x128xf32>
    %c64_i32 = arith.constant 64 : i32
    %59 = tpu.dynamic_rotate %56 by %c64_i32 dim 1 : vector<64x128xf32>, i32 -> vector<64x128xf32>
    %c96_i32 = arith.constant 96 : i32
    %60 = tpu.dynamic_rotate %56 by %c96_i32 dim 1 : vector<64x128xf32>, i32 -> vector<64x128xf32>
    %61 = arith.mulf %55, %56 : vector<64x128xf32>
    %62 = arith.mulf %55, %58 : vector<64x128xf32>
    %63 = arith.mulf %55, %59 : vector<64x128xf32>
    %64 = arith.mulf %55, %60 : vector<64x128xf32>
    %65 = tpu.concatenate %61, %62, %63, %64 in 1 : vector<64x128xf32>, vector<64x128xf32>, vector<64x128xf32>, vector<64x128xf32> -> vector<64x512xf32>
    %cst_49 = arith.constant 1.000000e+00 : f32
    %66 = vector.broadcast %cst_49 : f32 to vector<1x64xf32>
    %cst_50 = arith.constant dense<0.000000e+00> : vector<1x512xf32>
    %67 = tpu.matmul %66, %65, %cst_50 {dimension_numbers = #tpu.dot_dimension_numbers<[1], [0], [0], [1], [0, 0, 1, 1], [], []>} : vector<1x64xf32>, vector<64x512xf32>, vector<1x512xf32> -> vector<1x512xf32>
    %cst_51 = arith.constant 0.353553385 : f32
    %68 = vector.broadcast %cst_51 : f32 to vector<1x512xf32>
    %69 = arith.mulf %67, %68 : vector<1x512xf32>
    %70 = vector.extract_strided_slice %69 {offsets = [0, 0], sizes = [1, 128], strides = [1, 1]} : vector<1x512xf32> to vector<1x128xf32>
    %71 = vector.extract_strided_slice %69 {offsets = [0, 128], sizes = [1, 128], strides = [1, 1]} : vector<1x512xf32> to vector<1x128xf32>
    %72 = vector.extract_strided_slice %69 {offsets = [0, 256], sizes = [1, 128], strides = [1, 1]} : vector<1x512xf32> to vector<1x128xf32>
    %73 = vector.extract_strided_slice %69 {offsets = [0, 384], sizes = [1, 128], strides = [1, 1]} : vector<1x512xf32> to vector<1x128xf32>
    %74 = arith.maximumf %70, %71 : vector<1x128xf32>
    %75 = arith.maximumf %74, %72 : vector<1x128xf32>
    %76 = arith.maximumf %75, %73 : vector<1x128xf32>
    %77 = arith.subf %70, %76 : vector<1x128xf32>
    %78 = math.exp %77 : vector<1x128xf32>
    %79 = arith.subf %71, %76 : vector<1x128xf32>
    %80 = math.exp %79 : vector<1x128xf32>
    %81 = arith.subf %72, %76 : vector<1x128xf32>
    %82 = math.exp %81 : vector<1x128xf32>
    %83 = arith.subf %73, %76 : vector<1x128xf32>
    %84 = math.exp %83 : vector<1x128xf32>
    %85 = arith.addf %78, %80 : vector<1x128xf32>
    %86 = arith.addf %85, %82 : vector<1x128xf32>
    %87 = arith.addf %86, %84 : vector<1x128xf32>
    %88 = tpu.reciprocal %87 {approx = true} : vector<1x128xf32> -> vector<1x128xf32>
    %89 = arith.mulf %78, %88 : vector<1x128xf32>
    %90 = vector.broadcast %89 : vector<1x128xf32> to vector<64x128xf32>
    %91 = arith.mulf %90, %57 : vector<64x128xf32>
    %92 = arith.mulf %80, %88 : vector<1x128xf32>
    %c32_i32_52 = arith.constant 32 : i32
    %93 = tpu.dynamic_rotate %57 by %c32_i32_52 dim 1 : vector<64x128xf32>, i32 -> vector<64x128xf32>
    %94 = vector.broadcast %92 : vector<1x128xf32> to vector<64x128xf32>
    %95 = arith.mulf %94, %93 : vector<64x128xf32>
    %96 = arith.addf %91, %95 : vector<64x128xf32>
    %97 = arith.mulf %82, %88 : vector<1x128xf32>
    %c64_i32_53 = arith.constant 64 : i32
    %98 = tpu.dynamic_rotate %57 by %c64_i32_53 dim 1 : vector<64x128xf32>, i32 -> vector<64x128xf32>
    %99 = vector.broadcast %97 : vector<1x128xf32> to vector<64x128xf32>
    %100 = arith.mulf %99, %98 : vector<64x128xf32>
    %101 = arith.addf %96, %100 : vector<64x128xf32>
    %102 = arith.mulf %84, %88 : vector<1x128xf32>
    %c96_i32_54 = arith.constant 96 : i32
    %103 = tpu.dynamic_rotate %57 by %c96_i32_54 dim 1 : vector<64x128xf32>, i32 -> vector<64x128xf32>
    %104 = vector.broadcast %102 : vector<1x128xf32> to vector<64x128xf32>
    %105 = arith.mulf %104, %103 : vector<64x128xf32>
    %106 = arith.addf %101, %105 : vector<64x128xf32>
    %c0_55 = arith.constant 0 : index
    %c0_56 = arith.constant 0 : index
    %c0_57 = arith.constant 0 : index
    %107 = vector.load %arg7[%c0_55, %c0_56, %c0_57] : memref<9x64x64xf32, #tpu.memory_space<vmem>>, vector<1x64x64xf32>
    %108 = vector.shape_cast %107 : vector<1x64x64xf32> to vector<64x64xf32>
    %cst_58 = arith.constant dense<0.000000e+00> : vector<64x128xf32>
    %109 = tpu.matmul %108, %106, %cst_58 {dimension_numbers = #tpu.dot_dimension_numbers<[1], [0], [0], [1], [0, 0, 1, 1], [], []>} : vector<64x64xf32>, vector<64x128xf32>, vector<64x128xf32> -> vector<64x128xf32>
    %c1_59 = arith.constant 1 : index
    %c0_60 = arith.constant 0 : index
    %c0_61 = arith.constant 0 : index
    %110 = vector.load %arg7[%c1_59, %c0_60, %c0_61] : memref<9x64x64xf32, #tpu.memory_space<vmem>>, vector<1x64x64xf32>
    %111 = vector.shape_cast %110 : vector<1x64x64xf32> to vector<64x64xf32>
    %cst_62 = arith.constant dense<0.000000e+00> : vector<64x128xf32>
    %112 = tpu.matmul %111, %106, %cst_62 {dimension_numbers = #tpu.dot_dimension_numbers<[1], [0], [0], [1], [0, 0, 1, 1], [], []>} : vector<64x64xf32>, vector<64x128xf32>, vector<64x128xf32> -> vector<64x128xf32>
    %c2_63 = arith.constant 2 : index
    %c0_64 = arith.constant 0 : index
    %c0_65 = arith.constant 0 : index
    %113 = vector.load %arg7[%c2_63, %c0_64, %c0_65] : memref<9x64x64xf32, #tpu.memory_space<vmem>>, vector<1x64x64xf32>
    %114 = vector.shape_cast %113 : vector<1x64x64xf32> to vector<64x64xf32>
    %cst_66 = arith.constant dense<0.000000e+00> : vector<64x128xf32>
    %115 = tpu.matmul %114, %106, %cst_66 {dimension_numbers = #tpu.dot_dimension_numbers<[1], [0], [0], [1], [0, 0, 1, 1], [], []>} : vector<64x64xf32>, vector<64x128xf32>, vector<64x128xf32> -> vector<64x128xf32>
    %c3_67 = arith.constant 3 : index
    %c0_68 = arith.constant 0 : index
    %c0_69 = arith.constant 0 : index
    %116 = vector.load %arg7[%c3_67, %c0_68, %c0_69] : memref<9x64x64xf32, #tpu.memory_space<vmem>>, vector<1x64x64xf32>
    %117 = vector.shape_cast %116 : vector<1x64x64xf32> to vector<64x64xf32>
    %cst_70 = arith.constant dense<0.000000e+00> : vector<64x128xf32>
    %118 = tpu.matmul %117, %106, %cst_70 {dimension_numbers = #tpu.dot_dimension_numbers<[1], [0], [0], [1], [0, 0, 1, 1], [], []>} : vector<64x64xf32>, vector<64x128xf32>, vector<64x128xf32> -> vector<64x128xf32>
    %c4_71 = arith.constant 4 : index
    %c0_72 = arith.constant 0 : index
    %c0_73 = arith.constant 0 : index
    %119 = vector.load %arg7[%c4_71, %c0_72, %c0_73] : memref<9x64x64xf32, #tpu.memory_space<vmem>>, vector<1x64x64xf32>
    %120 = vector.shape_cast %119 : vector<1x64x64xf32> to vector<64x64xf32>
    %cst_74 = arith.constant dense<0.000000e+00> : vector<64x128xf32>
    %121 = tpu.matmul %120, %106, %cst_74 {dimension_numbers = #tpu.dot_dimension_numbers<[1], [0], [0], [1], [0, 0, 1, 1], [], []>} : vector<64x64xf32>, vector<64x128xf32>, vector<64x128xf32> -> vector<64x128xf32>
    %c5_75 = arith.constant 5 : index
    %c0_76 = arith.constant 0 : index
    %c0_77 = arith.constant 0 : index
    %122 = vector.load %arg7[%c5_75, %c0_76, %c0_77] : memref<9x64x64xf32, #tpu.memory_space<vmem>>, vector<1x64x64xf32>
    %123 = vector.shape_cast %122 : vector<1x64x64xf32> to vector<64x64xf32>
    %cst_78 = arith.constant dense<0.000000e+00> : vector<64x128xf32>
    %124 = tpu.matmul %123, %106, %cst_78 {dimension_numbers = #tpu.dot_dimension_numbers<[1], [0], [0], [1], [0, 0, 1, 1], [], []>} : vector<64x64xf32>, vector<64x128xf32>, vector<64x128xf32> -> vector<64x128xf32>
    %c6_79 = arith.constant 6 : index
    %c0_80 = arith.constant 0 : index
    %c0_81 = arith.constant 0 : index
    %125 = vector.load %arg7[%c6_79, %c0_80, %c0_81] : memref<9x64x64xf32, #tpu.memory_space<vmem>>, vector<1x64x64xf32>
    %126 = vector.shape_cast %125 : vector<1x64x64xf32> to vector<64x64xf32>
    %cst_82 = arith.constant dense<0.000000e+00> : vector<64x128xf32>
    %127 = tpu.matmul %126, %106, %cst_82 {dimension_numbers = #tpu.dot_dimension_numbers<[1], [0], [0], [1], [0, 0, 1, 1], [], []>} : vector<64x64xf32>, vector<64x128xf32>, vector<64x128xf32> -> vector<64x128xf32>
    %c7_83 = arith.constant 7 : index
    %c0_84 = arith.constant 0 : index
    %c0_85 = arith.constant 0 : index
    %128 = vector.load %arg7[%c7_83, %c0_84, %c0_85] : memref<9x64x64xf32, #tpu.memory_space<vmem>>, vector<1x64x64xf32>
    %129 = vector.shape_cast %128 : vector<1x64x64xf32> to vector<64x64xf32>
    %cst_86 = arith.constant dense<0.000000e+00> : vector<64x128xf32>
    %130 = tpu.matmul %129, %106, %cst_86 {dimension_numbers = #tpu.dot_dimension_numbers<[1], [0], [0], [1], [0, 0, 1, 1], [], []>} : vector<64x64xf32>, vector<64x128xf32>, vector<64x128xf32> -> vector<64x128xf32>
    %c8_87 = arith.constant 8 : index
    %c0_88 = arith.constant 0 : index
    %c0_89 = arith.constant 0 : index
    %131 = vector.load %arg7[%c8_87, %c0_88, %c0_89] : memref<9x64x64xf32, #tpu.memory_space<vmem>>, vector<1x64x64xf32>
    %132 = vector.shape_cast %131 : vector<1x64x64xf32> to vector<64x64xf32>
    %cst_90 = arith.constant dense<0.000000e+00> : vector<64x128xf32>
    %133 = tpu.matmul %132, %106, %cst_90 {dimension_numbers = #tpu.dot_dimension_numbers<[1], [0], [0], [1], [0, 0, 1, 1], [], []>} : vector<64x64xf32>, vector<64x128xf32>, vector<64x128xf32> -> vector<64x128xf32>
    %134 = tpu.concatenate %109, %112, %115, %118, %121, %124, %127, %130, %133 in 1 : vector<64x128xf32>, vector<64x128xf32>, vector<64x128xf32>, vector<64x128xf32>, vector<64x128xf32>, vector<64x128xf32>, vector<64x128xf32>, vector<64x128xf32>, vector<64x128xf32> -> vector<64x1152xf32>
    %c0_91 = arith.constant 0 : index
    %c0_92 = arith.constant 0 : index
    %135 = vector.load %arg10[%c0_91, %c0_92] : memref<1152x128xf32, #tpu.memory_space<vmem>>, vector<1152x128xf32>
    %cst_93 = arith.constant dense<0.000000e+00> : vector<64x128xf32>
    %136 = tpu.matmul %134, %135, %cst_93 {dimension_numbers = #tpu.dot_dimension_numbers<[1], [0], [0], [1], [0, 0, 1, 1], [], []>} : vector<64x1152xf32>, vector<1152x128xf32>, vector<64x128xf32> -> vector<64x128xf32>
    %c0_94 = arith.constant 0 : index
    %c0_95 = arith.constant 0 : index
    %137 = vector.load %arg11[%c0_94, %c0_95] : memref<1x128xf32, #tpu.memory_space<vmem>>, vector<1x128xf32>
    %138 = vector.broadcast %137 : vector<1x128xf32> to vector<64x128xf32>
    %139 = arith.addf %136, %138 : vector<64x128xf32>
    %c0_96 = arith.constant 0 : index
    %c0_97 = arith.constant 0 : index
    %c0_98 = arith.constant 0 : index
    %140 = vector.load %arg12[%c0_96, %c0_97, %c0_98] : memref<1x64x128xf32, #tpu.memory_space<vmem>>, vector<1x64x128xf32>
    %141 = vector.shape_cast %140 : vector<1x64x128xf32> to vector<64x128xf32>
    %142 = vector.shape_cast %139 : vector<64x128xf32> to vector<1x64x128xf32>
    tpu.vector_store %arg12[%c0_96, %c0_97, %c0_98], %142 {strides = array<i32>} : memref<1x64x128xf32, #tpu.memory_space<vmem>>, vector<1x64x128xf32>,
    return
  }
  func.func @transform_0(%arg0: i32) -> (i32, i32, i32) {
    %c0_i32 = arith.constant 0 : i32
    %c0_i32_0 = arith.constant 0 : i32
    %c0_i32_1 = arith.constant 0 : i32
    return %arg0, %c0_i32, %c0_i32_0 : i32, i32, i32
  }
  func.func @transform_1(%arg0: i32) -> (i32, i32, i32) {
    %c0_i32 = arith.constant 0 : i32
    %c0_i32_0 = arith.constant 0 : i32
    %c0_i32_1 = arith.constant 0 : i32
    return %arg0, %c0_i32, %c0_i32_0 : i32, i32, i32
  }
  func.func @transform_2(%arg0: i32) -> (i32, i32) {
    %c0_i32 = arith.constant 0 : i32
    %c0_i32_0 = arith.constant 0 : i32
    %c0_i32_1 = arith.constant 0 : i32
    return %c0_i32, %c0_i32_0 : i32, i32
  }
  func.func @transform_3(%arg0: i32) -> (i32, i32) {
    %c0_i32 = arith.constant 0 : i32
    %c0_i32_0 = arith.constant 0 : i32
    %c0_i32_1 = arith.constant 0 : i32
    return %c0_i32, %c0_i32_0 : i32, i32
  }
  func.func @transform_4(%arg0: i32) -> (i32, i32) {
    %c0_i32 = arith.constant 0 : i32
    %c0_i32_0 = arith.constant 0 : i32
    %c0_i32_1 = arith.constant 0 : i32
    return %c0_i32, %c0_i32_0 : i32, i32
  }
  func.func @transform_5(%arg0: i32) -> (i32, i32) {
    %c0_i32 = arith.constant 0 : i32
    %c0_i32_0 = arith.constant 0 : i32
    %c0_i32_1 = arith.constant 0 : i32
    return %c0_i32, %c0_i32_0 : i32, i32
  }
  func.func @transform_6(%arg0: i32) -> (i32, i32, i32) {
    %c0_i32 = arith.constant 0 : i32
    %c0_i32_0 = arith.constant 0 : i32
    %c0_i32_1 = arith.constant 0 : i32
    %c0_i32_2 = arith.constant 0 : i32
    return %c0_i32, %c0_i32_0, %c0_i32_1 : i32, i32, i32
  }
  func.func @transform_7(%arg0: i32) -> (i32, i32) {
    %c0_i32 = arith.constant 0 : i32
    %c0_i32_0 = arith.constant 0 : i32
    %c0_i32_1 = arith.constant 0 : i32
    return %c0_i32, %c0_i32_0 : i32, i32
  }
  func.func @transform_8(%arg0: i32) -> (i32, i32) {
    %c0_i32 = arith.constant 0 : i32
    %c0_i32_0 = arith.constant 0 : i32
    %c0_i32_1 = arith.constant 0 : i32
    return %c0_i32, %c0_i32_0 : i32, i32
  }
  func.func @transform_9(%arg0: i32) -> (i32, i32) {
    %c0_i32 = arith.constant 0 : i32
    %c0_i32_0 = arith.constant 0 : i32
    %c0_i32_1 = arith.constant 0 : i32
    return %c0_i32, %c0_i32_0 : i32, i32
  }
  func.func @transform_10(%arg0: i32) -> (i32, i32) {
    %c0_i32 = arith.constant 0 : i32
    %c0_i32_0 = arith.constant 0 : i32
    %c0_i32_1 = arith.constant 0 : i32
    return %c0_i32, %c0_i32_0 : i32, i32
  }
  func.func @transform_11(%arg0: i32) -> (i32, i32, i32) {
    %c0_i32 = arith.constant 0 : i32
    %c0_i32_0 = arith.constant 0 : i32
    %c0_i32_1 = arith.constant 0 : i32
    return %arg0, %c0_i32, %c0_i32_0 : i32, i32, i32
  }
}

</mosaic_0001>

<llo_original>
// kernel: cross_attention_forward.1
$region0: #{cross_attention_forward.1}
  #allocation0 [shape = 'u32[]', space=smem, size = 0x4, offset = 0x4, fixed_abs, tag = 'smem constant byte address 0x4 - core index']
  #allocation1 [shape = 'u32[144,128]{1,0:T(1,128)}', space=vmem, size = 0x12000, scoped, tag = 'internal scratch']
  %s0 = inlined_call_operand.vmem [shape: f32[2,64,4], index: 0, kind: input, shape index: {}]
  %s1 = inlined_call_operand.vmem [shape: f32[2,1,256], index: 1, kind: input, shape index: {}]
  %s2 = inlined_call_operand.hbm [shape: f32[256,256], index: 2, kind: input, shape index: {}]
  %s3 = inlined_call_operand.vmem [shape: f32[1,256], index: 3, kind: input, shape index: {}]
  %s4 = inlined_call_operand.vmem [shape: f32[64,256], index: 4, kind: input, shape index: {}]
  %s5 = inlined_call_operand.vmem [shape: f32[256,4], index: 5, kind: input, shape index: {}]
  %s6 = inlined_call_operand.hbm [shape: f32[9,64,64], index: 6, kind: input, shape index: {}]
  %s7 = inlined_call_operand.vmem [shape: f32[72,384], index: 7, kind: input, shape index: {}]
  %s8 = inlined_call_operand.vmem [shape: f32[1,384], index: 8, kind: input, shape index: {}]
  %s9 = inlined_call_operand.hbm [shape: f32[1152,128], index: 9, kind: input, shape index: {}]
  %s10 = inlined_call_operand.vmem [shape: f32[1,128], index: 10, kind: input, shape index: {}]
  %s11 = inlined_call_operand.vmem [shape: f32[2,64,128], index: 11, kind: output, shape index: {}]
  %s12 = sld [smem:[#allocation0]]
  $region89: #{cross_attention_forward.1} parent=0
    _
  %s14 = ssub.s32 1, %s12
  %s15 = scalar_select 0, %s14, %s12
  $region1: #{cross_attention_forward.1} parent=0
    #allocation2 [shape = 'u8[262144]{0}', space=vmem, size = 0x40000, scoped, tag = 'input window, operand 2, single buffered']
    #allocation3 [shape = 's32[2]{0}', space=sflag, size = 0x8, scoped, tag = 'scoped memory for cross_attention_forward.1']
    #allocation4 [shape = 'u8[294912]{0}', space=vmem, size = 0x48000, scoped, tag = 'input window, operand 6, single buffered']
    #allocation5 [shape = 's32[1]{0}', space=sflag, size = 0x4, scoped, tag = 'scoped memory for cross_attention_forward.1']
    #allocation6 [shape = 'u8[589824]{0}', space=vmem, size = 0x90000, scoped, tag = 'input window, operand 9, single buffered']
    %16 = vsyncpa [#allocation3], 0
    %17 = vsyncpa [#allocation5], 0
    loop: start=0, step=1, limit=4
    $region2: #{cross_attention_forward.1} parent=1 // loop_pre_header
      _
    $region3: #{cross_attention_forward.1} parent=1 // loop_header
      %s19 = sphi 0, %s23
      %p20 = scmp.ge.s32.totalorder %s19, 4
      %s29 = sphi 0, %s31
      %s32 = sphi 0, %s29
      %s33 = sphi 0, %s32
      %s49 = sphi 0, %s33
      %s55 = sphi 0, %s57
      %s58 = sphi 0, %s55
      %s59 = sphi 0, %s58
      %s75 = sphi 0, %s59
      %s79 = sphi 0, %s79
      %s81 = sphi 0, %s79
      %s82 = sphi 0, %s81
      %s96 = sphi 0, %s82
      %s100 = sphi 0, %s100
      %s102 = sphi 0, %s100
      %s103 = sphi 0, %s102
      %s117 = sphi 0, %s103
      %s121 = sphi 0, %s121
      %s123 = sphi 0, %s121
      %s124 = sphi 0, %s123
      %s138 = sphi 0, %s124
      %s142 = sphi 0, %s142
      %s144 = sphi 0, %s142
      %s145 = sphi 0, %s144
      %s159 = sphi 0, %s145
      %s163 = sphi 0, %s163
      %s165 = sphi 0, %s163
      %s166 = sphi 0, %s165
      %s180 = sphi 0, %s166
      %s184 = sphi 0, %s184
      %s186 = sphi 0, %s184
      %s187 = sphi 0, %s186
      %s201 = sphi 0, %s187
      %s205 = sphi 0, %s205
      %s207 = sphi 0, %s205
      %s208 = sphi 0, %s207
      %s222 = sphi 0, %s208
      %s226 = sphi 0, %s226
      %s228 = sphi 0, %s226
      %s229 = sphi 0, %s228
      %s243 = sphi 0, %s229
      %s247 = sphi 0, %s247
      %s249 = sphi 0, %s247
      %s250 = sphi 0, %s249
      %s264 = sphi 0, %s250
      %s270 = sphi 0, %s272
      %s273 = sphi 0, %s270
      %s274 = sphi 0, %s273
      %s290 = sphi 0, %s274
    $region4: #{cross_attention_forward.1} parent=1 // loop_header_branch
      %22 = sbr.rel (%p20) target = $region8
    $region5: #{cross_attention_forward.1} parent=1 // loop_body
      %s24 = ssub.s32 %s19, 1
      %s25 = ssub.s32 %s19, 2
      %s26 = sadd.s32 %s19, 1
      %s27 = ssub.s32 %s19, %s26
      %p28 = scmp.eq.s32.totalorder %s27, 0
      %s30 = sadd.s32 %s29, 1
      %s31 = scalar_select %p28, %s29, %s30
      %p34 = pneg %p28
      %p35 = scmp.eq.s32.totalorder %s19, 1
      %p36 = por %p34, %p35
      %p37 = scmp.ne.s32.totalorder %s29, %s32
      %p38 = scmp.eq.s32.totalorder %s19, 0
      %p39 = por %p37, %p38
      %p40 = scmp.ne.s32.totalorder %s29, %s32
      %p41 = scmp.eq.s32.totalorder %s24, 1
      %p42 = por %p40, %p41
      %p43 = scmp.ne.s32.totalorder %s32, %s33
      %p44 = scmp.eq.s32.totalorder %s24, 0
      %p45 = por %p43, %p44
      %p46 = scmp.ne.s32.totalorder %s32, %s33
      %p47 = scmp.eq.s32.totalorder %s25, 1
      %p48 = por %p46, %p47
      %p50 = scmp.ne.s32.totalorder %s33, %s49
      %p51 = scmp.eq.s32.totalorder %s25, 0
      %p52 = por %p50, %p51
      %s53 = ssub.s32 %s19, %s26
      %p54 = scmp.eq.s32.totalorder %s53, 0
      %s56 = sadd.s32 %s55, 1
      %s57 = scalar_select %p54, %s55, %s56
      %p60 = pneg %p54
      %p61 = scmp.eq.s32.totalorder %s19, 1
      %p62 = por %p60, %p61
      %p63 = scmp.ne.s32.totalorder %s55, %s58
      %p64 = scmp.eq.s32.totalorder %s19, 0
      %p65 = por %p63, %p64
      %p66 = scmp.ne.s32.totalorder %s55, %s58
      %p67 = scmp.eq.s32.totalorder %s24, 1
      %p68 = por %p66, %p67
      %p69 = scmp.ne.s32.totalorder %s58, %s59
      %p70 = scmp.eq.s32.totalorder %s24, 0
      %p71 = por %p69, %p70
      %p72 = scmp.ne.s32.totalorder %s58, %s59
      %p73 = scmp.eq.s32.totalorder %s25, 1
      %p74 = por %p72, %p73
      %p76 = scmp.ne.s32.totalorder %s59, %s75
      %p77 = scmp.eq.s32.totalorder %s25, 0
      %p78 = por %p76, %p77
      %s80 = sadd.s32 %s79, 1
      %p83 = scmp.eq.s32.totalorder %s19, 1
      %p84 = scmp.ne.s32.totalorder %s79, %s81
      %p85 = scmp.eq.s32.totalorder %s19, 0
      %p86 = por %p84, %p85
      %p87 = scmp.ne.s32.totalorder %s79, %s81
      %p88 = scmp.eq.s32.totalorder %s24, 1
      %p89 = por %p87, %p88
      %p90 = scmp.ne.s32.totalorder %s81, %s82
      %p91 = scmp.eq.s32.totalorder %s24, 0
      %p92 = por %p90, %p91
      %p93 = scmp.ne.s32.totalorder %s81, %s82
      %p94 = scmp.eq.s32.totalorder %s25, 1
      %p95 = por %p93, %p94
      %p97 = scmp.ne.s32.totalorder %s82, %s96
      %p98 = scmp.eq.s32.totalorder %s25, 0
      %p99 = por %p97, %p98
      %s101 = sadd.s32 %s100, 1
      %p104 = scmp.eq.s32.totalorder %s19, 1
      %p105 = scmp.ne.s32.totalorder %s100, %s102
      %p106 = scmp.eq.s32.totalorder %s19, 0
      %p107 = por %p105, %p106
      %p108 = scmp.ne.s32.totalorder %s100, %s102
      %p109 = scmp.eq.s32.totalorder %s24, 1
      %p110 = por %p108, %p109
      %p111 = scmp.ne.s32.totalorder %s102, %s103
      %p112 = scmp.eq.s32.totalorder %s24, 0
      %p113 = por %p111, %p112
      %p114 = scmp.ne.s32.totalorder %s102, %s103
      %p115 = scmp.eq.s32.totalorder %s25, 1
      %p116 = por %p114, %p115
      %p118 = scmp.ne.s32.totalorder %s103, %s117
      %p119 = scmp.eq.s32.totalorder %s25, 0
      %p120 = por %p118, %p119
      %s122 = sadd.s32 %s121, 1
      %p125 = scmp.eq.s32.totalorder %s19, 1
      %p126 = scmp.ne.s32.totalorder %s121, %s123
      %p127 = scmp.eq.s32.totalorder %s19, 0
      %p128 = por %p126, %p127
      %p129 = scmp.ne.s32.totalorder %s121, %s123
      %p130 = scmp.eq.s32.totalorder %s24, 1
      %p131 = por %p129, %p130
      %p132 = scmp.ne.s32.totalorder %s123, %s124
      %p133 = scmp.eq.s32.totalorder %s24, 0
      %p134 = por %p132, %p133
      %p135 = scmp.ne.s32.totalorder %s123, %s124
      %p136 = scmp.eq.s32.totalorder %s25, 1
      %p137 = por %p135, %p136
      %p139 = scmp.ne.s32.totalorder %s124, %s138
      %p140 = scmp.eq.s32.totalorder %s25, 0
      %p141 = por %p139, %p140
      %s143 = sadd.s32 %s142, 1
      %p146 = scmp.eq.s32.totalorder %s19, 1
      %p147 = scmp.ne.s32.totalorder %s142, %s144
      %p148 = scmp.eq.s32.totalorder %s19, 0
      %p149 = por %p147, %p148
      %p150 = scmp.ne.s32.totalorder %s142, %s144
      %p151 = scmp.eq.s32.totalorder %s24, 1
      %p152 = por %p150, %p151
      %p153 = scmp.ne.s32.totalorder %s144, %s145
      %p154 = scmp.eq.s32.totalorder %s24, 0
      %p155 = por %p153, %p154
      %p156 = scmp.ne.s32.totalorder %s144, %s145
      %p157 = scmp.eq.s32.totalorder %s25, 1
      %p158 = por %p156, %p157
      %p160 = scmp.ne.s32.totalorder %s145, %s159
      %p161 = scmp.eq.s32.totalorder %s25, 0
      %p162 = por %p160, %p161
      %s164 = sadd.s32 %s163, 1
      %p167 = scmp.eq.s32.totalorder %s19, 1
      %p168 = scmp.ne.s32.totalorder %s163, %s165
      %p169 = scmp.eq.s32.totalorder %s19, 0
      %p170 = por %p168, %p169
      %p171 = scmp.ne.s32.totalorder %s163, %s165
      %p172 = scmp.eq.s32.totalorder %s24, 1
      %p173 = por %p171, %p172
      %p174 = scmp.ne.s32.totalorder %s165, %s166
      %p175 = scmp.eq.s32.totalorder %s24, 0
      %p176 = por %p174, %p175
      %p177 = scmp.ne.s32.totalorder %s165, %s166
      %p178 = scmp.eq.s32.totalorder %s25, 1
      %p179 = por %p177, %p178
      %p181 = scmp.ne.s32.totalorder %s166, %s180
      %p182 = scmp.eq.s32.totalorder %s25, 0
      %p183 = por %p181, %p182
      %s185 = sadd.s32 %s184, 1
      %p188 = scmp.eq.s32.totalorder %s19, 1
      %p189 = scmp.ne.s32.totalorder %s184, %s186
      %p190 = scmp.eq.s32.totalorder %s19, 0
      %p191 = por %p189, %p190
      %p192 = scmp.ne.s32.totalorder %s184, %s186
      %p193 = scmp.eq.s32.totalorder %s24, 1
      %p194 = por %p192, %p193
      %p195 = scmp.ne.s32.totalorder %s186, %s187
      %p196 = scmp.eq.s32.totalorder %s24, 0
      %p197 = por %p195, %p196
      %p198 = scmp.ne.s32.totalorder %s186, %s187
      %p199 = scmp.eq.s32.totalorder %s25, 1
      %p200 = por %p198, %p199
      %p202 = scmp.ne.s32.totalorder %s187, %s201
      %p203 = scmp.eq.s32.totalorder %s25, 0
      %p204 = por %p202, %p203
      %s206 = sadd.s32 %s205, 1
      %p209 = scmp.eq.s32.totalorder %s19, 1
      %p210 = scmp.ne.s32.totalorder %s205, %s207
      %p211 = scmp.eq.s32.totalorder %s19, 0
      %p212 = por %p210, %p211
      %p213 = scmp.ne.s32.totalorder %s205, %s207
      %p214 = scmp.eq.s32.totalorder %s24, 1
      %p215 = por %p213, %p214
      %p216 = scmp.ne.s32.totalorder %s207, %s208
      %p217 = scmp.eq.s32.totalorder %s24, 0
      %p218 = por %p216, %p217
      %p219 = scmp.ne.s32.totalorder %s207, %s208
      %p220 = scmp.eq.s32.totalorder %s25, 1
      %p221 = por %p219, %p220
      %p223 = scmp.ne.s32.totalorder %s208, %s222
      %p224 = scmp.eq.s32.totalorder %s25, 0
      %p225 = por %p223, %p224
      %s227 = sadd.s32 %s226, 1
      %p230 = scmp.eq.s32.totalorder %s19, 1
      %p231 = scmp.ne.s32.totalorder %s226, %s228
      %p232 = scmp.eq.s32.totalorder %s19, 0
      %p233 = por %p231, %p232
      %p234 = scmp.ne.s32.totalorder %s226, %s228
      %p235 = scmp.eq.s32.totalorder %s24, 1
      %p236 = por %p234, %p235
      %p237 = scmp.ne.s32.totalorder %s228, %s229
      %p238 = scmp.eq.s32.totalorder %s24, 0
      %p239 = por %p237, %p238
      %p240 = scmp.ne.s32.totalorder %s228, %s229
      %p241 = scmp.eq.s32.totalorder %s25, 1
      %p242 = por %p240, %p241
      %p244 = scmp.ne.s32.totalorder %s229, %s243
      %p245 = scmp.eq.s32.totalorder %s25, 0
      %p246 = por %p244, %p245
      %s248 = sadd.s32 %s247, 1
      %p251 = scmp.eq.s32.totalorder %s19, 1
      %p252 = scmp.ne.s32.totalorder %s247, %s249
      %p253 = scmp.eq.s32.totalorder %s19, 0
      %p254 = por %p252, %p253
      %p255 = scmp.ne.s32.totalorder %s247, %s249
      %p256 = scmp.eq.s32.totalorder %s24, 1
      %p257 = por %p255, %p256
      %p258 = scmp.ne.s32.totalorder %s249, %s250
      %p259 = scmp.eq.s32.totalorder %s24, 0
      %p260 = por %p258, %p259
      %p261 = scmp.ne.s32.totalorder %s249, %s250
      %p262 = scmp.eq.s32.totalorder %s25, 1
      %p263 = por %p261, %p262
      %p265 = scmp.ne.s32.totalorder %s250, %s264
      %p266 = scmp.eq.s32.totalorder %s25, 0
      %p267 = por %p265, %p266
      %s268 = ssub.s32 %s19, %s26
      %p269 = scmp.eq.s32.totalorder %s268, 0
      %s271 = sadd.s32 %s270, 1
      %s272 = scalar_select %p269, %s270, %s271
      %p275 = pneg %p269
      %p276 = scmp.eq.s32.totalorder %s19, 1
      %p277 = por %p275, %p276
      %p278 = scmp.ne.s32.totalorder %s270, %s273
      %p279 = scmp.eq.s32.totalorder %s19, 0
      %p280 = por %p278, %p279
      %p281 = scmp.ne.s32.totalorder %s270, %s273
      %p282 = scmp.eq.s32.totalorder %s24, 1
      %p283 = por %p281, %p282
      %p284 = scmp.ne.s32.totalorder %s273, %s274
      %p285 = scmp.eq.s32.totalorder %s24, 0
      %p286 = por %p284, %p285
      %p287 = scmp.ne.s32.totalorder %s273, %s274
      %p288 = scmp.eq.s32.totalorder %s25, 1
      %p289 = por %p287, %p288
      %p291 = scmp.ne.s32.totalorder %s274, %s290
      %p292 = scmp.eq.s32.totalorder %s25, 0
      %p293 = por %p291, %p292
      %p294 = scmp.le.s32.totalorder 1, %s19
      %p295 = scmp.lt.s32.totalorder %s19, 3
      %p296 = pnand %p294, %p295
      %p297 = pneg %p296
      // Predicated region
      $region9: #{cross_attention_forward.1} parent=5 // pred_check
        _
      $region10: #{cross_attention_forward.1} parent=5 // pred_check_branch
        %299 = sbr.rel (%p296) target = $region12
      $region11: #{cross_attention_forward.1} parent=5 // pred_region
        %s300 = ssub.s32 %s19, 1
        // Predicated region
        $region13: #{cross_attention_forward.1} parent=11 // pred_check
          %p301 = pneg %p92
        $region14: #{cross_attention_forward.1} parent=11 // pred_check_branch
          %303 = sbr.rel (%p301) target = $region16
        $region15: #{cross_attention_forward.1} parent=11 // pred_region
          %s305 = ssub.s32 8192, 8192
          %306 = vsyncadd [#allocation3], %s305
          %s307 = sshll.u32 [#allocation2], 4
          %s308 = int_to_ptr.vmem [resolvable:$true] %s307
          %313 = dma.hbm_to_vmem [thread:$0]  %s2, 8192, %s308, [#allocation3], 256, 256, 16
        $region16: #{cross_attention_forward.1} parent=11 // pred_fallthru
          _
        // Predicated region
        $region17: #{cross_attention_forward.1} parent=11 // pred_check
          %p314 = pneg %p113
        $region18: #{cross_attention_forward.1} parent=11 // pred_check_branch
          %316 = sbr.rel (%p314) target = $region20
        $region19: #{cross_attention_forward.1} parent=11 // pred_region
          _
        $region20: #{cross_attention_forward.1} parent=11 // pred_fallthru
          _
        // Predicated region
        $region21: #{cross_attention_forward.1} parent=11 // pred_check
          %p317 = pneg %p134
        $region22: #{cross_attention_forward.1} parent=11 // pred_check_branch
          %319 = sbr.rel (%p317) target = $region24
        $region23: #{cross_attention_forward.1} parent=11 // pred_region
          _
        $region24: #{cross_attention_forward.1} parent=11 // pred_fallthru
          _
        // Predicated region
        $region25: #{cross_attention_forward.1} parent=11 // pred_check
          %p320 = pneg %p155
        $region26: #{cross_attention_forward.1} parent=11 // pred_check_branch
          %322 = sbr.rel (%p320) target = $region28
        $region27: #{cross_attention_forward.1} parent=11 // pred_region
          _
        $region28: #{cross_attention_forward.1} parent=11 // pred_fallthru
          _
        // Predicated region
        $region29: #{cross_attention_forward.1} parent=11 // pred_check
          %p323 = pneg %p176
        $region30: #{cross_attention_forward.1} parent=11 // pred_check_branch
          %325 = sbr.rel (%p323) target = $region32
        $region31: #{cross_attention_forward.1} parent=11 // pred_region
          %s327 = ssub.s32 9216, 9216
          %328 = vsyncadd [#allocation5], %s327
          %s329 = sshll.u32 [#allocation4], 4
          %s330 = int_to_ptr.vmem [resolvable:$true] %s329
          %335 = dma.hbm_to_vmem [thread:$0]  %s6, 9216, %s330, [#allocation5], 128, 128, 8
        $region32: #{cross_attention_forward.1} parent=11 // pred_fallthru
          _
        // Predicated region
        $region33: #{cross_attention_forward.1} parent=11 // pred_check
          %p336 = pneg %p197
        $region34: #{cross_attention_forward.1} parent=11 // pred_check_branch
          %338 = sbr.rel (%p336) target = $region36
        $region35: #{cross_attention_forward.1} parent=11 // pred_region
          _
        $region36: #{cross_attention_forward.1} parent=11 // pred_fallthru
          _
        // Predicated region
        $region37: #{cross_attention_forward.1} parent=11 // pred_check
          %p339 = pneg %p218
        $region38: #{cross_attention_forward.1} parent=11 // pred_check_branch
          %341 = sbr.rel (%p339) target = $region40
        $region39: #{cross_attention_forward.1} parent=11 // pred_region
          _
        $region40: #{cross_attention_forward.1} parent=11 // pred_fallthru
          _
        // Predicated region
        $region41: #{cross_attention_forward.1} parent=11 // pred_check
          %p342 = pneg %p239
        $region42: #{cross_attention_forward.1} parent=11 // pred_check_branch
          %344 = sbr.rel (%p342) target = $region44
        $region43: #{cross_attention_forward.1} parent=11 // pred_region
          %s346 = ssub.s32 18432, 18432
          %347 = vsyncadd [#allocation5], %s346
          %s348 = sshll.u32 [#allocation6], 4
          %s349 = int_to_ptr.vmem [resolvable:$true] %s348
          %354 = dma.hbm_to_vmem [thread:$0]  %s9, 18432, %s349, [#allocation5], 128, 128, 8
        $region44: #{cross_attention_forward.1} parent=11 // pred_fallthru
          _
        // Predicated region
        $region45: #{cross_attention_forward.1} parent=11 // pred_check
          %p355 = pneg %p260
        $region46: #{cross_attention_forward.1} parent=11 // pred_check_branch
          %357 = sbr.rel (%p355) target = $region48
        $region47: #{cross_attention_forward.1} parent=11 // pred_region
          _
        $region48: #{cross_attention_forward.1} parent=11 // pred_fallthru
          _
      $region12: #{cross_attention_forward.1} parent=5 // pred_fallthru
        _
      %p358 = scmp.lt.s32.totalorder %s19, 2
      // Predicated region
      $region49: #{cross_attention_forward.1} parent=5 // pred_check
        %p359 = pneg %p358
      $region50: #{cross_attention_forward.1} parent=5 // pred_check_branch
        %361 = sbr.rel (%p359) target = $region52
      $region51: #{cross_attention_forward.1} parent=5 // pred_region
        // Predicated region
        $region53: #{cross_attention_forward.1} parent=51 // pred_check
          %p362 = pneg %p39
        $region54: #{cross_attention_forward.1} parent=51 // pred_check_branch
          %364 = sbr.rel (%p362) target = $region56
        $region55: #{cross_attention_forward.1} parent=51 // pred_region
          %p365 = scmp.lt.s32.totalorder %s19, 1
          %s366 = scalar_select %p365, %s19, 1
          %s367 = smul.addr %s366, 8
          %s368 = smul.addr %s367, 8
          %s369 = scalar_lea.vmem %s0, %s368
        $region56: #{cross_attention_forward.1} parent=51 // pred_fallthru
          _
        // Predicated region
        $region57: #{cross_attention_forward.1} parent=51 // pred_check
          %p370 = pneg %p65
        $region58: #{cross_attention_forward.1} parent=51 // pred_check_branch
          %372 = sbr.rel (%p370) target = $region60
        $region59: #{cross_attention_forward.1} parent=51 // pred_region
          %p373 = scmp.lt.s32.totalorder %s19, 1
          %s374 = scalar_select %p373, %s19, 1
          %s375 = smul.addr %s374, 2
          %s376 = scalar_lea.vmem %s1, %s375
        $region60: #{cross_attention_forward.1} parent=51 // pred_fallthru
          _
      $region52: #{cross_attention_forward.1} parent=5 // pred_fallthru
        _
      %p377 = scmp.le.s32.totalorder 1, %s19
      %p378 = scmp.lt.s32.totalorder %s19, 3
      %p379 = pnand %p377, %p378
      %p380 = pneg %p379
      // Predicated region
      $region61: #{cross_attention_forward.1} parent=5 // pred_check
        _
      $region62: #{cross_attention_forward.1} parent=5 // pred_check_branch
        %382 = sbr.rel (%p379) target = $region64
      $region63: #{cross_attention_forward.1} parent=5 // pred_region
        %s383 = ssub.s32 %s19, 1
        // Predicated region
        $region65: #{cross_attention_forward.1} parent=63 // pred_check
          %p384 = pneg %p92
        $region66: #{cross_attention_forward.1} parent=63 // pred_check_branch
          %386 = sbr.rel (%p384) target = $region68
        $region67: #{cross_attention_forward.1} parent=63 // pred_region
          %387 = dma.done [#allocation3], 8192
        $region68: #{cross_attention_forward.1} parent=63 // pred_fallthru
          _
        // Predicated region
        $region69: #{cross_attention_forward.1} parent=63 // pred_check
          %p388 = pneg %p176
        $region70: #{cross_attention_forward.1} parent=63 // pred_check_branch
          %390 = sbr.rel (%p388) target = $region72
        $region71: #{cross_attention_forward.1} parent=63 // pred_region
          %391 = dma.done [#allocation5], 9216
        $region72: #{cross_attention_forward.1} parent=63 // pred_fallthru
          _
        // Predicated region
        $region73: #{cross_attention_forward.1} parent=63 // pred_check
          %p392 = pneg %p239
        $region74: #{cross_attention_forward.1} parent=63 // pred_check_branch
          %394 = sbr.rel (%p392) target = $region76
        $region75: #{cross_attention_forward.1} parent=63 // pred_region
          %395 = dma.done [#allocation5], 18432
        $region76: #{cross_attention_forward.1} parent=63 // pred_fallthru
          _
        %p396 = scmp.lt.s32.totalorder %s24, 1
        %s397 = scalar_select %p396, %s24, 1
        %s398 = smul.addr %s397, 8
        %s399 = smul.addr %s398, 8
        %s400 = scalar_lea.vmem %s0, %s399
        %p401 = pneg %p45
        %p402 = pneg %p42
        %p403 = scmp.lt.s32.totalorder %s24, 1
        %s404 = scalar_select %p403, %s24, 1
        %s405 = smul.addr %s404, 2
        %s406 = scalar_lea.vmem %s1, %s405
        %p407 = pneg %p71
        %p408 = pneg %p68
        %p409 = pneg %p92
        %p410 = pneg %p89
        %p411 = pneg %p113
        %p412 = pneg %p110
        %p413 = pneg %p134
        %p414 = pneg %p131
        %p415 = pneg %p155
        %p416 = pneg %p152
        %p417 = pneg %p176
        %p418 = pneg %p173
        %p419 = pneg %p197
        %p420 = pneg %p194
        %p421 = pneg %p218
        %p422 = pneg %p215
        %p423 = pneg %p239
        %p424 = pneg %p236
        %p425 = pneg %p260
        %p426 = pneg %p257
        %p427 = pneg %p286
        %p428 = pneg %p283
        %p429 = scmp.lt.s32.totalorder %s24, 1
        %s430 = scalar_select %p429, %s24, 1
        %s431 = smul.addr %s430, 8
        %s432 = smul.addr %s431, 8
        %s433 = scalar_lea.vmem %s11, %s432
        %p434 = scmp.lt.s32.totalorder %s24, 1
        %s435 = scalar_select %p434, %s24, 1
        %s436 = smul.addr %s435, 8
        %s437 = smul.addr %s436, 8
        %s438 = scalar_lea.vmem %s0, %s437
        %p439 = scmp.lt.s32.totalorder %s24, 1
        %s440 = scalar_select %p439, %s24, 1
        %s441 = smul.addr %s440, 2
        %s442 = scalar_lea.vmem %s1, %s441
        %p443 = scmp.lt.s32.totalorder %s24, 1
        %s444 = scalar_select %p443, %s24, 1
        %s445 = smul.addr %s444, 8
        %s446 = smul.addr %s445, 8
        %s447 = scalar_lea.vmem %s11, %s446
        %v448 = vld [vmem:[%s442] sm:$0x3]
        %v449 = vld [vmem:[#allocation2] sm:$0xff]
        %v450 = vld [vmem:[#allocation2 + $0x8] sm:$0xff]
        %v451 = vld [vmem:[#allocation2 + $0x10] sm:$0xff]
        %v452 = vld [vmem:[#allocation2 + $0x18] sm:$0xff]
        %v453 = vld [vmem:[#allocation2 + $0x20] sm:$0xff]
        %v454 = vld [vmem:[#allocation2 + $0x28] sm:$0xff]
        %v455 = vld [vmem:[#allocation2 + $0x30] sm:$0xff]
        %v456 = vld [vmem:[#allocation2 + $0x38] sm:$0xff]
        %v457 = vld [vmem:[#allocation2 + $0x40] sm:$0xff]
        %v458 = vld [vmem:[#allocation2 + $0x48] sm:$0xff]
        %v459 = vld [vmem:[#allocation2 + $0x50] sm:$0xff]
        %v460 = vld [vmem:[#allocation2 + $0x58] sm:$0xff]
        %v461 = vld [vmem:[#allocation2 + $0x60] sm:$0xff]
        %v462 = vld [vmem:[#allocation2 + $0x68] sm:$0xff]
        %v463 = vld [vmem:[#allocation2 + $0x70] sm:$0xff]
        %v464 = vld [vmem:[#allocation2 + $0x78] sm:$0xff]
        %v465 = vld [vmem:[#allocation2 + $0x80] sm:$0xff]
        %v466 = vld [vmem:[#allocation2 + $0x88] sm:$0xff]
        %v467 = vld [vmem:[#allocation2 + $0x90] sm:$0xff]
        %v468 = vld [vmem:[#allocation2 + $0x98] sm:$0xff]
        %v469 = vld [vmem:[#allocation2 + $0xa0] sm:$0xff]
        %v470 = vld [vmem:[#allocation2 + $0xa8] sm:$0xff]
        %v471 = vld [vmem:[#allocation2 + $0xb0] sm:$0xff]
        %v472 = vld [vmem:[#allocation2 + $0xb8] sm:$0xff]
        %v473 = vld [vmem:[#allocation2 + $0xc0] sm:$0xff]
        %v474 = vld [vmem:[#allocation2 + $0xc8] sm:$0xff]
        %v475 = vld [vmem:[#allocation2 + $0xd0] sm:$0xff]
        %v476 = vld [vmem:[#allocation2 + $0xd8] sm:$0xff]
        %v477 = vld [vmem:[#allocation2 + $0xe0] sm:$0xff]
        %v478 = vld [vmem:[#allocation2 + $0xe8] sm:$0xff]
        %v479 = vld [vmem:[#allocation2 + $0xf0] sm:$0xff]
        %v480 = vld [vmem:[#allocation2 + $0xf8] sm:$0xff]
        %v481 = vld [vmem:[#allocation2 + $0x100] sm:$0xff]
        %v482 = vld [vmem:[#allocation2 + $0x108] sm:$0xff]
        %v483 = vld [vmem:[#allocation2 + $0x110] sm:$0xff]
        %v484 = vld [vmem:[#allocation2 + $0x118] sm:$0xff]
        %v485 = vld [vmem:[#allocation2 + $0x120] sm:$0xff]
        %v486 = vld [vmem:[#allocation2 + $0x128] sm:$0xff]
        %v487 = vld [vmem:[#allocation2 + $0x130] sm:$0xff]
        %v488 = vld [vmem:[#allocation2 + $0x138] sm:$0xff]
        %v489 = vld [vmem:[#allocation2 + $0x140] sm:$0xff]
        %v490 = vld [vmem:[#allocation2 + $0x148] sm:$0xff]
        %v491 = vld [vmem:[#allocation2 + $0x150] sm:$0xff]
        %v492 = vld [vmem:[#allocation2 + $0x158] sm:$0xff]
        %v493 = vld [vmem:[#allocation2 + $0x160] sm:$0xff]
        %v494 = vld [vmem:[#allocation2 + $0x168] sm:$0xff]
        %v495 = vld [vmem:[#allocation2 + $0x170] sm:$0xff]
        %v496 = vld [vmem:[#allocation2 + $0x178] sm:$0xff]
        %v497 = vld [vmem:[#allocation2 + $0x180] sm:$0xff]
        %v498 = vld [vmem:[#allocation2 + $0x188] sm:$0xff]
        %v499 = vld [vmem:[#allocation2 + $0x190] sm:$0xff]
        %v500 = vld [vmem:[#allocation2 + $0x198] sm:$0xff]
        %v501 = vld [vmem:[#allocation2 + $0x1a0] sm:$0xff]
        %v502 = vld [vmem:[#allocation2 + $0x1a8] sm:$0xff]
        %v503 = vld [vmem:[#allocation2 + $0x1b0] sm:$0xff]
        %v504 = vld [vmem:[#allocation2 + $0x1b8] sm:$0xff]
        %v505 = vld [vmem:[#allocation2 + $0x1c0] sm:$0xff]
        %v506 = vld [vmem:[#allocation2 + $0x1c8] sm:$0xff]
        %v507 = vld [vmem:[#allocation2 + $0x1d0] sm:$0xff]
        %v508 = vld [vmem:[#allocation2 + $0x1d8] sm:$0xff]
        %v509 = vld [vmem:[#allocation2 + $0x1e0] sm:$0xff]
        %v510 = vld [vmem:[#allocation2 + $0x1e8] sm:$0xff]
        %v511 = vld [vmem:[#allocation2 + $0x1f0] sm:$0xff]
        %v512 = vld [vmem:[#allocation2 + $0x1f8] sm:$0xff]
        %v513 = vld [vmem:[%s3] sm:$0x3]
        %v515 = vlaneseq
        %v516 = vshrl.u32 %v515, 7
        %v517 = vsub.s32 0, %v516
        %v518 = vrot.slane %v448, %v517
        %v519 = vlaneseq
        %v520 = vshrl.u32 %v519, 7
        %v521 = vsub.s32 1, %v520
        %v522 = vrot.slane %v448, %v521
        %v526 = vlaneseq
        %v527 = vshrl.u32 %v526, 7
        %v528 = vsub.s32 0, %v527
        %v529 = vrot.slane %v513, %v528
        %v530 = vlaneseq
        %v531 = vshrl.u32 %v530, 7
        %v532 = vsub.s32 1, %v531
        %v533 = vrot.slane %v513, %v532
        %536 = vmatprep.subr.mxu0 %v480
        %537 = vmatpush1.msra.mxu0 %v479
        %538 = vmatprep.subr.mxu0 %v478
        %539 = vmatpush1.msra.mxu0 %v477
        %540 = vmatprep.subr.mxu0 %v476
        %541 = vmatpush1.msra.mxu0 %v475
        %542 = vmatprep.subr.mxu0 %v474
        %543 = vmatpush1.msra.mxu0 %v473
        %544 = vmatprep.subr.mxu0 %v472
        %545 = vmatpush1.msra.mxu0 %v471
        %546 = vmatprep.subr.mxu0 %v470
        %547 = vmatpush1.msra.mxu0 %v469
        %548 = vmatprep.subr.mxu0 %v468
        %549 = vmatpush1.msra.mxu0 %v467
        %550 = vmatprep.subr.mxu0 %v466
        %551 = vmatpush1.msra.mxu0 %v465
        %552 = vmatprep.subr.mxu0 %v464
        %553 = vmatpush1.msra.mxu0 %v463
        %554 = vmatprep.subr.mxu0 %v462
        %555 = vmatpush1.msra.mxu0 %v461
        %556 = vmatprep.subr.mxu0 %v460
        %557 = vmatpush1.msra.mxu0 %v459
        %558 = vmatprep.subr.mxu0 %v458
        %559 = vmatpush1.msra.mxu0 %v457
        %560 = vmatprep.subr.mxu0 %v456
        %561 = vmatpush1.msra.mxu0 %v455
        %562 = vmatprep.subr.mxu0 %v454
        %563 = vmatpush1.msra.mxu0 %v453
        %564 = vmatprep.subr.mxu0 %v452
        %565 = vmatpush1.msra.mxu0 %v451
        %566 = vmatprep.subr.mxu0 %v450
        %567 = vmatpush1.msra.mxu0 %v449
        %568 = vmatprep.subr.mxu0 %v512
        %569 = vmatpush2.msra.mxu0 %v511
        %570 = vmatprep.subr.mxu0 %v510
        %571 = vmatpush2.msra.mxu0 %v509
        %572 = vmatprep.subr.mxu0 %v508
        %573 = vmatpush2.msra.mxu0 %v507
        %574 = vmatprep.subr.mxu0 %v506
        %575 = vmatpush2.msra.mxu0 %v505
        %576 = vmatprep.subr.mxu0 %v504
        %577 = vmatpush2.msra.mxu0 %v503
        %578 = vmatprep.subr.mxu0 %v502
        %579 = vmatpush2.msra.mxu0 %v501
        %580 = vmatprep.subr.mxu0 %v500
        %581 = vmatpush2.msra.mxu0 %v499
        %582 = vmatprep.subr.mxu0 %v498
        %583 = vmatpush2.msra.mxu0 %v497
        %584 = vmatprep.subr.mxu0 %v496
        %585 = vmatpush2.msra.mxu0 %v495
        %586 = vmatprep.subr.mxu0 %v494
        %587 = vmatpush2.msra.mxu0 %v493
        %588 = vmatprep.subr.mxu0 %v492
        %589 = vmatpush2.msra.mxu0 %v491
        %590 = vmatprep.subr.mxu0 %v490
        %591 = vmatpush2.msra.mxu0 %v489
        %592 = vmatprep.subr.mxu0 %v488
        %593 = vmatpush2.msra.mxu0 %v487
        %594 = vmatprep.subr.mxu0 %v486
        %595 = vmatpush2.msra.mxu0 %v485
        %596 = vmatprep.subr.mxu0 %v484
        %597 = vmatpush2.msra.mxu0 %v483
        %598 = vmatprep.subr.mxu0 %v482
        %599 = vmatpush2.msra.mxu0 %v481
        %600 = vmatprep.mubr.f32.mxu0 %v522
        %601 = vmatmul.mubr.f32.gmra.mxu0 %v518
        %v602 = vpop.f32.mrf.mxu0
        %v603 = vadd.f32 %v529, %v602
        %v604 = vpop.f32.mrf.mxu0
        %v605 = vadd.f32 %v533, %v604
        %606 = vdwg.mxu0
        %v607 = vmul.f32 %v603, %v603
        %v608 = vmul.f32 %v605, %v605
        %vm609 = vcmask 1040384
        %v610 = vsel %vm609, %v607, 0.0
        %v611 = vsel %vm609, %v608, 0.0
        %v612 = vadd.f32 %v610, %v611
        %613 = vadd.xlane.f32.xlu0 %v612
        %v614 = vpop.xlane.xlu0 %613
        %v615 = vmax.f32 %v614, 1e-24
        %v616 = vrsqrt.pop %v615
        %v617 = vmul.f32 %v603, %v616
        %v618 = vmul.f32 %v605, %v616
        %v619 = vld [vmem:[%s4] sm:$0xff]
        %v620 = vld [vmem:[%s4 + $0x8] sm:$0xff]
        %v621 = vld [vmem:[%s4 + $0x10] sm:$0xff]
        %v622 = vld [vmem:[%s4 + $0x18] sm:$0xff]
        %v623 = vld [vmem:[%s4 + $0x20] sm:$0xff]
        %v624 = vld [vmem:[%s4 + $0x28] sm:$0xff]
        %v625 = vld [vmem:[%s4 + $0x30] sm:$0xff]
        %v626 = vld [vmem:[%s4 + $0x38] sm:$0xff]
        %v627 = vld [vmem:[%s4 + $0x40] sm:$0xff]
        %v628 = vld [vmem:[%s4 + $0x48] sm:$0xff]
        %v629 = vld [vmem:[%s4 + $0x50] sm:$0xff]
        %v630 = vld [vmem:[%s4 + $0x58] sm:$0xff]
        %v631 = vld [vmem:[%s4 + $0x60] sm:$0xff]
        %v632 = vld [vmem:[%s4 + $0x68] sm:$0xff]
        %v633 = vld [vmem:[%s4 + $0x70] sm:$0xff]
        %v634 = vld [vmem:[%s4 + $0x78] sm:$0xff]
        %v635 = vlaneseq
        %v636 = vshrl.u32 %v635, 7
        %v637 = vsub.s32 0, %v636
        %v638 = vrot.slane %v617, %v637
        %v639 = vlaneseq
        %v640 = vshrl.u32 %v639, 7
        %v641 = vsub.s32 0, %v640
        %v642 = vrot.slane %v618, %v641
        %v643 = vmul.f32 %v638, %v619
        %v644 = vmul.f32 %v642, %v620
        %v645 = vmul.f32 %v638, %v621
        %v646 = vmul.f32 %v642, %v622
        %v647 = vmul.f32 %v638, %v623
        %v648 = vmul.f32 %v642, %v624
        %v649 = vmul.f32 %v638, %v625
        %v650 = vmul.f32 %v642, %v626
        %v651 = vmul.f32 %v638, %v627
        %v652 = vmul.f32 %v642, %v628
        %v653 = vmul.f32 %v638, %v629
        %v654 = vmul.f32 %v642, %v630
        %v655 = vmul.f32 %v638, %v631
        %v656 = vmul.f32 %v642, %v632
        %v657 = vmul.f32 %v638, %v633
        %v658 = vmul.f32 %v642, %v634
        %v659 = vld [vmem:[%s5] sm:$0xff]
        %v660 = vld [vmem:[%s5 + $0x8] sm:$0xff]
        %v661 = vld [vmem:[%s5 + $0x10] sm:$0xff]
        %v662 = vld [vmem:[%s5 + $0x18] sm:$0xff]
        %v663 = vld [vmem:[%s5 + $0x20] sm:$0xff]
        %v664 = vld [vmem:[%s5 + $0x28] sm:$0xff]
        %v665 = vld [vmem:[%s5 + $0x30] sm:$0xff]
        %v666 = vld [vmem:[%s5 + $0x38] sm:$0xff]
        %v667 = vld [vmem:[%s5 + $0x40] sm:$0xff]
        %v668 = vld [vmem:[%s5 + $0x48] sm:$0xff]
        %v669 = vld [vmem:[%s5 + $0x50] sm:$0xff]
        %v670 = vld [vmem:[%s5 + $0x58] sm:$0xff]
        %v671 = vld [vmem:[%s5 + $0x60] sm:$0xff]
        %v672 = vld [vmem:[%s5 + $0x68] sm:$0xff]
        %v673 = vld [vmem:[%s5 + $0x70] sm:$0xff]
        %v674 = vld [vmem:[%s5 + $0x78] sm:$0xff]
        %v675 = vld [vmem:[%s5 + $0x80] sm:$0xff]
        %v676 = vld [vmem:[%s5 + $0x88] sm:$0xff]
        %v677 = vld [vmem:[%s5 + $0x90] sm:$0xff]
        %v678 = vld [vmem:[%s5 + $0x98] sm:$0xff]
        %v679 = vld [vmem:[%s5 + $0xa0] sm:$0xff]
        %v680 = vld [vmem:[%s5 + $0xa8] sm:$0xff]
        %v681 = vld [vmem:[%s5 + $0xb0] sm:$0xff]
        %v682 = vld [vmem:[%s5 + $0xb8] sm:$0xff]
        %v683 = vld [vmem:[%s5 + $0xc0] sm:$0xff]
        %v684 = vld [vmem:[%s5 + $0xc8] sm:$0xff]
        %v685 = vld [vmem:[%s5 + $0xd0] sm:$0xff]
        %v686 = vld [vmem:[%s5 + $0xd8] sm:$0xff]
        %v687 = vld [vmem:[%s5 + $0xe0] sm:$0xff]
        %v688 = vld [vmem:[%s5 + $0xe8] sm:$0xff]
        %v689 = vld [vmem:[%s5 + $0xf0] sm:$0xff]
        %v690 = vld [vmem:[%s5 + $0xf8] sm:$0xff]
        %691 = vmatprep.subr.mxu0 0.0
        %692 = vmatpush1.msra.mxu0 %v674
        %693 = vmatprep.subr.mxu0 0.0
        %694 = vmatpush1.msra.mxu0 %v673
        %695 = vmatprep.subr.mxu0 0.0
        %696 = vmatpush1.msra.mxu0 %v672
        %697 = vmatprep.subr.mxu0 0.0
        %698 = vmatpush1.msra.mxu0 %v671
        %699 = vmatprep.subr.mxu0 0.0
        %700 = vmatpush1.msra.mxu0 %v670
        %701 = vmatprep.subr.mxu0 0.0
        %702 = vmatpush1.msra.mxu0 %v669
        %703 = vmatprep.subr.mxu0 0.0
        %704 = vmatpush1.msra.mxu0 %v668
        %705 = vmatprep.subr.mxu0 0.0
        %706 = vmatpush1.msra.mxu0 %v667
        %707 = vmatprep.subr.mxu0 0.0
        %708 = vmatpush1.msra.mxu0 %v666
        %709 = vmatprep.subr.mxu0 0.0
        %710 = vmatpush1.msra.mxu0 %v665
        %711 = vmatprep.subr.mxu0 0.0
        %712 = vmatpush1.msra.mxu0 %v664
        %713 = vmatprep.subr.mxu0 0.0
        %714 = vmatpush1.msra.mxu0 %v663
        %715 = vmatprep.subr.mxu0 0.0
        %716 = vmatpush1.msra.mxu0 %v662
        %717 = vmatprep.subr.mxu0 0.0
        %718 = vmatpush1.msra.mxu0 %v661
        %719 = vmatprep.subr.mxu0 0.0
        %720 = vmatpush1.msra.mxu0 %v660
        %721 = vmatprep.subr.mxu0 0.0
        %722 = vmatpush1.msra.mxu0 %v659
        %723 = vmatprep.subr.mxu0 0.0
        %724 = vmatpush2.msra.mxu0 %v690
        %725 = vmatprep.subr.mxu0 0.0
        %726 = vmatpush2.msra.mxu0 %v689
        %727 = vmatprep.subr.mxu0 0.0
        %728 = vmatpush2.msra.mxu0 %v688
        %729 = vmatprep.subr.mxu0 0.0
        %730 = vmatpush2.msra.mxu0 %v687
        %731 = vmatprep.subr.mxu0 0.0
        %732 = vmatpush2.msra.mxu0 %v686
        %733 = vmatprep.subr.mxu0 0.0
        %734 = vmatpush2.msra.mxu0 %v685
        %735 = vmatprep.subr.mxu0 0.0
        %736 = vmatpush2.msra.mxu0 %v684
        %737 = vmatprep.subr.mxu0 0.0
        %738 = vmatpush2.msra.mxu0 %v683
        %739 = vmatprep.subr.mxu0 0.0
        %740 = vmatpush2.msra.mxu0 %v682
        %741 = vmatprep.subr.mxu0 0.0
        %742 = vmatpush2.msra.mxu0 %v681
        %743 = vmatprep.subr.mxu0 0.0
        %744 = vmatpush2.msra.mxu0 %v680
        %745 = vmatprep.subr.mxu0 0.0
        %746 = vmatpush2.msra.mxu0 %v679
        %747 = vmatprep.subr.mxu0 0.0
        %748 = vmatpush2.msra.mxu0 %v678
        %749 = vmatprep.subr.mxu0 0.0
        %750 = vmatpush2.msra.mxu0 %v677
        %751 = vmatprep.subr.mxu0 0.0
        %752 = vmatpush2.msra.mxu0 %v676
        %753 = vmatprep.subr.mxu0 0.0
        %754 = vmatpush2.msra.mxu0 %v675
        %755 = vmatprep.mubr.f32.mxu0 %v644
        %756 = vmatmul.mubr.f32.gmra.mxu0 %v643
        %v757 = vpop.f32.mrf.mxu0
        %v758 = vadd.f32 0.0, %v757
        %v759 = vpop.f32.mrf.mxu0
        %760 = vmatprep.mubr.f32.mxu0 %v646
        %761 = vmatmul.mubr.f32.gmra.mxu0 %v645
        %v762 = vpop.f32.mrf.mxu0
        %v763 = vadd.f32 0.0, %v762
        %v764 = vpop.f32.mrf.mxu0
        %765 = vmatprep.mubr.f32.mxu0 %v648
        %766 = vmatmul.mubr.f32.gmra.mxu0 %v647
        %v767 = vpop.f32.mrf.mxu0
        %v768 = vadd.f32 0.0, %v767
        %v769 = vpop.f32.mrf.mxu0
        %770 = vmatprep.mubr.f32.mxu0 %v650
        %771 = vmatmul.mubr.f32.gmra.mxu0 %v649
        %v772 = vpop.f32.mrf.mxu0
        %v773 = vadd.f32 0.0, %v772
        %v774 = vpop.f32.mrf.mxu0
        %775 = vmatprep.mubr.f32.mxu0 %v652
        %776 = vmatmul.mubr.f32.gmra.mxu0 %v651
        %v777 = vpop.f32.mrf.mxu0
        %v778 = vadd.f32 0.0, %v777
        %v779 = vpop.f32.mrf.mxu0
        %780 = vmatprep.mubr.f32.mxu0 %v654
        %781 = vmatmul.mubr.f32.gmra.mxu0 %v653
        %v782 = vpop.f32.mrf.mxu0
        %v783 = vadd.f32 0.0, %v782
        %v784 = vpop.f32.mrf.mxu0
        %785 = vmatprep.mubr.f32.mxu0 %v656
        %786 = vmatmul.mubr.f32.gmra.mxu0 %v655
        %v787 = vpop.f32.mrf.mxu0
        %v788 = vadd.f32 0.0, %v787
        %v789 = vpop.f32.mrf.mxu0
        %790 = vmatprep.mubr.f32.mxu0 %v658
        %791 = vmatmul.mubr.f32.gmra.mxu0 %v657
        %v792 = vpop.f32.mrf.mxu0
        %v793 = vadd.f32 0.0, %v792
        %v794 = vpop.f32.mrf.mxu0
        %795 = vdwg.mxu0
        %v796 = vld [vmem:[%s438] sm:$0xff]
        %v797 = vld [vmem:[%s438 + $0x8] sm:$0xff]
        %v798 = vld [vmem:[%s438 + $0x10] sm:$0xff]
        %v799 = vld [vmem:[%s438 + $0x18] sm:$0xff]
        %v800 = vld [vmem:[%s438 + $0x20] sm:$0xff]
        %v801 = vld [vmem:[%s438 + $0x28] sm:$0xff]
        %v802 = vld [vmem:[%s438 + $0x30] sm:$0xff]
        %v803 = vld [vmem:[%s438 + $0x38] sm:$0xff]
        %812 = vrot.lane.b32.xlu0 %v758, 4
        %v813 = vpop.permute.xlu0 %812
        %814 = vrot.lane.b32.xlu0 %v763, 4
        %v815 = vpop.permute.xlu0 %814
        %816 = vrot.lane.b32.xlu0 %v768, 4
        %v817 = vpop.permute.xlu0 %816
        %818 = vrot.lane.b32.xlu0 %v773, 4
        %v819 = vpop.permute.xlu0 %818
        %820 = vrot.lane.b32.xlu0 %v778, 4
        %v821 = vpop.permute.xlu0 %820
        %822 = vrot.lane.b32.xlu0 %v783, 4
        %v823 = vpop.permute.xlu0 %822
        %824 = vrot.lane.b32.xlu0 %v788, 4
        %v825 = vpop.permute.xlu0 %824
        %826 = vrot.lane.b32.xlu0 %v793, 4
        %v827 = vpop.permute.xlu0 %826
        %vm836 = vcmask 31744
        %v837 = vsel %vm836, %v796, %v813
        %v838 = vsel %vm836, %v797, %v815
        %v839 = vsel %vm836, %v798, %v817
        %v840 = vsel %vm836, %v799, %v819
        %v841 = vsel %vm836, %v800, %v821
        %v842 = vsel %vm836, %v801, %v823
        %v843 = vsel %vm836, %v802, %v825
        %v844 = vsel %vm836, %v803, %v827
        %v845 = vld [vmem:[#allocation4] sm:$0xff]
        %v846 = vld [vmem:[#allocation4 + $0x8] sm:$0xff]
        %v847 = vld [vmem:[#allocation4 + $0x10] sm:$0xff]
        %v848 = vld [vmem:[#allocation4 + $0x18] sm:$0xff]
        %v849 = vld [vmem:[#allocation4 + $0x20] sm:$0xff]
        %v850 = vld [vmem:[#allocation4 + $0x28] sm:$0xff]
        %v851 = vld [vmem:[#allocation4 + $0x30] sm:$0xff]
        %v852 = vld [vmem:[#allocation4 + $0x38] sm:$0xff]
        %vm853 = vcmask 523264
        %v855 = vsel %vm853, %v845, 0
        %v858 = vsel %vm853, %v846, 0
        %v861 = vsel %vm853, %v847, 0
        %v864 = vsel %vm853, %v848, 0
        %v867 = vsel %vm853, %v849, 0
        %v870 = vsel %vm853, %v850, 0
        %v873 = vsel %vm853, %v851, 0
        %v876 = vsel %vm853, %v852, 0
        %878 = vmatprep.subr.mxu0 0.0
        %879 = vmatpush1.msra.mxu0 0.0
        %880 = vmatprep.subr.mxu0 0.0
        %881 = vmatpush1.msra.mxu0 0.0
        %882 = vmatprep.subr.mxu0 0.0
        %883 = vmatpush1.msra.mxu0 0.0
        %884 = vmatprep.subr.mxu0 0.0
        %885 = vmatpush1.msra.mxu0 0.0
        %886 = vmatprep.subr.mxu0 0.0
        %887 = vmatpush1.msra.mxu0 0.0
        %888 = vmatprep.subr.mxu0 0.0
        %889 = vmatpush1.msra.mxu0 0.0
        %890 = vmatprep.subr.mxu0 0.0
        %891 = vmatpush1.msra.mxu0 0.0
        %892 = vmatprep.subr.mxu0 0.0
        %893 = vmatpush1.msra.mxu0 0.0
        %894 = vmatprep.subr.mxu0 0.0
        %895 = vmatpush1.msra.mxu0 %v844
        %896 = vmatprep.subr.mxu0 0.0
        %897 = vmatpush1.msra.mxu0 %v843
        %898 = vmatprep.subr.mxu0 0.0
        %899 = vmatpush1.msra.mxu0 %v842
        %900 = vmatprep.subr.mxu0 0.0
        %901 = vmatpush1.msra.mxu0 %v841
        %902 = vmatprep.subr.mxu0 0.0
        %903 = vmatpush1.msra.mxu0 %v840
        %904 = vmatprep.subr.mxu0 0.0
        %905 = vmatpush1.msra.mxu0 %v839
        %906 = vmatprep.subr.mxu0 0.0
        %907 = vmatpush1.msra.mxu0 %v838
        %908 = vmatprep.subr.mxu0 0.0
        %909 = vmatpush1.msra.mxu0 %v837
        %910 = vmatprep.subr.mxu0 0.0
        %911 = vmatpush2.msra.mxu0 0.0
        %912 = vmatprep.subr.mxu0 0.0
        %913 = vmatpush2.msra.mxu0 0.0
        %914 = vmatprep.subr.mxu0 0.0
        %915 = vmatpush2.msra.mxu0 0.0
        %916 = vmatprep.subr.mxu0 0.0
        %917 = vmatpush2.msra.mxu0 0.0
        %918 = vmatprep.subr.mxu0 0.0
        %919 = vmatpush2.msra.mxu0 0.0
        %920 = vmatprep.subr.mxu0 0.0
        %921 = vmatpush2.msra.mxu0 0.0
        %922 = vmatprep.subr.mxu0 0.0
        %923 = vmatpush2.msra.mxu0 0.0
        %924 = vmatprep.subr.mxu0 0.0
        %925 = vmatpush2.msra.mxu0 0.0
        %926 = vmatprep.subr.mxu0 0.0
        %927 = vmatpush2.msra.mxu0 0.0
        %928 = vmatprep.subr.mxu0 0.0
        %929 = vmatpush2.msra.mxu0 0.0
        %930 = vmatprep.subr.mxu0 0.0
        %931 = vmatpush2.msra.mxu0 0.0
        %932 = vmatprep.subr.mxu0 0.0
        %933 = vmatpush2.msra.mxu0 0.0
        %934 = vmatprep.subr.mxu0 0.0
        %935 = vmatpush2.msra.mxu0 0.0
        %936 = vmatprep.subr.mxu0 0.0
        %937 = vmatpush2.msra.mxu0 0.0
        %938 = vmatprep.subr.mxu0 0.0
        %939 = vmatpush2.msra.mxu0 0.0
        %940 = vmatprep.subr.mxu0 0.0
        %941 = vmatpush2.msra.mxu0 0.0
        %942 = vmatprep.mubr.f32.mxu0 0.0
        %943 = vmatmul.mubr.f32.gmra.mxu0 %v855
        %v944 = vpop.f32.mrf.mxu0
        %v945 = vadd.f32 0.0, %v944
        %v946 = vpop.f32.mrf.mxu0
        %947 = vmatprep.mubr.f32.mxu0 0.0
        %948 = vmatmul.mubr.f32.gmra.mxu0 %v858
        %v949 = vpop.f32.mrf.mxu0
        %v950 = vadd.f32 0.0, %v949
        %v951 = vpop.f32.mrf.mxu0
        %952 = vmatprep.mubr.f32.mxu0 0.0
        %953 = vmatmul.mubr.f32.gmra.mxu0 %v861
        %v954 = vpop.f32.mrf.mxu0
        %v955 = vadd.f32 0.0, %v954
        %v956 = vpop.f32.mrf.mxu0
        %957 = vmatprep.mubr.f32.mxu0 0.0
        %958 = vmatmul.mubr.f32.gmra.mxu0 %v864
        %v959 = vpop.f32.mrf.mxu0
        %v960 = vadd.f32 0.0, %v959
        %v961 = vpop.f32.mrf.mxu0
        %962 = vmatprep.mubr.f32.mxu0 0.0
        %963 = vmatmul.mubr.f32.gmra.mxu0 %v867
        %v964 = vpop.f32.mrf.mxu0
        %v965 = vadd.f32 0.0, %v964
        %v966 = vpop.f32.mrf.mxu0
        %967 = vmatprep.mubr.f32.mxu0 0.0
        %968 = vmatmul.mubr.f32.gmra.mxu0 %v870
        %v969 = vpop.f32.mrf.mxu0
        %v970 = vadd.f32 0.0, %v969
        %v971 = vpop.f32.mrf.mxu0
        %972 = vmatprep.mubr.f32.mxu0 0.0
        %973 = vmatmul.mubr.f32.gmra.mxu0 %v873
        %v974 = vpop.f32.mrf.mxu0
        %v975 = vadd.f32 0.0, %v974
        %v976 = vpop.f32.mrf.mxu0
        %977 = vmatprep.mubr.f32.mxu0 0.0
        %978 = vmatmul.mubr.f32.gmra.mxu0 %v876
        %v979 = vpop.f32.mrf.mxu0
        %v980 = vadd.f32 0.0, %v979
        %v981 = vpop.f32.mrf.mxu0
        %982 = vdwg.mxu0
        %s983 = scalar_lea.vmem [#allocation4], 64
        %v984 = vld [vmem:[%s983] sm:$0xff]
        %v985 = vld [vmem:[%s983 + $0x8] sm:$0xff]
        %v986 = vld [vmem:[%s983 + $0x10] sm:$0xff]
        %v987 = vld [vmem:[%s983 + $0x18] sm:$0xff]
        %v988 = vld [vmem:[%s983 + $0x20] sm:$0xff]
        %v989 = vld [vmem:[%s983 + $0x28] sm:$0xff]
        %v990 = vld [vmem:[%s983 + $0x30] sm:$0xff]
        %v991 = vld [vmem:[%s983 + $0x38] sm:$0xff]
        %v993 = vsel %vm853, %v984, 0
        %v996 = vsel %vm853, %v985, 0
        %v999 = vsel %vm853, %v986, 0
        %v1002 = vsel %vm853, %v987, 0
        %v1005 = vsel %vm853, %v988, 0
        %v1008 = vsel %vm853, %v989, 0
        %v1011 = vsel %vm853, %v990, 0
        %v1014 = vsel %vm853, %v991, 0
        %1016 = vmatprep.subr.mxu0 0.0
        %1017 = vmatpush1.msra.mxu0 0.0
        %1018 = vmatprep.subr.mxu0 0.0
        %1019 = vmatpush1.msra.mxu0 0.0
        %1020 = vmatprep.subr.mxu0 0.0
        %1021 = vmatpush1.msra.mxu0 0.0
        %1022 = vmatprep.subr.mxu0 0.0
        %1023 = vmatpush1.msra.mxu0 0.0
        %1024 = vmatprep.subr.mxu0 0.0
        %1025 = vmatpush1.msra.mxu0 0.0
        %1026 = vmatprep.subr.mxu0 0.0
        %1027 = vmatpush1.msra.mxu0 0.0
        %1028 = vmatprep.subr.mxu0 0.0
        %1029 = vmatpush1.msra.mxu0 0.0
        %1030 = vmatprep.subr.mxu0 0.0
        %1031 = vmatpush1.msra.mxu0 0.0
        %1032 = vmatprep.subr.mxu0 0.0
        %1033 = vmatpush1.msra.mxu0 %v844
        %1034 = vmatprep.subr.mxu0 0.0
        %1035 = vmatpush1.msra.mxu0 %v843
        %1036 = vmatprep.subr.mxu0 0.0
        %1037 = vmatpush1.msra.mxu0 %v842
        %1038 = vmatprep.subr.mxu0 0.0
        %1039 = vmatpush1.msra.mxu0 %v841
        %1040 = vmatprep.subr.mxu0 0.0
        %1041 = vmatpush1.msra.mxu0 %v840
        %1042 = vmatprep.subr.mxu0 0.0
        %1043 = vmatpush1.msra.mxu0 %v839
        %1044 = vmatprep.subr.mxu0 0.0
        %1045 = vmatpush1.msra.mxu0 %v838
        %1046 = vmatprep.subr.mxu0 0.0
        %1047 = vmatpush1.msra.mxu0 %v837
        %1048 = vmatprep.subr.mxu0 0.0
        %1049 = vmatpush2.msra.mxu0 0.0
        %1050 = vmatprep.subr.mxu0 0.0
        %1051 = vmatpush2.msra.mxu0 0.0
        %1052 = vmatprep.subr.mxu0 0.0
        %1053 = vmatpush2.msra.mxu0 0.0
        %1054 = vmatprep.subr.mxu0 0.0
        %1055 = vmatpush2.msra.mxu0 0.0
        %1056 = vmatprep.subr.mxu0 0.0
        %1057 = vmatpush2.msra.mxu0 0.0
        %1058 = vmatprep.subr.mxu0 0.0
        %1059 = vmatpush2.msra.mxu0 0.0
        %1060 = vmatprep.subr.mxu0 0.0
        %1061 = vmatpush2.msra.mxu0 0.0
        %1062 = vmatprep.subr.mxu0 0.0
        %1063 = vmatpush2.msra.mxu0 0.0
        %1064 = vmatprep.subr.mxu0 0.0
        %1065 = vmatpush2.msra.mxu0 0.0
        %1066 = vmatprep.subr.mxu0 0.0
        %1067 = vmatpush2.msra.mxu0 0.0
        %1068 = vmatprep.subr.mxu0 0.0
        %1069 = vmatpush2.msra.mxu0 0.0
        %1070 = vmatprep.subr.mxu0 0.0
        %1071 = vmatpush2.msra.mxu0 0.0
        %1072 = vmatprep.subr.mxu0 0.0
        %1073 = vmatpush2.msra.mxu0 0.0
        %1074 = vmatprep.subr.mxu0 0.0
        %1075 = vmatpush2.msra.mxu0 0.0
        %1076 = vmatprep.subr.mxu0 0.0
        %1077 = vmatpush2.msra.mxu0 0.0
        %1078 = vmatprep.subr.mxu0 0.0
        %1079 = vmatpush2.msra.mxu0 0.0
        %1080 = vmatprep.mubr.f32.mxu0 0.0
        %1081 = vmatmul.mubr.f32.gmra.mxu0 %v993
        %v1082 = vpop.f32.mrf.mxu0
        %v1083 = vadd.f32 0.0, %v1082
        %v1084 = vpop.f32.mrf.mxu0
        %1085 = vmatprep.mubr.f32.mxu0 0.0
        %1086 = vmatmul.mubr.f32.gmra.mxu0 %v996
        %v1087 = vpop.f32.mrf.mxu0
        %v1088 = vadd.f32 0.0, %v1087
        %v1089 = vpop.f32.mrf.mxu0
        %1090 = vmatprep.mubr.f32.mxu0 0.0
        %1091 = vmatmul.mubr.f32.gmra.mxu0 %v999
        %v1092 = vpop.f32.mrf.mxu0
        %v1093 = vadd.f32 0.0, %v1092
        %v1094 = vpop.f32.mrf.mxu0
        %1095 = vmatprep.mubr.f32.mxu0 0.0
        %1096 = vmatmul.mubr.f32.gmra.mxu0 %v1002
        %v1097 = vpop.f32.mrf.mxu0
        %v1098 = vadd.f32 0.0, %v1097
        %v1099 = vpop.f32.mrf.mxu0
        %1100 = vmatprep.mubr.f32.mxu0 0.0
        %1101 = vmatmul.mubr.f32.gmra.mxu0 %v1005
        %v1102 = vpop.f32.mrf.mxu0
        %v1103 = vadd.f32 0.0, %v1102
        %v1104 = vpop.f32.mrf.mxu0
        %1105 = vmatprep.mubr.f32.mxu0 0.0
        %1106 = vmatmul.mubr.f32.gmra.mxu0 %v1008
        %v1107 = vpop.f32.mrf.mxu0
        %v1108 = vadd.f32 0.0, %v1107
        %v1109 = vpop.f32.mrf.mxu0
        %1110 = vmatprep.mubr.f32.mxu0 0.0
        %1111 = vmatmul.mubr.f32.gmra.mxu0 %v1011
        %v1112 = vpop.f32.mrf.mxu0
        %v1113 = vadd.f32 0.0, %v1112
        %v1114 = vpop.f32.mrf.mxu0
        %1115 = vmatprep.mubr.f32.mxu0 0.0
        %1116 = vmatmul.mubr.f32.gmra.mxu0 %v1014
        %v1117 = vpop.f32.mrf.mxu0
        %v1118 = vadd.f32 0.0, %v1117
        %v1119 = vpop.f32.mrf.mxu0
        %1120 = vdwg.mxu0
        %s1121 = scalar_lea.vmem [#allocation4], 128
        %v1122 = vld [vmem:[%s1121] sm:$0xff]
        %v1123 = vld [vmem:[%s1121 + $0x8] sm:$0xff]
        %v1124 = vld [vmem:[%s1121 + $0x10] sm:$0xff]
        %v1125 = vld [vmem:[%s1121 + $0x18] sm:$0xff]
        %v1126 = vld [vmem:[%s1121 + $0x20] sm:$0xff]
        %v1127 = vld [vmem:[%s1121 + $0x28] sm:$0xff]
        %v1128 = vld [vmem:[%s1121 + $0x30] sm:$0xff]
        %v1129 = vld [vmem:[%s1121 + $0x38] sm:$0xff]
        %v1131 = vsel %vm853, %v1122, 0
        %v1134 = vsel %vm853, %v1123, 0
        %v1137 = vsel %vm853, %v1124, 0
        %v1140 = vsel %vm853, %v1125, 0
        %v1143 = vsel %vm853, %v1126, 0
        %v1146 = vsel %vm853, %v1127, 0
        %v1149 = vsel %vm853, %v1128, 0
        %v1152 = vsel %vm853, %v1129, 0
        %1154 = vmatprep.subr.mxu0 0.0
        %1155 = vmatpush1.msra.mxu0 0.0
        %1156 = vmatprep.subr.mxu0 0.0
        %1157 = vmatpush1.msra.mxu0 0.0
        %1158 = vmatprep.subr.mxu0 0.0
        %1159 = vmatpush1.msra.mxu0 0.0
        %1160 = vmatprep.subr.mxu0 0.0
        %1161 = vmatpush1.msra.mxu0 0.0
        %1162 = vmatprep.subr.mxu0 0.0
        %1163 = vmatpush1.msra.mxu0 0.0
        %1164 = vmatprep.subr.mxu0 0.0
        %1165 = vmatpush1.msra.mxu0 0.0
        %1166 = vmatprep.subr.mxu0 0.0
        %1167 = vmatpush1.msra.mxu0 0.0
        %1168 = vmatprep.subr.mxu0 0.0
        %1169 = vmatpush1.msra.mxu0 0.0
        %1170 = vmatprep.subr.mxu0 0.0
        %1171 = vmatpush1.msra.mxu0 %v844
        %1172 = vmatprep.subr.mxu0 0.0
        %1173 = vmatpush1.msra.mxu0 %v843
        %1174 = vmatprep.subr.mxu0 0.0
        %1175 = vmatpush1.msra.mxu0 %v842
        %1176 = vmatprep.subr.mxu0 0.0
        %1177 = vmatpush1.msra.mxu0 %v841
        %1178 = vmatprep.subr.mxu0 0.0
        %1179 = vmatpush1.msra.mxu0 %v840
        %1180 = vmatprep.subr.mxu0 0.0
        %1181 = vmatpush1.msra.mxu0 %v839
        %1182 = vmatprep.subr.mxu0 0.0
        %1183 = vmatpush1.msra.mxu0 %v838
        %1184 = vmatprep.subr.mxu0 0.0
        %1185 = vmatpush1.msra.mxu0 %v837
        %1186 = vmatprep.subr.mxu0 0.0
        %1187 = vmatpush2.msra.mxu0 0.0
        %1188 = vmatprep.subr.mxu0 0.0
        %1189 = vmatpush2.msra.mxu0 0.0
        %1190 = vmatprep.subr.mxu0 0.0
        %1191 = vmatpush2.msra.mxu0 0.0
        %1192 = vmatprep.subr.mxu0 0.0
        %1193 = vmatpush2.msra.mxu0 0.0
        %1194 = vmatprep.subr.mxu0 0.0
        %1195 = vmatpush2.msra.mxu0 0.0
        %1196 = vmatprep.subr.mxu0 0.0
        %1197 = vmatpush2.msra.mxu0 0.0
        %1198 = vmatprep.subr.mxu0 0.0
        %1199 = vmatpush2.msra.mxu0 0.0
        %1200 = vmatprep.subr.mxu0 0.0
        %1201 = vmatpush2.msra.mxu0 0.0
        %1202 = vmatprep.subr.mxu0 0.0
        %1203 = vmatpush2.msra.mxu0 0.0
        %1204 = vmatprep.subr.mxu0 0.0
        %1205 = vmatpush2.msra.mxu0 0.0
        %1206 = vmatprep.subr.mxu0 0.0
        %1207 = vmatpush2.msra.mxu0 0.0
        %1208 = vmatprep.subr.mxu0 0.0
        %1209 = vmatpush2.msra.mxu0 0.0
        %1210 = vmatprep.subr.mxu0 0.0
        %1211 = vmatpush2.msra.mxu0 0.0
        %1212 = vmatprep.subr.mxu0 0.0
        %1213 = vmatpush2.msra.mxu0 0.0
        %1214 = vmatprep.subr.mxu0 0.0
        %1215 = vmatpush2.msra.mxu0 0.0
        %1216 = vmatprep.subr.mxu0 0.0
        %1217 = vmatpush2.msra.mxu0 0.0
        %1218 = vmatprep.mubr.f32.mxu0 0.0
        %1219 = vmatmul.mubr.f32.gmra.mxu0 %v1131
        %v1220 = vpop.f32.mrf.mxu0
        %v1221 = vadd.f32 0.0, %v1220
        %v1222 = vpop.f32.mrf.mxu0
        %1223 = vmatprep.mubr.f32.mxu0 0.0
        %1224 = vmatmul.mubr.f32.gmra.mxu0 %v1134
        %v1225 = vpop.f32.mrf.mxu0
        %v1226 = vadd.f32 0.0, %v1225
        %v1227 = vpop.f32.mrf.mxu0
        %1228 = vmatprep.mubr.f32.mxu0 0.0
        %1229 = vmatmul.mubr.f32.gmra.mxu0 %v1137
        %v1230 = vpop.f32.mrf.mxu0
        %v1231 = vadd.f32 0.0, %v1230
        %v1232 = vpop.f32.mrf.mxu0
        %1233 = vmatprep.mubr.f32.mxu0 0.0
        %1234 = vmatmul.mubr.f32.gmra.mxu0 %v1140
        %v1235 = vpop.f32.mrf.mxu0
        %v1236 = vadd.f32 0.0, %v1235
        %v1237 = vpop.f32.mrf.mxu0
        %1238 = vmatprep.mubr.f32.mxu0 0.0
        %1239 = vmatmul.mubr.f32.gmra.mxu0 %v1143
        %v1240 = vpop.f32.mrf.mxu0
        %v1241 = vadd.f32 0.0, %v1240
        %v1242 = vpop.f32.mrf.mxu0
        %1243 = vmatprep.mubr.f32.mxu0 0.0
        %1244 = vmatmul.mubr.f32.gmra.mxu0 %v1146
        %v1245 = vpop.f32.mrf.mxu0
        %v1246 = vadd.f32 0.0, %v1245
        %v1247 = vpop.f32.mrf.mxu0
        %1248 = vmatprep.mubr.f32.mxu0 0.0
        %1249 = vmatmul.mubr.f32.gmra.mxu0 %v1149
        %v1250 = vpop.f32.mrf.mxu0
        %v1251 = vadd.f32 0.0, %v1250
        %v1252 = vpop.f32.mrf.mxu0
        %1253 = vmatprep.mubr.f32.mxu0 0.0
        %1254 = vmatmul.mubr.f32.gmra.mxu0 %v1152
        %v1255 = vpop.f32.mrf.mxu0
        %v1256 = vadd.f32 0.0, %v1255
        %v1257 = vpop.f32.mrf.mxu0
        %1258 = vdwg.mxu0
        %s1259 = scalar_lea.vmem [#allocation4], 192
        %v1260 = vld [vmem:[%s1259] sm:$0xff]
        %v1261 = vld [vmem:[%s1259 + $0x8] sm:$0xff]
        %v1262 = vld [vmem:[%s1259 + $0x10] sm:$0xff]
        %v1263 = vld [vmem:[%s1259 + $0x18] sm:$0xff]
        %v1264 = vld [vmem:[%s1259 + $0x20] sm:$0xff]
        %v1265 = vld [vmem:[%s1259 + $0x28] sm:$0xff]
        %v1266 = vld [vmem:[%s1259 + $0x30] sm:$0xff]
        %v1267 = vld [vmem:[%s1259 + $0x38] sm:$0xff]
        %v1269 = vsel %vm853, %v1260, 0
        %v1272 = vsel %vm853, %v1261, 0
        %v1275 = vsel %vm853, %v1262, 0
        %v1278 = vsel %vm853, %v1263, 0
        %v1281 = vsel %vm853, %v1264, 0
        %v1284 = vsel %vm853, %v1265, 0
        %v1287 = vsel %vm853, %v1266, 0
        %v1290 = vsel %vm853, %v1267, 0
        %1292 = vmatprep.subr.mxu0 0.0
        %1293 = vmatpush1.msra.mxu0 0.0
        %1294 = vmatprep.subr.mxu0 0.0
        %1295 = vmatpush1.msra.mxu0 0.0
        %1296 = vmatprep.subr.mxu0 0.0
        %1297 = vmatpush1.msra.mxu0 0.0
        %1298 = vmatprep.subr.mxu0 0.0
        %1299 = vmatpush1.msra.mxu0 0.0
        %1300 = vmatprep.subr.mxu0 0.0
        %1301 = vmatpush1.msra.mxu0 0.0
        %1302 = vmatprep.subr.mxu0 0.0
        %1303 = vmatpush1.msra.mxu0 0.0
        %1304 = vmatprep.subr.mxu0 0.0
        %1305 = vmatpush1.msra.mxu0 0.0
        %1306 = vmatprep.subr.mxu0 0.0
        %1307 = vmatpush1.msra.mxu0 0.0
        %1308 = vmatprep.subr.mxu0 0.0
        %1309 = vmatpush1.msra.mxu0 %v844
        %1310 = vmatprep.subr.mxu0 0.0
        %1311 = vmatpush1.msra.mxu0 %v843
        %1312 = vmatprep.subr.mxu0 0.0
        %1313 = vmatpush1.msra.mxu0 %v842
        %1314 = vmatprep.subr.mxu0 0.0
        %1315 = vmatpush1.msra.mxu0 %v841
        %1316 = vmatprep.subr.mxu0 0.0
        %1317 = vmatpush1.msra.mxu0 %v840
        %1318 = vmatprep.subr.mxu0 0.0
        %1319 = vmatpush1.msra.mxu0 %v839
        %1320 = vmatprep.subr.mxu0 0.0
        %1321 = vmatpush1.msra.mxu0 %v838
        %1322 = vmatprep.subr.mxu0 0.0
        %1323 = vmatpush1.msra.mxu0 %v837
        %1324 = vmatprep.subr.mxu0 0.0
        %1325 = vmatpush2.msra.mxu0 0.0
        %1326 = vmatprep.subr.mxu0 0.0
        %1327 = vmatpush2.msra.mxu0 0.0
        %1328 = vmatprep.subr.mxu0 0.0
        %1329 = vmatpush2.msra.mxu0 0.0
        %1330 = vmatprep.subr.mxu0 0.0
        %1331 = vmatpush2.msra.mxu0 0.0
        %1332 = vmatprep.subr.mxu0 0.0
        %1333 = vmatpush2.msra.mxu0 0.0
        %1334 = vmatprep.subr.mxu0 0.0
        %1335 = vmatpush2.msra.mxu0 0.0
        %1336 = vmatprep.subr.mxu0 0.0
        %1337 = vmatpush2.msra.mxu0 0.0
        %1338 = vmatprep.subr.mxu0 0.0
        %1339 = vmatpush2.msra.mxu0 0.0
        %1340 = vmatprep.subr.mxu0 0.0
        %1341 = vmatpush2.msra.mxu0 0.0
        %1342 = vmatprep.subr.mxu0 0.0
        %1343 = vmatpush2.msra.mxu0 0.0
        %1344 = vmatprep.subr.mxu0 0.0
        %1345 = vmatpush2.msra.mxu0 0.0
        %1346 = vmatprep.subr.mxu0 0.0
        %1347 = vmatpush2.msra.mxu0 0.0
        %1348 = vmatprep.subr.mxu0 0.0
        %1349 = vmatpush2.msra.mxu0 0.0
        %1350 = vmatprep.subr.mxu0 0.0
        %1351 = vmatpush2.msra.mxu0 0.0
        %1352 = vmatprep.subr.mxu0 0.0
        %1353 = vmatpush2.msra.mxu0 0.0
        %1354 = vmatprep.subr.mxu0 0.0
        %1355 = vmatpush2.msra.mxu0 0.0
        %1356 = vmatprep.mubr.f32.mxu0 0.0
        %1357 = vmatmul.mubr.f32.gmra.mxu0 %v1269
        %v1358 = vpop.f32.mrf.mxu0
        %v1359 = vadd.f32 0.0, %v1358
        %v1360 = vpop.f32.mrf.mxu0
        %1361 = vmatprep.mubr.f32.mxu0 0.0
        %1362 = vmatmul.mubr.f32.gmra.mxu0 %v1272
        %v1363 = vpop.f32.mrf.mxu0
        %v1364 = vadd.f32 0.0, %v1363
        %v1365 = vpop.f32.mrf.mxu0
        %1366 = vmatprep.mubr.f32.mxu0 0.0
        %1367 = vmatmul.mubr.f32.gmra.mxu0 %v1275
        %v1368 = vpop.f32.mrf.mxu0
        %v1369 = vadd.f32 0.0, %v1368
        %v1370 = vpop.f32.mrf.mxu0
        %1371 = vmatprep.mubr.f32.mxu0 0.0
        %1372 = vmatmul.mubr.f32.gmra.mxu0 %v1278
        %v1373 = vpop.f32.mrf.mxu0
        %v1374 = vadd.f32 0.0, %v1373
        %v1375 = vpop.f32.mrf.mxu0
        %1376 = vmatprep.mubr.f32.mxu0 0.0
        %1377 = vmatmul.mubr.f32.gmra.mxu0 %v1281
        %v1378 = vpop.f32.mrf.mxu0
        %v1379 = vadd.f32 0.0, %v1378
        %v1380 = vpop.f32.mrf.mxu0
        %1381 = vmatprep.mubr.f32.mxu0 0.0
        %1382 = vmatmul.mubr.f32.gmra.mxu0 %v1284
        %v1383 = vpop.f32.mrf.mxu0
        %v1384 = vadd.f32 0.0, %v1383
        %v1385 = vpop.f32.mrf.mxu0
        %1386 = vmatprep.mubr.f32.mxu0 0.0
        %1387 = vmatmul.mubr.f32.gmra.mxu0 %v1287
        %v1388 = vpop.f32.mrf.mxu0
        %v1389 = vadd.f32 0.0, %v1388
        %v1390 = vpop.f32.mrf.mxu0
        %1391 = vmatprep.mubr.f32.mxu0 0.0
        %1392 = vmatmul.mubr.f32.gmra.mxu0 %v1290
        %v1393 = vpop.f32.mrf.mxu0
        %v1394 = vadd.f32 0.0, %v1393
        %v1395 = vpop.f32.mrf.mxu0
        %1396 = vdwg.mxu0
        %s1397 = scalar_lea.vmem [#allocation4], 256
        %v1398 = vld [vmem:[%s1397] sm:$0xff]
        %v1399 = vld [vmem:[%s1397 + $0x8] sm:$0xff]
        %v1400 = vld [vmem:[%s1397 + $0x10] sm:$0xff]
        %v1401 = vld [vmem:[%s1397 + $0x18] sm:$0xff]
        %v1402 = vld [vmem:[%s1397 + $0x20] sm:$0xff]
        %v1403 = vld [vmem:[%s1397 + $0x28] sm:$0xff]
        %v1404 = vld [vmem:[%s1397 + $0x30] sm:$0xff]
        %v1405 = vld [vmem:[%s1397 + $0x38] sm:$0xff]
        %v1407 = vsel %vm853, %v1398, 0
        %v1410 = vsel %vm853, %v1399, 0
        %v1413 = vsel %vm853, %v1400, 0
        %v1416 = vsel %vm853, %v1401, 0
        %v1419 = vsel %vm853, %v1402, 0
        %v1422 = vsel %vm853, %v1403, 0
        %v1425 = vsel %vm853, %v1404, 0
        %v1428 = vsel %vm853, %v1405, 0
        %1430 = vmatprep.subr.mxu0 0.0
        %1431 = vmatpush1.msra.mxu0 0.0
        %1432 = vmatprep.subr.mxu0 0.0
        %1433 = vmatpush1.msra.mxu0 0.0
        %1434 = vmatprep.subr.mxu0 0.0
        %1435 = vmatpush1.msra.mxu0 0.0
        %1436 = vmatprep.subr.mxu0 0.0
        %1437 = vmatpush1.msra.mxu0 0.0
        %1438 = vmatprep.subr.mxu0 0.0
        %1439 = vmatpush1.msra.mxu0 0.0
        %1440 = vmatprep.subr.mxu0 0.0
        %1441 = vmatpush1.msra.mxu0 0.0
        %1442 = vmatprep.subr.mxu0 0.0
        %1443 = vmatpush1.msra.mxu0 0.0
        %1444 = vmatprep.subr.mxu0 0.0
        %1445 = vmatpush1.msra.mxu0 0.0
        %1446 = vmatprep.subr.mxu0 0.0
        %1447 = vmatpush1.msra.mxu0 %v844
        %1448 = vmatprep.subr.mxu0 0.0
        %1449 = vmatpush1.msra.mxu0 %v843
        %1450 = vmatprep.subr.mxu0 0.0
        %1451 = vmatpush1.msra.mxu0 %v842
        %1452 = vmatprep.subr.mxu0 0.0
        %1453 = vmatpush1.msra.mxu0 %v841
        %1454 = vmatprep.subr.mxu0 0.0
        %1455 = vmatpush1.msra.mxu0 %v840
        %1456 = vmatprep.subr.mxu0 0.0
        %1457 = vmatpush1.msra.mxu0 %v839
        %1458 = vmatprep.subr.mxu0 0.0
        %1459 = vmatpush1.msra.mxu0 %v838
        %1460 = vmatprep.subr.mxu0 0.0
        %1461 = vmatpush1.msra.mxu0 %v837
        %1462 = vmatprep.subr.mxu0 0.0
        %1463 = vmatpush2.msra.mxu0 0.0
        %1464 = vmatprep.subr.mxu0 0.0
        %1465 = vmatpush2.msra.mxu0 0.0
        %1466 = vmatprep.subr.mxu0 0.0
        %1467 = vmatpush2.msra.mxu0 0.0
        %1468 = vmatprep.subr.mxu0 0.0
        %1469 = vmatpush2.msra.mxu0 0.0
        %1470 = vmatprep.subr.mxu0 0.0
        %1471 = vmatpush2.msra.mxu0 0.0
        %1472 = vmatprep.subr.mxu0 0.0
        %1473 = vmatpush2.msra.mxu0 0.0
        %1474 = vmatprep.subr.mxu0 0.0
        %1475 = vmatpush2.msra.mxu0 0.0
        %1476 = vmatprep.subr.mxu0 0.0
        %1477 = vmatpush2.msra.mxu0 0.0
        %1478 = vmatprep.subr.mxu0 0.0
        %1479 = vmatpush2.msra.mxu0 0.0
        %1480 = vmatprep.subr.mxu0 0.0
        %1481 = vmatpush2.msra.mxu0 0.0
        %1482 = vmatprep.subr.mxu0 0.0
        %1483 = vmatpush2.msra.mxu0 0.0
        %1484 = vmatprep.subr.mxu0 0.0
        %1485 = vmatpush2.msra.mxu0 0.0
        %1486 = vmatprep.subr.mxu0 0.0
        %1487 = vmatpush2.msra.mxu0 0.0
        %1488 = vmatprep.subr.mxu0 0.0
        %1489 = vmatpush2.msra.mxu0 0.0
        %1490 = vmatprep.subr.mxu0 0.0
        %1491 = vmatpush2.msra.mxu0 0.0
        %1492 = vmatprep.subr.mxu0 0.0
        %1493 = vmatpush2.msra.mxu0 0.0
        %1494 = vmatprep.mubr.f32.mxu0 0.0
        %1495 = vmatmul.mubr.f32.gmra.mxu0 %v1407
        %v1496 = vpop.f32.mrf.mxu0
        %v1497 = vadd.f32 0.0, %v1496
        %v1498 = vpop.f32.mrf.mxu0
        %1499 = vmatprep.mubr.f32.mxu0 0.0
        %1500 = vmatmul.mubr.f32.gmra.mxu0 %v1410
        %v1501 = vpop.f32.mrf.mxu0
        %v1502 = vadd.f32 0.0, %v1501
        %v1503 = vpop.f32.mrf.mxu0
        %1504 = vmatprep.mubr.f32.mxu0 0.0
        %1505 = vmatmul.mubr.f32.gmra.mxu0 %v1413
        %v1506 = vpop.f32.mrf.mxu0
        %v1507 = vadd.f32 0.0, %v1506
        %v1508 = vpop.f32.mrf.mxu0
        %1509 = vmatprep.mubr.f32.mxu0 0.0
        %1510 = vmatmul.mubr.f32.gmra.mxu0 %v1416
        %v1511 = vpop.f32.mrf.mxu0
        %v1512 = vadd.f32 0.0, %v1511
        %v1513 = vpop.f32.mrf.mxu0
        %1514 = vmatprep.mubr.f32.mxu0 0.0
        %1515 = vmatmul.mubr.f32.gmra.mxu0 %v1419
        %v1516 = vpop.f32.mrf.mxu0
        %v1517 = vadd.f32 0.0, %v1516
        %v1518 = vpop.f32.mrf.mxu0
        %1519 = vmatprep.mubr.f32.mxu0 0.0
        %1520 = vmatmul.mubr.f32.gmra.mxu0 %v1422
        %v1521 = vpop.f32.mrf.mxu0
        %v1522 = vadd.f32 0.0, %v1521
        %v1523 = vpop.f32.mrf.mxu0
        %1524 = vmatprep.mubr.f32.mxu0 0.0
        %1525 = vmatmul.mubr.f32.gmra.mxu0 %v1425
        %v1526 = vpop.f32.mrf.mxu0
        %v1527 = vadd.f32 0.0, %v1526
        %v1528 = vpop.f32.mrf.mxu0
        %1529 = vmatprep.mubr.f32.mxu0 0.0
        %1530 = vmatmul.mubr.f32.gmra.mxu0 %v1428
        %v1531 = vpop.f32.mrf.mxu0
        %v1532 = vadd.f32 0.0, %v1531
        %v1533 = vpop.f32.mrf.mxu0
        %1534 = vdwg.mxu0
        %s1535 = scalar_lea.vmem [#allocation4], 320
        %v1536 = vld [vmem:[%s1535] sm:$0xff]
        %v1537 = vld [vmem:[%s1535 + $0x8] sm:$0xff]
        %v1538 = vld [vmem:[%s1535 + $0x10] sm:$0xff]
        %v1539 = vld [vmem:[%s1535 + $0x18] sm:$0xff]
        %v1540 = vld [vmem:[%s1535 + $0x20] sm:$0xff]
        %v1541 = vld [vmem:[%s1535 + $0x28] sm:$0xff]
        %v1542 = vld [vmem:[%s1535 + $0x30] sm:$0xff]
        %v1543 = vld [vmem:[%s1535 + $0x38] sm:$0xff]
        %v1545 = vsel %vm853, %v1536, 0
        %v1548 = vsel %vm853, %v1537, 0
        %v1551 = vsel %vm853, %v1538, 0
        %v1554 = vsel %vm853, %v1539, 0
        %v1557 = vsel %vm853, %v1540, 0
        %v1560 = vsel %vm853, %v1541, 0
        %v1563 = vsel %vm853, %v1542, 0
        %v1566 = vsel %vm853, %v1543, 0
        %1568 = vmatprep.subr.mxu0 0.0
        %1569 = vmatpush1.msra.mxu0 0.0
        %1570 = vmatprep.subr.mxu0 0.0
        %1571 = vmatpush1.msra.mxu0 0.0
        %1572 = vmatprep.subr.mxu0 0.0
        %1573 = vmatpush1.msra.mxu0 0.0
        %1574 = vmatprep.subr.mxu0 0.0
        %1575 = vmatpush1.msra.mxu0 0.0
        %1576 = vmatprep.subr.mxu0 0.0
        %1577 = vmatpush1.msra.mxu0 0.0
        %1578 = vmatprep.subr.mxu0 0.0
        %1579 = vmatpush1.msra.mxu0 0.0
        %1580 = vmatprep.subr.mxu0 0.0
        %1581 = vmatpush1.msra.mxu0 0.0
        %1582 = vmatprep.subr.mxu0 0.0
        %1583 = vmatpush1.msra.mxu0 0.0
        %1584 = vmatprep.subr.mxu0 0.0
        %1585 = vmatpush1.msra.mxu0 %v844
        %1586 = vmatprep.subr.mxu0 0.0
        %1587 = vmatpush1.msra.mxu0 %v843
        %1588 = vmatprep.subr.mxu0 0.0
        %1589 = vmatpush1.msra.mxu0 %v842
        %1590 = vmatprep.subr.mxu0 0.0
        %1591 = vmatpush1.msra.mxu0 %v841
        %1592 = vmatprep.subr.mxu0 0.0
        %1593 = vmatpush1.msra.mxu0 %v840
        %1594 = vmatprep.subr.mxu0 0.0
        %1595 = vmatpush1.msra.mxu0 %v839
        %1596 = vmatprep.subr.mxu0 0.0
        %1597 = vmatpush1.msra.mxu0 %v838
        %1598 = vmatprep.subr.mxu0 0.0
        %1599 = vmatpush1.msra.mxu0 %v837
        %1600 = vmatprep.subr.mxu0 0.0
        %1601 = vmatpush2.msra.mxu0 0.0
        %1602 = vmatprep.subr.mxu0 0.0
        %1603 = vmatpush2.msra.mxu0 0.0
        %1604 = vmatprep.subr.mxu0 0.0
        %1605 = vmatpush2.msra.mxu0 0.0
        %1606 = vmatprep.subr.mxu0 0.0
        %1607 = vmatpush2.msra.mxu0 0.0
        %1608 = vmatprep.subr.mxu0 0.0
        %1609 = vmatpush2.msra.mxu0 0.0
        %1610 = vmatprep.subr.mxu0 0.0
        %1611 = vmatpush2.msra.mxu0 0.0
        %1612 = vmatprep.subr.mxu0 0.0
        %1613 = vmatpush2.msra.mxu0 0.0
        %1614 = vmatprep.subr.mxu0 0.0
        %1615 = vmatpush2.msra.mxu0 0.0
        %1616 = vmatprep.subr.mxu0 0.0
        %1617 = vmatpush2.msra.mxu0 0.0
        %1618 = vmatprep.subr.mxu0 0.0
        %1619 = vmatpush2.msra.mxu0 0.0
        %1620 = vmatprep.subr.mxu0 0.0
        %1621 = vmatpush2.msra.mxu0 0.0
        %1622 = vmatprep.subr.mxu0 0.0
        %1623 = vmatpush2.msra.mxu0 0.0
        %1624 = vmatprep.subr.mxu0 0.0
        %1625 = vmatpush2.msra.mxu0 0.0
        %1626 = vmatprep.subr.mxu0 0.0
        %1627 = vmatpush2.msra.mxu0 0.0
        %1628 = vmatprep.subr.mxu0 0.0
        %1629 = vmatpush2.msra.mxu0 0.0
        %1630 = vmatprep.subr.mxu0 0.0
        %1631 = vmatpush2.msra.mxu0 0.0
        %1632 = vmatprep.mubr.f32.mxu0 0.0
        %1633 = vmatmul.mubr.f32.gmra.mxu0 %v1545
        %v1634 = vpop.f32.mrf.mxu0
        %v1635 = vadd.f32 0.0, %v1634
        %v1636 = vpop.f32.mrf.mxu0
        %1637 = vmatprep.mubr.f32.mxu0 0.0
        %1638 = vmatmul.mubr.f32.gmra.mxu0 %v1548
        %v1639 = vpop.f32.mrf.mxu0
        %v1640 = vadd.f32 0.0, %v1639
        %v1641 = vpop.f32.mrf.mxu0
        %1642 = vmatprep.mubr.f32.mxu0 0.0
        %1643 = vmatmul.mubr.f32.gmra.mxu0 %v1551
        %v1644 = vpop.f32.mrf.mxu0
        %v1645 = vadd.f32 0.0, %v1644
        %v1646 = vpop.f32.mrf.mxu0
        %1647 = vmatprep.mubr.f32.mxu0 0.0
        %1648 = vmatmul.mubr.f32.gmra.mxu0 %v1554
        %v1649 = vpop.f32.mrf.mxu0
        %v1650 = vadd.f32 0.0, %v1649
        %v1651 = vpop.f32.mrf.mxu0
        %1652 = vmatprep.mubr.f32.mxu0 0.0
        %1653 = vmatmul.mubr.f32.gmra.mxu0 %v1557
        %v1654 = vpop.f32.mrf.mxu0
        %v1655 = vadd.f32 0.0, %v1654
        %v1656 = vpop.f32.mrf.mxu0
        %1657 = vmatprep.mubr.f32.mxu0 0.0
        %1658 = vmatmul.mubr.f32.gmra.mxu0 %v1560
        %v1659 = vpop.f32.mrf.mxu0
        %v1660 = vadd.f32 0.0, %v1659
        %v1661 = vpop.f32.mrf.mxu0
        %1662 = vmatprep.mubr.f32.mxu0 0.0
        %1663 = vmatmul.mubr.f32.gmra.mxu0 %v1563
        %v1664 = vpop.f32.mrf.mxu0
        %v1665 = vadd.f32 0.0, %v1664
        %v1666 = vpop.f32.mrf.mxu0
        %1667 = vmatprep.mubr.f32.mxu0 0.0
        %1668 = vmatmul.mubr.f32.gmra.mxu0 %v1566
        %v1669 = vpop.f32.mrf.mxu0
        %v1670 = vadd.f32 0.0, %v1669
        %v1671 = vpop.f32.mrf.mxu0
        %1672 = vdwg.mxu0
        %s1673 = scalar_lea.vmem [#allocation4], 384
        %v1674 = vld [vmem:[%s1673] sm:$0xff]
        %v1675 = vld [vmem:[%s1673 + $0x8] sm:$0xff]
        %v1676 = vld [vmem:[%s1673 + $0x10] sm:$0xff]
        %v1677 = vld [vmem:[%s1673 + $0x18] sm:$0xff]
        %v1678 = vld [vmem:[%s1673 + $0x20] sm:$0xff]
        %v1679 = vld [vmem:[%s1673 + $0x28] sm:$0xff]
        %v1680 = vld [vmem:[%s1673 + $0x30] sm:$0xff]
        %v1681 = vld [vmem:[%s1673 + $0x38] sm:$0xff]
        %v1683 = vsel %vm853, %v1674, 0
        %v1686 = vsel %vm853, %v1675, 0
        %v1689 = vsel %vm853, %v1676, 0
        %v1692 = vsel %vm853, %v1677, 0
        %v1695 = vsel %vm853, %v1678, 0
        %v1698 = vsel %vm853, %v1679, 0
        %v1701 = vsel %vm853, %v1680, 0
        %v1704 = vsel %vm853, %v1681, 0
        %1706 = vmatprep.subr.mxu0 0.0
        %1707 = vmatpush1.msra.mxu0 0.0
        %1708 = vmatprep.subr.mxu0 0.0
        %1709 = vmatpush1.msra.mxu0 0.0
        %1710 = vmatprep.subr.mxu0 0.0
        %1711 = vmatpush1.msra.mxu0 0.0
        %1712 = vmatprep.subr.mxu0 0.0
        %1713 = vmatpush1.msra.mxu0 0.0
        %1714 = vmatprep.subr.mxu0 0.0
        %1715 = vmatpush1.msra.mxu0 0.0
        %1716 = vmatprep.subr.mxu0 0.0
        %1717 = vmatpush1.msra.mxu0 0.0
        %1718 = vmatprep.subr.mxu0 0.0
        %1719 = vmatpush1.msra.mxu0 0.0
        %1720 = vmatprep.subr.mxu0 0.0
        %1721 = vmatpush1.msra.mxu0 0.0
        %1722 = vmatprep.subr.mxu0 0.0
        %1723 = vmatpush1.msra.mxu0 %v844
        %1724 = vmatprep.subr.mxu0 0.0
        %1725 = vmatpush1.msra.mxu0 %v843
        %1726 = vmatprep.subr.mxu0 0.0
        %1727 = vmatpush1.msra.mxu0 %v842
        %1728 = vmatprep.subr.mxu0 0.0
        %1729 = vmatpush1.msra.mxu0 %v841
        %1730 = vmatprep.subr.mxu0 0.0
        %1731 = vmatpush1.msra.mxu0 %v840
        %1732 = vmatprep.subr.mxu0 0.0
        %1733 = vmatpush1.msra.mxu0 %v839
        %1734 = vmatprep.subr.mxu0 0.0
        %1735 = vmatpush1.msra.mxu0 %v838
        %1736 = vmatprep.subr.mxu0 0.0
        %1737 = vmatpush1.msra.mxu0 %v837
        %1738 = vmatprep.subr.mxu0 0.0
        %1739 = vmatpush2.msra.mxu0 0.0
        %1740 = vmatprep.subr.mxu0 0.0
        %1741 = vmatpush2.msra.mxu0 0.0
        %1742 = vmatprep.subr.mxu0 0.0
        %1743 = vmatpush2.msra.mxu0 0.0
        %1744 = vmatprep.subr.mxu0 0.0
        %1745 = vmatpush2.msra.mxu0 0.0
        %1746 = vmatprep.subr.mxu0 0.0
        %1747 = vmatpush2.msra.mxu0 0.0
        %1748 = vmatprep.subr.mxu0 0.0
        %1749 = vmatpush2.msra.mxu0 0.0
        %1750 = vmatprep.subr.mxu0 0.0
        %1751 = vmatpush2.msra.mxu0 0.0
        %1752 = vmatprep.subr.mxu0 0.0
        %1753 = vmatpush2.msra.mxu0 0.0
        %1754 = vmatprep.subr.mxu0 0.0
        %1755 = vmatpush2.msra.mxu0 0.0
        %1756 = vmatprep.subr.mxu0 0.0
        %1757 = vmatpush2.msra.mxu0 0.0
        %1758 = vmatprep.subr.mxu0 0.0
        %1759 = vmatpush2.msra.mxu0 0.0
        %1760 = vmatprep.subr.mxu0 0.0
        %1761 = vmatpush2.msra.mxu0 0.0
        %1762 = vmatprep.subr.mxu0 0.0
        %1763 = vmatpush2.msra.mxu0 0.0
        %1764 = vmatprep.subr.mxu0 0.0
        %1765 = vmatpush2.msra.mxu0 0.0
        %1766 = vmatprep.subr.mxu0 0.0
        %1767 = vmatpush2.msra.mxu0 0.0
        %1768 = vmatprep.subr.mxu0 0.0
        %1769 = vmatpush2.msra.mxu0 0.0
        %1770 = vmatprep.mubr.f32.mxu0 0.0
        %1771 = vmatmul.mubr.f32.gmra.mxu0 %v1683
        %v1772 = vpop.f32.mrf.mxu0
        %v1773 = vadd.f32 0.0, %v1772
        %v1774 = vpop.f32.mrf.mxu0
        %1775 = vmatprep.mubr.f32.mxu0 0.0
        %1776 = vmatmul.mubr.f32.gmra.mxu0 %v1686
        %v1777 = vpop.f32.mrf.mxu0
        %v1778 = vadd.f32 0.0, %v1777
        %v1779 = vpop.f32.mrf.mxu0
        %1780 = vmatprep.mubr.f32.mxu0 0.0
        %1781 = vmatmul.mubr.f32.gmra.mxu0 %v1689
        %v1782 = vpop.f32.mrf.mxu0
        %v1783 = vadd.f32 0.0, %v1782
        %v1784 = vpop.f32.mrf.mxu0
        %1785 = vmatprep.mubr.f32.mxu0 0.0
        %1786 = vmatmul.mubr.f32.gmra.mxu0 %v1692
        %v1787 = vpop.f32.mrf.mxu0
        %v1788 = vadd.f32 0.0, %v1787
        %v1789 = vpop.f32.mrf.mxu0
        %1790 = vmatprep.mubr.f32.mxu0 0.0
        %1791 = vmatmul.mubr.f32.gmra.mxu0 %v1695
        %v1792 = vpop.f32.mrf.mxu0
        %v1793 = vadd.f32 0.0, %v1792
        %v1794 = vpop.f32.mrf.mxu0
        %1795 = vmatprep.mubr.f32.mxu0 0.0
        %1796 = vmatmul.mubr.f32.gmra.mxu0 %v1698
        %v1797 = vpop.f32.mrf.mxu0
        %v1798 = vadd.f32 0.0, %v1797
        %v1799 = vpop.f32.mrf.mxu0
        %1800 = vmatprep.mubr.f32.mxu0 0.0
        %1801 = vmatmul.mubr.f32.gmra.mxu0 %v1701
        %v1802 = vpop.f32.mrf.mxu0
        %v1803 = vadd.f32 0.0, %v1802
        %v1804 = vpop.f32.mrf.mxu0
        %1805 = vmatprep.mubr.f32.mxu0 0.0
        %1806 = vmatmul.mubr.f32.gmra.mxu0 %v1704
        %v1807 = vpop.f32.mrf.mxu0
        %v1808 = vadd.f32 0.0, %v1807
        %v1809 = vpop.f32.mrf.mxu0
        %1810 = vdwg.mxu0
        %s1811 = scalar_lea.vmem [#allocation4], 448
        %v1812 = vld [vmem:[%s1811] sm:$0xff]
        %v1813 = vld [vmem:[%s1811 + $0x8] sm:$0xff]
        %v1814 = vld [vmem:[%s1811 + $0x10] sm:$0xff]
        %v1815 = vld [vmem:[%s1811 + $0x18] sm:$0xff]
        %v1816 = vld [vmem:[%s1811 + $0x20] sm:$0xff]
        %v1817 = vld [vmem:[%s1811 + $0x28] sm:$0xff]
        %v1818 = vld [vmem:[%s1811 + $0x30] sm:$0xff]
        %v1819 = vld [vmem:[%s1811 + $0x38] sm:$0xff]
        %v1821 = vsel %vm853, %v1812, 0
        %v1824 = vsel %vm853, %v1813, 0
        %v1827 = vsel %vm853, %v1814, 0
        %v1830 = vsel %vm853, %v1815, 0
        %v1833 = vsel %vm853, %v1816, 0
        %v1836 = vsel %vm853, %v1817, 0
        %v1839 = vsel %vm853, %v1818, 0
        %v1842 = vsel %vm853, %v1819, 0
        %1844 = vmatprep.subr.mxu0 0.0
        %1845 = vmatpush1.msra.mxu0 0.0
        %1846 = vmatprep.subr.mxu0 0.0
        %1847 = vmatpush1.msra.mxu0 0.0
        %1848 = vmatprep.subr.mxu0 0.0
        %1849 = vmatpush1.msra.mxu0 0.0
        %1850 = vmatprep.subr.mxu0 0.0
        %1851 = vmatpush1.msra.mxu0 0.0
        %1852 = vmatprep.subr.mxu0 0.0
        %1853 = vmatpush1.msra.mxu0 0.0
        %1854 = vmatprep.subr.mxu0 0.0
        %1855 = vmatpush1.msra.mxu0 0.0
        %1856 = vmatprep.subr.mxu0 0.0
        %1857 = vmatpush1.msra.mxu0 0.0
        %1858 = vmatprep.subr.mxu0 0.0
        %1859 = vmatpush1.msra.mxu0 0.0
        %1860 = vmatprep.subr.mxu0 0.0
        %1861 = vmatpush1.msra.mxu0 %v844
        %1862 = vmatprep.subr.mxu0 0.0
        %1863 = vmatpush1.msra.mxu0 %v843
        %1864 = vmatprep.subr.mxu0 0.0
        %1865 = vmatpush1.msra.mxu0 %v842
        %1866 = vmatprep.subr.mxu0 0.0
        %1867 = vmatpush1.msra.mxu0 %v841
        %1868 = vmatprep.subr.mxu0 0.0
        %1869 = vmatpush1.msra.mxu0 %v840
        %1870 = vmatprep.subr.mxu0 0.0
        %1871 = vmatpush1.msra.mxu0 %v839
        %1872 = vmatprep.subr.mxu0 0.0
        %1873 = vmatpush1.msra.mxu0 %v838
        %1874 = vmatprep.subr.mxu0 0.0
        %1875 = vmatpush1.msra.mxu0 %v837
        %1876 = vmatprep.subr.mxu0 0.0
        %1877 = vmatpush2.msra.mxu0 0.0
        %1878 = vmatprep.subr.mxu0 0.0
        %1879 = vmatpush2.msra.mxu0 0.0
        %1880 = vmatprep.subr.mxu0 0.0
        %1881 = vmatpush2.msra.mxu0 0.0
        %1882 = vmatprep.subr.mxu0 0.0
        %1883 = vmatpush2.msra.mxu0 0.0
        %1884 = vmatprep.subr.mxu0 0.0
        %1885 = vmatpush2.msra.mxu0 0.0
        %1886 = vmatprep.subr.mxu0 0.0
        %1887 = vmatpush2.msra.mxu0 0.0
        %1888 = vmatprep.subr.mxu0 0.0
        %1889 = vmatpush2.msra.mxu0 0.0
        %1890 = vmatprep.subr.mxu0 0.0
        %1891 = vmatpush2.msra.mxu0 0.0
        %1892 = vmatprep.subr.mxu0 0.0
        %1893 = vmatpush2.msra.mxu0 0.0
        %1894 = vmatprep.subr.mxu0 0.0
        %1895 = vmatpush2.msra.mxu0 0.0
        %1896 = vmatprep.subr.mxu0 0.0
        %1897 = vmatpush2.msra.mxu0 0.0
        %1898 = vmatprep.subr.mxu0 0.0
        %1899 = vmatpush2.msra.mxu0 0.0
        %1900 = vmatprep.subr.mxu0 0.0
        %1901 = vmatpush2.msra.mxu0 0.0
        %1902 = vmatprep.subr.mxu0 0.0
        %1903 = vmatpush2.msra.mxu0 0.0
        %1904 = vmatprep.subr.mxu0 0.0
        %1905 = vmatpush2.msra.mxu0 0.0
        %1906 = vmatprep.subr.mxu0 0.0
        %1907 = vmatpush2.msra.mxu0 0.0
        %1908 = vmatprep.mubr.f32.mxu0 0.0
        %1909 = vmatmul.mubr.f32.gmra.mxu0 %v1821
        %v1910 = vpop.f32.mrf.mxu0
        %v1911 = vadd.f32 0.0, %v1910
        %v1912 = vpop.f32.mrf.mxu0
        %1913 = vmatprep.mubr.f32.mxu0 0.0
        %1914 = vmatmul.mubr.f32.gmra.mxu0 %v1824
        %v1915 = vpop.f32.mrf.mxu0
        %v1916 = vadd.f32 0.0, %v1915
        %v1917 = vpop.f32.mrf.mxu0
        %1918 = vmatprep.mubr.f32.mxu0 0.0
        %1919 = vmatmul.mubr.f32.gmra.mxu0 %v1827
        %v1920 = vpop.f32.mrf.mxu0
        %v1921 = vadd.f32 0.0, %v1920
        %v1922 = vpop.f32.mrf.mxu0
        %1923 = vmatprep.mubr.f32.mxu0 0.0
        %1924 = vmatmul.mubr.f32.gmra.mxu0 %v1830
        %v1925 = vpop.f32.mrf.mxu0
        %v1926 = vadd.f32 0.0, %v1925
        %v1927 = vpop.f32.mrf.mxu0
        %1928 = vmatprep.mubr.f32.mxu0 0.0
        %1929 = vmatmul.mubr.f32.gmra.mxu0 %v1833
        %v1930 = vpop.f32.mrf.mxu0
        %v1931 = vadd.f32 0.0, %v1930
        %v1932 = vpop.f32.mrf.mxu0
        %1933 = vmatprep.mubr.f32.mxu0 0.0
        %1934 = vmatmul.mubr.f32.gmra.mxu0 %v1836
        %v1935 = vpop.f32.mrf.mxu0
        %v1936 = vadd.f32 0.0, %v1935
        %v1937 = vpop.f32.mrf.mxu0
        %1938 = vmatprep.mubr.f32.mxu0 0.0
        %1939 = vmatmul.mubr.f32.gmra.mxu0 %v1839
        %v1940 = vpop.f32.mrf.mxu0
        %v1941 = vadd.f32 0.0, %v1940
        %v1942 = vpop.f32.mrf.mxu0
        %1943 = vmatprep.mubr.f32.mxu0 0.0
        %1944 = vmatmul.mubr.f32.gmra.mxu0 %v1842
        %v1945 = vpop.f32.mrf.mxu0
        %v1946 = vadd.f32 0.0, %v1945
        %v1947 = vpop.f32.mrf.mxu0
        %1948 = vdwg.mxu0
        %s1949 = scalar_lea.vmem [#allocation4], 512
        %v1950 = vld [vmem:[%s1949] sm:$0xff]
        %v1951 = vld [vmem:[%s1949 + $0x8] sm:$0xff]
        %v1952 = vld [vmem:[%s1949 + $0x10] sm:$0xff]
        %v1953 = vld [vmem:[%s1949 + $0x18] sm:$0xff]
        %v1954 = vld [vmem:[%s1949 + $0x20] sm:$0xff]
        %v1955 = vld [vmem:[%s1949 + $0x28] sm:$0xff]
        %v1956 = vld [vmem:[%s1949 + $0x30] sm:$0xff]
        %v1957 = vld [vmem:[%s1949 + $0x38] sm:$0xff]
        %v1959 = vsel %vm853, %v1950, 0
        %v1962 = vsel %vm853, %v1951, 0
        %v1965 = vsel %vm853, %v1952, 0
        %v1968 = vsel %vm853, %v1953, 0
        %v1971 = vsel %vm853, %v1954, 0
        %v1974 = vsel %vm853, %v1955, 0
        %v1977 = vsel %vm853, %v1956, 0
        %v1980 = vsel %vm853, %v1957, 0
        %1982 = vmatprep.subr.mxu0 0.0
        %1983 = vmatpush1.msra.mxu0 0.0
        %1984 = vmatprep.subr.mxu0 0.0
        %1985 = vmatpush1.msra.mxu0 0.0
        %1986 = vmatprep.subr.mxu0 0.0
        %1987 = vmatpush1.msra.mxu0 0.0
        %1988 = vmatprep.subr.mxu0 0.0
        %1989 = vmatpush1.msra.mxu0 0.0
        %1990 = vmatprep.subr.mxu0 0.0
        %1991 = vmatpush1.msra.mxu0 0.0
        %1992 = vmatprep.subr.mxu0 0.0
        %1993 = vmatpush1.msra.mxu0 0.0
        %1994 = vmatprep.subr.mxu0 0.0
        %1995 = vmatpush1.msra.mxu0 0.0
        %1996 = vmatprep.subr.mxu0 0.0
        %1997 = vmatpush1.msra.mxu0 0.0
        %1998 = vmatprep.subr.mxu0 0.0
        %1999 = vmatpush1.msra.mxu0 %v844
        %2000 = vmatprep.subr.mxu0 0.0
        %2001 = vmatpush1.msra.mxu0 %v843
        %2002 = vmatprep.subr.mxu0 0.0
        %2003 = vmatpush1.msra.mxu0 %v842
        %2004 = vmatprep.subr.mxu0 0.0
        %2005 = vmatpush1.msra.mxu0 %v841
        %2006 = vmatprep.subr.mxu0 0.0
        %2007 = vmatpush1.msra.mxu0 %v840
        %2008 = vmatprep.subr.mxu0 0.0
        %2009 = vmatpush1.msra.mxu0 %v839
        %2010 = vmatprep.subr.mxu0 0.0
        %2011 = vmatpush1.msra.mxu0 %v838
        %2012 = vmatprep.subr.mxu0 0.0
        %2013 = vmatpush1.msra.mxu0 %v837
        %2014 = vmatprep.subr.mxu0 0.0
        %2015 = vmatpush2.msra.mxu0 0.0
        %2016 = vmatprep.subr.mxu0 0.0
        %2017 = vmatpush2.msra.mxu0 0.0
        %2018 = vmatprep.subr.mxu0 0.0
        %2019 = vmatpush2.msra.mxu0 0.0
        %2020 = vmatprep.subr.mxu0 0.0
        %2021 = vmatpush2.msra.mxu0 0.0
        %2022 = vmatprep.subr.mxu0 0.0
        %2023 = vmatpush2.msra.mxu0 0.0
        %2024 = vmatprep.subr.mxu0 0.0
        %2025 = vmatpush2.msra.mxu0 0.0
        %2026 = vmatprep.subr.mxu0 0.0
        %2027 = vmatpush2.msra.mxu0 0.0
        %2028 = vmatprep.subr.mxu0 0.0
        %2029 = vmatpush2.msra.mxu0 0.0
        %2030 = vmatprep.subr.mxu0 0.0
        %2031 = vmatpush2.msra.mxu0 0.0
        %2032 = vmatprep.subr.mxu0 0.0
        %2033 = vmatpush2.msra.mxu0 0.0
        %2034 = vmatprep.subr.mxu0 0.0
        %2035 = vmatpush2.msra.mxu0 0.0
        %2036 = vmatprep.subr.mxu0 0.0
        %2037 = vmatpush2.msra.mxu0 0.0
        %2038 = vmatprep.subr.mxu0 0.0
        %2039 = vmatpush2.msra.mxu0 0.0
        %2040 = vmatprep.subr.mxu0 0.0
        %2041 = vmatpush2.msra.mxu0 0.0
        %2042 = vmatprep.subr.mxu0 0.0
        %2043 = vmatpush2.msra.mxu0 0.0
        %2044 = vmatprep.subr.mxu0 0.0
        %2045 = vmatpush2.msra.mxu0 0.0
        %2046 = vmatprep.mubr.f32.mxu0 0.0
        %2047 = vmatmul.mubr.f32.gmra.mxu0 %v1959
        %v2048 = vpop.f32.mrf.mxu0
        %v2049 = vadd.f32 0.0, %v2048
        %v2050 = vpop.f32.mrf.mxu0
        %2051 = vmatprep.mubr.f32.mxu0 0.0
        %2052 = vmatmul.mubr.f32.gmra.mxu0 %v1962
        %v2053 = vpop.f32.mrf.mxu0
        %v2054 = vadd.f32 0.0, %v2053
        %v2055 = vpop.f32.mrf.mxu0
        %2056 = vmatprep.mubr.f32.mxu0 0.0
        %2057 = vmatmul.mubr.f32.gmra.mxu0 %v1965
        %v2058 = vpop.f32.mrf.mxu0
        %v2059 = vadd.f32 0.0, %v2058
        %v2060 = vpop.f32.mrf.mxu0
        %2061 = vmatprep.mubr.f32.mxu0 0.0
        %2062 = vmatmul.mubr.f32.gmra.mxu0 %v1968
        %v2063 = vpop.f32.mrf.mxu0
        %v2064 = vadd.f32 0.0, %v2063
        %v2065 = vpop.f32.mrf.mxu0
        %2066 = vmatprep.mubr.f32.mxu0 0.0
        %2067 = vmatmul.mubr.f32.gmra.mxu0 %v1971
        %v2068 = vpop.f32.mrf.mxu0
        %v2069 = vadd.f32 0.0, %v2068
        %v2070 = vpop.f32.mrf.mxu0
        %2071 = vmatprep.mubr.f32.mxu0 0.0
        %2072 = vmatmul.mubr.f32.gmra.mxu0 %v1974
        %v2073 = vpop.f32.mrf.mxu0
        %v2074 = vadd.f32 0.0, %v2073
        %v2075 = vpop.f32.mrf.mxu0
        %2076 = vmatprep.mubr.f32.mxu0 0.0
        %2077 = vmatmul.mubr.f32.gmra.mxu0 %v1977
        %v2078 = vpop.f32.mrf.mxu0
        %v2079 = vadd.f32 0.0, %v2078
        %v2080 = vpop.f32.mrf.mxu0
        %2081 = vmatprep.mubr.f32.mxu0 0.0
        %2082 = vmatmul.mubr.f32.gmra.mxu0 %v1980
        %v2083 = vpop.f32.mrf.mxu0
        %v2084 = vadd.f32 0.0, %v2083
        %v2085 = vpop.f32.mrf.mxu0
        %2086 = vdwg.mxu0
        %2095 = vrot.lane.b32.xlu0 %v1083, 8
        %v2096 = vpop.permute.xlu0 %2095
        %2097 = vrot.lane.b32.xlu0 %v1088, 8
        %v2098 = vpop.permute.xlu0 %2097
        %2099 = vrot.lane.b32.xlu0 %v1093, 8
        %v2100 = vpop.permute.xlu0 %2099
        %2101 = vrot.lane.b32.xlu0 %v1098, 8
        %v2102 = vpop.permute.xlu0 %2101
        %2103 = vrot.lane.b32.xlu0 %v1103, 8
        %v2104 = vpop.permute.xlu0 %2103
        %2105 = vrot.lane.b32.xlu0 %v1108, 8
        %v2106 = vpop.permute.xlu0 %2105
        %2107 = vrot.lane.b32.xlu0 %v1113, 8
        %v2108 = vpop.permute.xlu0 %2107
        %2109 = vrot.lane.b32.xlu0 %v1118, 8
        %v2110 = vpop.permute.xlu0 %2109
        %2127 = vrot.lane.b32.xlu0 %v1221, 16
        %v2128 = vpop.permute.xlu0 %2127
        %2129 = vrot.lane.b32.xlu0 %v1226, 16
        %v2130 = vpop.permute.xlu0 %2129
        %2131 = vrot.lane.b32.xlu0 %v1231, 16
        %v2132 = vpop.permute.xlu0 %2131
        %2133 = vrot.lane.b32.xlu0 %v1236, 16
        %v2134 = vpop.permute.xlu0 %2133
        %2135 = vrot.lane.b32.xlu0 %v1241, 16
        %v2136 = vpop.permute.xlu0 %2135
        %2137 = vrot.lane.b32.xlu0 %v1246, 16
        %v2138 = vpop.permute.xlu0 %2137
        %2139 = vrot.lane.b32.xlu0 %v1251, 16
        %v2140 = vpop.permute.xlu0 %2139
        %2141 = vrot.lane.b32.xlu0 %v1256, 16
        %v2142 = vpop.permute.xlu0 %2141
        %2159 = vrot.lane.b32.xlu0 %v1359, 24
        %v2160 = vpop.permute.xlu0 %2159
        %2161 = vrot.lane.b32.xlu0 %v1364, 24
        %v2162 = vpop.permute.xlu0 %2161
        %2163 = vrot.lane.b32.xlu0 %v1369, 24
        %v2164 = vpop.permute.xlu0 %2163
        %2165 = vrot.lane.b32.xlu0 %v1374, 24
        %v2166 = vpop.permute.xlu0 %2165
        %2167 = vrot.lane.b32.xlu0 %v1379, 24
        %v2168 = vpop.permute.xlu0 %2167
        %2169 = vrot.lane.b32.xlu0 %v1384, 24
        %v2170 = vpop.permute.xlu0 %2169
        %2171 = vrot.lane.b32.xlu0 %v1389, 24
        %v2172 = vpop.permute.xlu0 %2171
        %2173 = vrot.lane.b32.xlu0 %v1394, 24
        %v2174 = vpop.permute.xlu0 %2173
        %2191 = vrot.lane.b32.xlu0 %v1497, 32
        %v2192 = vpop.permute.xlu0 %2191
        %2193 = vrot.lane.b32.xlu0 %v1502, 32
        %v2194 = vpop.permute.xlu0 %2193
        %2195 = vrot.lane.b32.xlu0 %v1507, 32
        %v2196 = vpop.permute.xlu0 %2195
        %2197 = vrot.lane.b32.xlu0 %v1512, 32
        %v2198 = vpop.permute.xlu0 %2197
        %2199 = vrot.lane.b32.xlu0 %v1517, 32
        %v2200 = vpop.permute.xlu0 %2199
        %2201 = vrot.lane.b32.xlu0 %v1522, 32
        %v2202 = vpop.permute.xlu0 %2201
        %2203 = vrot.lane.b32.xlu0 %v1527, 32
        %v2204 = vpop.permute.xlu0 %2203
        %2205 = vrot.lane.b32.xlu0 %v1532, 32
        %v2206 = vpop.permute.xlu0 %2205
        %2223 = vrot.lane.b32.xlu0 %v1635, 40
        %v2224 = vpop.permute.xlu0 %2223
        %2225 = vrot.lane.b32.xlu0 %v1640, 40
        %v2226 = vpop.permute.xlu0 %2225
        %2227 = vrot.lane.b32.xlu0 %v1645, 40
        %v2228 = vpop.permute.xlu0 %2227
        %2229 = vrot.lane.b32.xlu0 %v1650, 40
        %v2230 = vpop.permute.xlu0 %2229
        %2231 = vrot.lane.b32.xlu0 %v1655, 40
        %v2232 = vpop.permute.xlu0 %2231
        %2233 = vrot.lane.b32.xlu0 %v1660, 40
        %v2234 = vpop.permute.xlu0 %2233
        %2235 = vrot.lane.b32.xlu0 %v1665, 40
        %v2236 = vpop.permute.xlu0 %2235
        %2237 = vrot.lane.b32.xlu0 %v1670, 40
        %v2238 = vpop.permute.xlu0 %2237
        %2255 = vrot.lane.b32.xlu0 %v1773, 48
        %v2256 = vpop.permute.xlu0 %2255
        %2257 = vrot.lane.b32.xlu0 %v1778, 48
        %v2258 = vpop.permute.xlu0 %2257
        %2259 = vrot.lane.b32.xlu0 %v1783, 48
        %v2260 = vpop.permute.xlu0 %2259
        %2261 = vrot.lane.b32.xlu0 %v1788, 48
        %v2262 = vpop.permute.xlu0 %2261
        %2263 = vrot.lane.b32.xlu0 %v1793, 48
        %v2264 = vpop.permute.xlu0 %2263
        %2265 = vrot.lane.b32.xlu0 %v1798, 48
        %v2266 = vpop.permute.xlu0 %2265
        %2267 = vrot.lane.b32.xlu0 %v1803, 48
        %v2268 = vpop.permute.xlu0 %2267
        %2269 = vrot.lane.b32.xlu0 %v1808, 48
        %v2270 = vpop.permute.xlu0 %2269
        %2287 = vrot.lane.b32.xlu0 %v1911, 56
        %v2288 = vpop.permute.xlu0 %2287
        %2289 = vrot.lane.b32.xlu0 %v1916, 56
        %v2290 = vpop.permute.xlu0 %2289
        %2291 = vrot.lane.b32.xlu0 %v1921, 56
        %v2292 = vpop.permute.xlu0 %2291
        %2293 = vrot.lane.b32.xlu0 %v1926, 56
        %v2294 = vpop.permute.xlu0 %2293
        %2295 = vrot.lane.b32.xlu0 %v1931, 56
        %v2296 = vpop.permute.xlu0 %2295
        %2297 = vrot.lane.b32.xlu0 %v1936, 56
        %v2298 = vpop.permute.xlu0 %2297
        %2299 = vrot.lane.b32.xlu0 %v1941, 56
        %v2300 = vpop.permute.xlu0 %2299
        %2301 = vrot.lane.b32.xlu0 %v1946, 56
        %v2302 = vpop.permute.xlu0 %2301
        %2319 = vrot.lane.b32.xlu0 %v2049, 64
        %v2320 = vpop.permute.xlu0 %2319
        %2321 = vrot.lane.b32.xlu0 %v2054, 64
        %v2322 = vpop.permute.xlu0 %2321
        %2323 = vrot.lane.b32.xlu0 %v2059, 64
        %v2324 = vpop.permute.xlu0 %2323
        %2325 = vrot.lane.b32.xlu0 %v2064, 64
        %v2326 = vpop.permute.xlu0 %2325
        %2327 = vrot.lane.b32.xlu0 %v2069, 64
        %v2328 = vpop.permute.xlu0 %2327
        %2329 = vrot.lane.b32.xlu0 %v2074, 64
        %v2330 = vpop.permute.xlu0 %2329
        %2331 = vrot.lane.b32.xlu0 %v2079, 64
        %v2332 = vpop.permute.xlu0 %2331
        %2333 = vrot.lane.b32.xlu0 %v2084, 64
        %v2334 = vpop.permute.xlu0 %2333
        %vm2343 = vcmask 64512
        %v2344 = vsel %vm2343, %v945, %v2096
        %v2345 = vsel %vm2343, %v950, %v2098
        %v2346 = vsel %vm2343, %v955, %v2100
        %v2347 = vsel %vm2343, %v960, %v2102
        %v2348 = vsel %vm2343, %v965, %v2104
        %v2349 = vsel %vm2343, %v970, %v2106
        %v2350 = vsel %vm2343, %v975, %v2108
        %v2351 = vsel %vm2343, %v980, %v2110
        %vm2352 = vcmask 130048
        %v2353 = vsel %vm2352, %v2344, %v2128
        %v2354 = vsel %vm2352, %v2345, %v2130
        %v2355 = vsel %vm2352, %v2346, %v2132
        %v2356 = vsel %vm2352, %v2347, %v2134
        %v2357 = vsel %vm2352, %v2348, %v2136
        %v2358 = vsel %vm2352, %v2349, %v2138
        %v2359 = vsel %vm2352, %v2350, %v2140
        %v2360 = vsel %vm2352, %v2351, %v2142
        %vm2361 = vcmask 195584
        %v2362 = vsel %vm2361, %v2353, %v2160
        %v2363 = vsel %vm2361, %v2354, %v2162
        %v2364 = vsel %vm2361, %v2355, %v2164
        %v2365 = vsel %vm2361, %v2356, %v2166
        %v2366 = vsel %vm2361, %v2357, %v2168
        %v2367 = vsel %vm2361, %v2358, %v2170
        %v2368 = vsel %vm2361, %v2359, %v2172
        %v2369 = vsel %vm2361, %v2360, %v2174
        %vm2370 = vcmask 261120
        %v2371 = vsel %vm2370, %v2362, %v2192
        %v2372 = vsel %vm2370, %v2363, %v2194
        %v2373 = vsel %vm2370, %v2364, %v2196
        %v2374 = vsel %vm2370, %v2365, %v2198
        %v2375 = vsel %vm2370, %v2366, %v2200
        %v2376 = vsel %vm2370, %v2367, %v2202
        %v2377 = vsel %vm2370, %v2368, %v2204
        %v2378 = vsel %vm2370, %v2369, %v2206
        %vm2379 = vcmask 326656
        %v2380 = vsel %vm2379, %v2371, %v2224
        %v2381 = vsel %vm2379, %v2372, %v2226
        %v2382 = vsel %vm2379, %v2373, %v2228
        %v2383 = vsel %vm2379, %v2374, %v2230
        %v2384 = vsel %vm2379, %v2375, %v2232
        %v2385 = vsel %vm2379, %v2376, %v2234
        %v2386 = vsel %vm2379, %v2377, %v2236
        %v2387 = vsel %vm2379, %v2378, %v2238
        %vm2388 = vcmask 392192
        %v2389 = vsel %vm2388, %v2380, %v2256
        %v2390 = vsel %vm2388, %v2381, %v2258
        %v2391 = vsel %vm2388, %v2382, %v2260
        %v2392 = vsel %vm2388, %v2383, %v2262
        %v2393 = vsel %vm2388, %v2384, %v2264
        %v2394 = vsel %vm2388, %v2385, %v2266
        %v2395 = vsel %vm2388, %v2386, %v2268
        %v2396 = vsel %vm2388, %v2387, %v2270
        %vm2397 = vcmask 457728
        %v2398 = vsel %vm2397, %v2389, %v2288
        %v2399 = vsel %vm2397, %v2390, %v2290
        %v2400 = vsel %vm2397, %v2391, %v2292
        %v2401 = vsel %vm2397, %v2392, %v2294
        %v2402 = vsel %vm2397, %v2393, %v2296
        %v2403 = vsel %vm2397, %v2394, %v2298
        %v2404 = vsel %vm2397, %v2395, %v2300
        %v2405 = vsel %vm2397, %v2396, %v2302
        %v2406 = vsel %vm853, %v2398, %v2320
        %v2407 = vsel %vm853, %v2399, %v2322
        %v2408 = vsel %vm853, %v2400, %v2324
        %v2409 = vsel %vm853, %v2401, %v2326
        %v2410 = vsel %vm853, %v2402, %v2328
        %v2411 = vsel %vm853, %v2403, %v2330
        %v2412 = vsel %vm853, %v2404, %v2332
        %v2413 = vsel %vm853, %v2405, %v2334
        %v2414 = vld [vmem:[%s7] sm:$0xff]
        %v2415 = vld [vmem:[%s7 + $0x8] sm:$0xff]
        %v2416 = vld [vmem:[%s7 + $0x10] sm:$0xff]
        %v2417 = vld [vmem:[%s7 + $0x18] sm:$0xff]
        %v2418 = vld [vmem:[%s7 + $0x20] sm:$0xff]
        %v2419 = vld [vmem:[%s7 + $0x28] sm:$0xff]
        %v2420 = vld [vmem:[%s7 + $0x30] sm:$0xff]
        %v2421 = vld [vmem:[%s7 + $0x38] sm:$0xff]
        %v2422 = vld [vmem:[%s7 + $0x40] sm:$0xff]
        %v2423 = vld [vmem:[%s7 + $0x48] sm:$0xff]
        %v2424 = vld [vmem:[%s7 + $0x50] sm:$0xff]
        %v2425 = vld [vmem:[%s7 + $0x58] sm:$0xff]
        %v2426 = vld [vmem:[%s7 + $0x60] sm:$0xff]
        %v2427 = vld [vmem:[%s7 + $0x68] sm:$0xff]
        %v2428 = vld [vmem:[%s7 + $0x70] sm:$0xff]
        %v2429 = vld [vmem:[%s7 + $0x78] sm:$0xff]
        %v2430 = vld [vmem:[%s7 + $0x80] sm:$0xff]
        %v2431 = vld [vmem:[%s7 + $0x88] sm:$0xff]
        %v2432 = vld [vmem:[%s7 + $0x90] sm:$0xff]
        %v2433 = vld [vmem:[%s7 + $0x98] sm:$0xff]
        %v2434 = vld [vmem:[%s7 + $0xa0] sm:$0xff]
        %v2435 = vld [vmem:[%s7 + $0xa8] sm:$0xff]
        %v2436 = vld [vmem:[%s7 + $0xb0] sm:$0xff]
        %v2437 = vld [vmem:[%s7 + $0xb8] sm:$0xff]
        %v2438 = vld [vmem:[%s7 + $0xc0] sm:$0xff]
        %v2439 = vld [vmem:[%s7 + $0xc8] sm:$0xff]
        %v2440 = vld [vmem:[%s7 + $0xd0] sm:$0xff]
        %v2441 = vld [vmem:[%s8] sm:$0x7]
        %v2443 = vlaneseq
        %v2444 = vshrl.u32 %v2443, 7
        %v2445 = vsub.s32 0, %v2444
        %v2446 = vrot.slane %v2441, %v2445
        %v2447 = vlaneseq
        %v2448 = vshrl.u32 %v2447, 7
        %v2449 = vsub.s32 1, %v2448
        %v2450 = vrot.slane %v2441, %v2449
        %v2451 = vlaneseq
        %v2452 = vshrl.u32 %v2451, 7
        %v2453 = vsub.s32 2, %v2452
        %v2454 = vrot.slane %v2441, %v2453
        %vm2458 = vcmask 588800
        %v2460 = vsel %vm2458, %v2406, 0
        %v2463 = vsel %vm2458, %v2407, 0
        %v2466 = vsel %vm2458, %v2408, 0
        %v2469 = vsel %vm2458, %v2409, 0
        %v2472 = vsel %vm2458, %v2410, 0
        %v2475 = vsel %vm2458, %v2411, 0
        %v2478 = vsel %vm2458, %v2412, 0
        %v2481 = vsel %vm2458, %v2413, 0
        %2483 = vmatprep.subr.mxu0 0.0
        %2484 = vmatpush1.msra.mxu0 0.0
        %2485 = vmatprep.subr.mxu0 0.0
        %2486 = vmatpush1.msra.mxu0 0.0
        %2487 = vmatprep.subr.mxu0 0.0
        %2488 = vmatpush1.msra.mxu0 0.0
        %2489 = vmatprep.subr.mxu0 0.0
        %2490 = vmatpush1.msra.mxu0 0.0
        %2491 = vmatprep.subr.mxu0 0.0
        %2492 = vmatpush1.msra.mxu0 0.0
        %2493 = vmatprep.subr.mxu0 0.0
        %2494 = vmatpush1.msra.mxu0 0.0
        %2495 = vmatprep.subr.mxu0 0.0
        %2496 = vmatpush1.msra.mxu0 0.0
        %2497 = vmatprep.subr.mxu0 %v2439
        %2498 = vmatpush1.msra.mxu0 %v2438
        %2499 = vmatprep.subr.mxu0 %v2436
        %2500 = vmatpush1.msra.mxu0 %v2435
        %2501 = vmatprep.subr.mxu0 %v2433
        %2502 = vmatpush1.msra.mxu0 %v2432
        %2503 = vmatprep.subr.mxu0 %v2430
        %2504 = vmatpush1.msra.mxu0 %v2429
        %2505 = vmatprep.subr.mxu0 %v2427
        %2506 = vmatpush1.msra.mxu0 %v2426
        %2507 = vmatprep.subr.mxu0 %v2424
        %2508 = vmatpush1.msra.mxu0 %v2423
        %2509 = vmatprep.subr.mxu0 %v2421
        %2510 = vmatpush1.msra.mxu0 %v2420
        %2511 = vmatprep.subr.mxu0 %v2418
        %2512 = vmatpush1.msra.mxu0 %v2417
        %2513 = vmatprep.subr.mxu0 %v2415
        %2514 = vmatpush1.msra.mxu0 %v2414
        %2515 = vmatprep.subr.mxu0 0.0
        %2516 = vmatpush2.msra.mxu0 0.0
        %2517 = vmatprep.subr.mxu0 0.0
        %2518 = vmatpush2.msra.mxu0 0.0
        %2519 = vmatprep.subr.mxu0 0.0
        %2520 = vmatpush2.msra.mxu0 0.0
        %2521 = vmatprep.subr.mxu0 0.0
        %2522 = vmatpush2.msra.mxu0 0.0
        %2523 = vmatprep.subr.mxu0 0.0
        %2524 = vmatpush2.msra.mxu0 0.0
        %2525 = vmatprep.subr.mxu0 0.0
        %2526 = vmatpush2.msra.mxu0 0.0
        %2527 = vmatprep.subr.mxu0 0.0
        %2528 = vmatpush2.msra.mxu0 0.0
        %2529 = vmatprep.subr.mxu0 0.0
        %2530 = vmatpush2.msra.mxu0 0.0
        %2531 = vmatprep.subr.mxu0 0.0
        %2532 = vmatpush2.msra.mxu0 0.0
        %2533 = vmatprep.subr.mxu0 0.0
        %2534 = vmatpush2.msra.mxu0 0.0
        %2535 = vmatprep.subr.mxu0 0.0
        %2536 = vmatpush2.msra.mxu0 0.0
        %2537 = vmatprep.subr.mxu0 0.0
        %2538 = vmatpush2.msra.mxu0 0.0
        %2539 = vmatprep.subr.mxu0 0.0
        %2540 = vmatpush2.msra.mxu0 0.0
        %2541 = vmatprep.subr.mxu0 0.0
        %2542 = vmatpush2.msra.mxu0 0.0
        %2543 = vmatprep.subr.mxu0 0.0
        %2544 = vmatpush2.msra.mxu0 0.0
        %2545 = vmatprep.subr.mxu0 0.0
        %2546 = vmatpush2.msra.mxu0 0.0
        %2547 = vmatprep.mubr.f32.mxu0 0.0
        %2548 = vmatmul.mubr.f32.gmra.mxu0 %v2460
        %v2549 = vpop.f32.mrf.mxu0
        %v2550 = vadd.f32 %v2446, %v2549
        %v2551 = vpop.f32.mrf.mxu0
        %v2552 = vadd.f32 %v2450, %v2551
        %2553 = vmatprep.mubr.f32.mxu0 0.0
        %2554 = vmatmul.mubr.f32.gmra.mxu0 %v2463
        %v2555 = vpop.f32.mrf.mxu0
        %v2556 = vadd.f32 %v2446, %v2555
        %v2557 = vpop.f32.mrf.mxu0
        %v2558 = vadd.f32 %v2450, %v2557
        %2559 = vmatprep.mubr.f32.mxu0 0.0
        %2560 = vmatmul.mubr.f32.gmra.mxu0 %v2466
        %v2561 = vpop.f32.mrf.mxu0
        %v2562 = vadd.f32 %v2446, %v2561
        %v2563 = vpop.f32.mrf.mxu0
        %v2564 = vadd.f32 %v2450, %v2563
        %2565 = vmatprep.mubr.f32.mxu0 0.0
        %2566 = vmatmul.mubr.f32.gmra.mxu0 %v2469
        %v2567 = vpop.f32.mrf.mxu0
        %v2568 = vadd.f32 %v2446, %v2567
        %v2569 = vpop.f32.mrf.mxu0
        %v2570 = vadd.f32 %v2450, %v2569
        %2571 = vmatprep.mubr.f32.mxu0 0.0
        %2572 = vmatmul.mubr.f32.gmra.mxu0 %v2472
        %v2573 = vpop.f32.mrf.mxu0
        %v2574 = vadd.f32 %v2446, %v2573
        %v2575 = vpop.f32.mrf.mxu0
        %v2576 = vadd.f32 %v2450, %v2575
        %2577 = vmatprep.mubr.f32.mxu0 0.0
        %2578 = vmatmul.mubr.f32.gmra.mxu0 %v2475
        %v2579 = vpop.f32.mrf.mxu0
        %v2580 = vadd.f32 %v2446, %v2579
        %v2581 = vpop.f32.mrf.mxu0
        %v2582 = vadd.f32 %v2450, %v2581
        %2583 = vmatprep.mubr.f32.mxu0 0.0
        %2584 = vmatmul.mubr.f32.gmra.mxu0 %v2478
        %v2585 = vpop.f32.mrf.mxu0
        %v2586 = vadd.f32 %v2446, %v2585
        %v2587 = vpop.f32.mrf.mxu0
        %v2588 = vadd.f32 %v2450, %v2587
        %2589 = vmatprep.mubr.f32.mxu0 0.0
        %2590 = vmatmul.mubr.f32.gmra.mxu0 %v2481
        %v2591 = vpop.f32.mrf.mxu0
        %v2592 = vadd.f32 %v2446, %v2591
        %v2593 = vpop.f32.mrf.mxu0
        %v2594 = vadd.f32 %v2450, %v2593
        %2595 = vdwg.mxu0
        %2596 = vmatprep.subr.mxu0 0.0
        %2597 = vmatpush1.msra.mxu0 0.0
        %2598 = vmatprep.subr.mxu0 0.0
        %2599 = vmatpush1.msra.mxu0 0.0
        %2600 = vmatprep.subr.mxu0 0.0
        %2601 = vmatpush1.msra.mxu0 0.0
        %2602 = vmatprep.subr.mxu0 0.0
        %2603 = vmatpush1.msra.mxu0 0.0
        %2604 = vmatprep.subr.mxu0 0.0
        %2605 = vmatpush1.msra.mxu0 0.0
        %2606 = vmatprep.subr.mxu0 0.0
        %2607 = vmatpush1.msra.mxu0 0.0
        %2608 = vmatprep.subr.mxu0 0.0
        %2609 = vmatpush1.msra.mxu0 0.0
        %2610 = vmatprep.subr.mxu0 0.0
        %2611 = vmatpush1.msra.mxu0 %v2440
        %2612 = vmatprep.subr.mxu0 0.0
        %2613 = vmatpush1.msra.mxu0 %v2437
        %2614 = vmatprep.subr.mxu0 0.0
        %2615 = vmatpush1.msra.mxu0 %v2434
        %2616 = vmatprep.subr.mxu0 0.0
        %2617 = vmatpush1.msra.mxu0 %v2431
        %2618 = vmatprep.subr.mxu0 0.0
        %2619 = vmatpush1.msra.mxu0 %v2428
        %2620 = vmatprep.subr.mxu0 0.0
        %2621 = vmatpush1.msra.mxu0 %v2425
        %2622 = vmatprep.subr.mxu0 0.0
        %2623 = vmatpush1.msra.mxu0 %v2422
        %2624 = vmatprep.subr.mxu0 0.0
        %2625 = vmatpush1.msra.mxu0 %v2419
        %2626 = vmatprep.subr.mxu0 0.0
        %2627 = vmatpush1.msra.mxu0 %v2416
        %2628 = vmatprep.subr.mxu0 0.0
        %2629 = vmatpush2.msra.mxu0 0.0
        %2630 = vmatprep.subr.mxu0 0.0
        %2631 = vmatpush2.msra.mxu0 0.0
        %2632 = vmatprep.subr.mxu0 0.0
        %2633 = vmatpush2.msra.mxu0 0.0
        %2634 = vmatprep.subr.mxu0 0.0
        %2635 = vmatpush2.msra.mxu0 0.0
        %2636 = vmatprep.subr.mxu0 0.0
        %2637 = vmatpush2.msra.mxu0 0.0
        %2638 = vmatprep.subr.mxu0 0.0
        %2639 = vmatpush2.msra.mxu0 0.0
        %2640 = vmatprep.subr.mxu0 0.0
        %2641 = vmatpush2.msra.mxu0 0.0
        %2642 = vmatprep.subr.mxu0 0.0
        %2643 = vmatpush2.msra.mxu0 0.0
        %2644 = vmatprep.subr.mxu0 0.0
        %2645 = vmatpush2.msra.mxu0 0.0
        %2646 = vmatprep.subr.mxu0 0.0
        %2647 = vmatpush2.msra.mxu0 0.0
        %2648 = vmatprep.subr.mxu0 0.0
        %2649 = vmatpush2.msra.mxu0 0.0
        %2650 = vmatprep.subr.mxu0 0.0
        %2651 = vmatpush2.msra.mxu0 0.0
        %2652 = vmatprep.subr.mxu0 0.0
        %2653 = vmatpush2.msra.mxu0 0.0
        %2654 = vmatprep.subr.mxu0 0.0
        %2655 = vmatpush2.msra.mxu0 0.0
        %2656 = vmatprep.subr.mxu0 0.0
        %2657 = vmatpush2.msra.mxu0 0.0
        %2658 = vmatprep.subr.mxu0 0.0
        %2659 = vmatpush2.msra.mxu0 0.0
        %2660 = vmatprep.mubr.f32.mxu0 0.0
        %2661 = vmatmul.mubr.f32.gmra.mxu0 %v2460
        %v2662 = vpop.f32.mrf.mxu0
        %v2663 = vadd.f32 %v2454, %v2662
        %v2664 = vpop.f32.mrf.mxu0
        %2665 = vmatprep.mubr.f32.mxu0 0.0
        %2666 = vmatmul.mubr.f32.gmra.mxu0 %v2463
        %v2667 = vpop.f32.mrf.mxu0
        %v2668 = vadd.f32 %v2454, %v2667
        %v2669 = vpop.f32.mrf.mxu0
        %2670 = vmatprep.mubr.f32.mxu0 0.0
        %2671 = vmatmul.mubr.f32.gmra.mxu0 %v2466
        %v2672 = vpop.f32.mrf.mxu0
        %v2673 = vadd.f32 %v2454, %v2672
        %v2674 = vpop.f32.mrf.mxu0
        %2675 = vmatprep.mubr.f32.mxu0 0.0
        %2676 = vmatmul.mubr.f32.gmra.mxu0 %v2469
        %v2677 = vpop.f32.mrf.mxu0
        %v2678 = vadd.f32 %v2454, %v2677
        %v2679 = vpop.f32.mrf.mxu0
        %2680 = vmatprep.mubr.f32.mxu0 0.0
        %2681 = vmatmul.mubr.f32.gmra.mxu0 %v2472
        %v2682 = vpop.f32.mrf.mxu0
        %v2683 = vadd.f32 %v2454, %v2682
        %v2684 = vpop.f32.mrf.mxu0
        %2685 = vmatprep.mubr.f32.mxu0 0.0
        %2686 = vmatmul.mubr.f32.gmra.mxu0 %v2475
        %v2687 = vpop.f32.mrf.mxu0
        %v2688 = vadd.f32 %v2454, %v2687
        %v2689 = vpop.f32.mrf.mxu0
        %2690 = vmatprep.mubr.f32.mxu0 0.0
        %2691 = vmatmul.mubr.f32.gmra.mxu0 %v2478
        %v2692 = vpop.f32.mrf.mxu0
        %v2693 = vadd.f32 %v2454, %v2692
        %v2694 = vpop.f32.mrf.mxu0
        %2695 = vmatprep.mubr.f32.mxu0 0.0
        %2696 = vmatmul.mubr.f32.gmra.mxu0 %v2481
        %v2697 = vpop.f32.mrf.mxu0
        %v2698 = vadd.f32 %v2454, %v2697
        %v2699 = vpop.f32.mrf.mxu0
        %2700 = vdwg.mxu0
        %2701 = vrot.lane.b32.xlu0 %v2552, 32
        %v2702 = vpop.permute.xlu0 %2701
        %2703 = vrot.lane.b32.xlu0 %v2558, 32
        %v2704 = vpop.permute.xlu0 %2703
        %2705 = vrot.lane.b32.xlu0 %v2564, 32
        %v2706 = vpop.permute.xlu0 %2705
        %2707 = vrot.lane.b32.xlu0 %v2570, 32
        %v2708 = vpop.permute.xlu0 %2707
        %2709 = vrot.lane.b32.xlu0 %v2576, 32
        %v2710 = vpop.permute.xlu0 %2709
        %2711 = vrot.lane.b32.xlu0 %v2582, 32
        %v2712 = vpop.permute.xlu0 %2711
        %2713 = vrot.lane.b32.xlu0 %v2588, 32
        %v2714 = vpop.permute.xlu0 %2713
        %2715 = vrot.lane.b32.xlu0 %v2594, 32
        %v2716 = vpop.permute.xlu0 %2715
        %2717 = vrot.lane.b32.xlu0 %v2552, 64
        %v2718 = vpop.permute.xlu0 %2717
        %2719 = vrot.lane.b32.xlu0 %v2558, 64
        %v2720 = vpop.permute.xlu0 %2719
        %2721 = vrot.lane.b32.xlu0 %v2564, 64
        %v2722 = vpop.permute.xlu0 %2721
        %2723 = vrot.lane.b32.xlu0 %v2570, 64
        %v2724 = vpop.permute.xlu0 %2723
        %2725 = vrot.lane.b32.xlu0 %v2576, 64
        %v2726 = vpop.permute.xlu0 %2725
        %2727 = vrot.lane.b32.xlu0 %v2582, 64
        %v2728 = vpop.permute.xlu0 %2727
        %2729 = vrot.lane.b32.xlu0 %v2588, 64
        %v2730 = vpop.permute.xlu0 %2729
        %2731 = vrot.lane.b32.xlu0 %v2594, 64
        %v2732 = vpop.permute.xlu0 %2731
        %2733 = vrot.lane.b32.xlu0 %v2552, 96
        %v2734 = vpop.permute.xlu0 %2733
        %2735 = vrot.lane.b32.xlu0 %v2558, 96
        %v2736 = vpop.permute.xlu0 %2735
        %2737 = vrot.lane.b32.xlu0 %v2564, 96
        %v2738 = vpop.permute.xlu0 %2737
        %2739 = vrot.lane.b32.xlu0 %v2570, 96
        %v2740 = vpop.permute.xlu0 %2739
        %2741 = vrot.lane.b32.xlu0 %v2576, 96
        %v2742 = vpop.permute.xlu0 %2741
        %2743 = vrot.lane.b32.xlu0 %v2582, 96
        %v2744 = vpop.permute.xlu0 %2743
        %2745 = vrot.lane.b32.xlu0 %v2588, 96
        %v2746 = vpop.permute.xlu0 %2745
        %2747 = vrot.lane.b32.xlu0 %v2594, 96
        %v2748 = vpop.permute.xlu0 %2747
        %v2749 = vmul.f32 %v2550, %v2552
        %v2750 = vmul.f32 %v2556, %v2558
        %v2751 = vmul.f32 %v2562, %v2564
        %v2752 = vmul.f32 %v2568, %v2570
        %v2753 = vmul.f32 %v2574, %v2576
        %v2754 = vmul.f32 %v2580, %v2582
        %v2755 = vmul.f32 %v2586, %v2588
        %v2756 = vmul.f32 %v2592, %v2594
        %v2757 = vmul.f32 %v2550, %v2702
        %v2758 = vmul.f32 %v2556, %v2704
        %v2759 = vmul.f32 %v2562, %v2706
        %v2760 = vmul.f32 %v2568, %v2708
        %v2761 = vmul.f32 %v2574, %v2710
        %v2762 = vmul.f32 %v2580, %v2712
        %v2763 = vmul.f32 %v2586, %v2714
        %v2764 = vmul.f32 %v2592, %v2716
        %v2765 = vmul.f32 %v2550, %v2718
        %v2766 = vmul.f32 %v2556, %v2720
        %v2767 = vmul.f32 %v2562, %v2722
        %v2768 = vmul.f32 %v2568, %v2724
        %v2769 = vmul.f32 %v2574, %v2726
        %v2770 = vmul.f32 %v2580, %v2728
        %v2771 = vmul.f32 %v2586, %v2730
        %v2772 = vmul.f32 %v2592, %v2732
        %v2773 = vmul.f32 %v2550, %v2734
        %v2774 = vmul.f32 %v2556, %v2736
        %v2775 = vmul.f32 %v2562, %v2738
        %v2776 = vmul.f32 %v2568, %v2740
        %v2777 = vmul.f32 %v2574, %v2742
        %v2778 = vmul.f32 %v2580, %v2744
        %v2779 = vmul.f32 %v2586, %v2746
        %v2780 = vmul.f32 %v2592, %v2748
        %v2782 = vsel %vm853, 1.0, 0
        %2784 = vmatprep.subr.mxu0 0.0
        %2785 = vmatpush1.msra.mxu0 0.0
        %2786 = vmatprep.subr.mxu0 0.0
        %2787 = vmatpush1.msra.mxu0 0.0
        %2788 = vmatprep.subr.mxu0 0.0
        %2789 = vmatpush1.msra.mxu0 0.0
        %2790 = vmatprep.subr.mxu0 0.0
        %2791 = vmatpush1.msra.mxu0 0.0
        %2792 = vmatprep.subr.mxu0 0.0
        %2793 = vmatpush1.msra.mxu0 0.0
        %2794 = vmatprep.subr.mxu0 0.0
        %2795 = vmatpush1.msra.mxu0 0.0
        %2796 = vmatprep.subr.mxu0 0.0
        %2797 = vmatpush1.msra.mxu0 0.0
        %2798 = vmatprep.subr.mxu0 0.0
        %2799 = vmatpush1.msra.mxu0 0.0
        %2800 = vmatprep.subr.mxu0 %v2764
        %2801 = vmatpush1.msra.mxu0 %v2756
        %2802 = vmatprep.subr.mxu0 %v2763
        %2803 = vmatpush1.msra.mxu0 %v2755
        %2804 = vmatprep.subr.mxu0 %v2762
        %2805 = vmatpush1.msra.mxu0 %v2754
        %2806 = vmatprep.subr.mxu0 %v2761
        %2807 = vmatpush1.msra.mxu0 %v2753
        %2808 = vmatprep.subr.mxu0 %v2760
        %2809 = vmatpush1.msra.mxu0 %v2752
        %2810 = vmatprep.subr.mxu0 %v2759
        %2811 = vmatpush1.msra.mxu0 %v2751
        %2812 = vmatprep.subr.mxu0 %v2758
        %2813 = vmatpush1.msra.mxu0 %v2750
        %2814 = vmatprep.subr.mxu0 %v2757
        %2815 = vmatpush1.msra.mxu0 %v2749
        %2816 = vmatprep.subr.mxu0 0.0
        %2817 = vmatpush2.msra.mxu0 0.0
        %2818 = vmatprep.subr.mxu0 0.0
        %2819 = vmatpush2.msra.mxu0 0.0
        %2820 = vmatprep.subr.mxu0 0.0
        %2821 = vmatpush2.msra.mxu0 0.0
        %2822 = vmatprep.subr.mxu0 0.0
        %2823 = vmatpush2.msra.mxu0 0.0
        %2824 = vmatprep.subr.mxu0 0.0
        %2825 = vmatpush2.msra.mxu0 0.0
        %2826 = vmatprep.subr.mxu0 0.0
        %2827 = vmatpush2.msra.mxu0 0.0
        %2828 = vmatprep.subr.mxu0 0.0
        %2829 = vmatpush2.msra.mxu0 0.0
        %2830 = vmatprep.subr.mxu0 0.0
        %2831 = vmatpush2.msra.mxu0 0.0
        %2832 = vmatprep.subr.mxu0 0.0
        %2833 = vmatpush2.msra.mxu0 0.0
        %2834 = vmatprep.subr.mxu0 0.0
        %2835 = vmatpush2.msra.mxu0 0.0
        %2836 = vmatprep.subr.mxu0 0.0
        %2837 = vmatpush2.msra.mxu0 0.0
        %2838 = vmatprep.subr.mxu0 0.0
        %2839 = vmatpush2.msra.mxu0 0.0
        %2840 = vmatprep.subr.mxu0 0.0
        %2841 = vmatpush2.msra.mxu0 0.0
        %2842 = vmatprep.subr.mxu0 0.0
        %2843 = vmatpush2.msra.mxu0 0.0
        %2844 = vmatprep.subr.mxu0 0.0
        %2845 = vmatpush2.msra.mxu0 0.0
        %2846 = vmatprep.subr.mxu0 0.0
        %2847 = vmatpush2.msra.mxu0 0.0
        %2848 = vmatprep.mubr.f32.mxu0 0.0
        %2849 = vmatmul.mubr.f32.gmra.mxu0 %v2782
        %v2850 = vpop.f32.mrf.mxu0
        %v2851 = vadd.f32 0.0, %v2850
        %v2852 = vpop.f32.mrf.mxu0
        %v2853 = vadd.f32 0.0, %v2852
        %2854 = vdwg.mxu0
        %2855 = vmatprep.subr.mxu0 0.0
        %2856 = vmatpush1.msra.mxu0 0.0
        %2857 = vmatprep.subr.mxu0 0.0
        %2858 = vmatpush1.msra.mxu0 0.0
        %2859 = vmatprep.subr.mxu0 0.0
        %2860 = vmatpush1.msra.mxu0 0.0
        %2861 = vmatprep.subr.mxu0 0.0
        %2862 = vmatpush1.msra.mxu0 0.0
        %2863 = vmatprep.subr.mxu0 0.0
        %2864 = vmatpush1.msra.mxu0 0.0
        %2865 = vmatprep.subr.mxu0 0.0
        %2866 = vmatpush1.msra.mxu0 0.0
        %2867 = vmatprep.subr.mxu0 0.0
        %2868 = vmatpush1.msra.mxu0 0.0
        %2869 = vmatprep.subr.mxu0 0.0
        %2870 = vmatpush1.msra.mxu0 0.0
        %2871 = vmatprep.subr.mxu0 %v2780
        %2872 = vmatpush1.msra.mxu0 %v2772
        %2873 = vmatprep.subr.mxu0 %v2779
        %2874 = vmatpush1.msra.mxu0 %v2771
        %2875 = vmatprep.subr.mxu0 %v2778
        %2876 = vmatpush1.msra.mxu0 %v2770
        %2877 = vmatprep.subr.mxu0 %v2777
        %2878 = vmatpush1.msra.mxu0 %v2769
        %2879 = vmatprep.subr.mxu0 %v2776
        %2880 = vmatpush1.msra.mxu0 %v2768
        %2881 = vmatprep.subr.mxu0 %v2775
        %2882 = vmatpush1.msra.mxu0 %v2767
        %2883 = vmatprep.subr.mxu0 %v2774
        %2884 = vmatpush1.msra.mxu0 %v2766
        %2885 = vmatprep.subr.mxu0 %v2773
        %2886 = vmatpush1.msra.mxu0 %v2765
        %2887 = vmatprep.subr.mxu0 0.0
        %2888 = vmatpush2.msra.mxu0 0.0
        %2889 = vmatprep.subr.mxu0 0.0
        %2890 = vmatpush2.msra.mxu0 0.0
        %2891 = vmatprep.subr.mxu0 0.0
        %2892 = vmatpush2.msra.mxu0 0.0
        %2893 = vmatprep.subr.mxu0 0.0
        %2894 = vmatpush2.msra.mxu0 0.0
        %2895 = vmatprep.subr.mxu0 0.0
        %2896 = vmatpush2.msra.mxu0 0.0
        %2897 = vmatprep.subr.mxu0 0.0
        %2898 = vmatpush2.msra.mxu0 0.0
        %2899 = vmatprep.subr.mxu0 0.0
        %2900 = vmatpush2.msra.mxu0 0.0
        %2901 = vmatprep.subr.mxu0 0.0
        %2902 = vmatpush2.msra.mxu0 0.0
        %2903 = vmatprep.subr.mxu0 0.0
        %2904 = vmatpush2.msra.mxu0 0.0
        %2905 = vmatprep.subr.mxu0 0.0
        %2906 = vmatpush2.msra.mxu0 0.0
        %2907 = vmatprep.subr.mxu0 0.0
        %2908 = vmatpush2.msra.mxu0 0.0
        %2909 = vmatprep.subr.mxu0 0.0
        %2910 = vmatpush2.msra.mxu0 0.0
        %2911 = vmatprep.subr.mxu0 0.0
        %2912 = vmatpush2.msra.mxu0 0.0
        %2913 = vmatprep.subr.mxu0 0.0
        %2914 = vmatpush2.msra.mxu0 0.0
        %2915 = vmatprep.subr.mxu0 0.0
        %2916 = vmatpush2.msra.mxu0 0.0
        %2917 = vmatprep.subr.mxu0 0.0
        %2918 = vmatpush2.msra.mxu0 0.0
        %2919 = vmatprep.mubr.f32.mxu0 0.0
        %2920 = vmatmul.mubr.f32.gmra.mxu0 %v2782
        %v2921 = vpop.f32.mrf.mxu0
        %v2922 = vadd.f32 0.0, %v2921
        %v2923 = vpop.f32.mrf.mxu0
        %v2924 = vadd.f32 0.0, %v2923
        %2925 = vdwg.mxu0
        %v2926 = vmul.f32 %v2851, 0.35355338
        %v2927 = vmul.f32 %v2853, 0.35355338
        %v2928 = vmul.f32 %v2922, 0.35355338
        %v2929 = vmul.f32 %v2924, 0.35355338
        %v2930 = vmax.f32 %v2926, %v2927
        %v2931 = vmax.f32 %v2930, %v2928
        %v2932 = vmax.f32 %v2931, %v2929
        %v2933 = vsub.f32 %v2926, %v2932
        %v2934 = vmul.f32 %v2933, 1.442695
        %v2935 = vpow.pop %v2934
        %v2936 = vsub.f32 %v2927, %v2932
        %v2937 = vmul.f32 %v2936, 1.442695
        %v2938 = vpow.pop %v2937
        %v2939 = vsub.f32 %v2928, %v2932
        %v2940 = vmul.f32 %v2939, 1.442695
        %v2941 = vpow.pop %v2940
        %v2942 = vsub.f32 %v2929, %v2932
        %v2943 = vmul.f32 %v2942, 1.442695
        %v2944 = vpow.pop %v2943
        %v2945 = vadd.f32 %v2935, %v2938
        %v2946 = vadd.f32 %v2945, %v2941
        %v2947 = vadd.f32 %v2946, %v2944
        %v2948 = vrcp.pop %v2947
        %v2949 = vmul.f32 %v2935, %v2948
        %v2950 = vlaneseq
        %v2951 = vshrl.u32 %v2950, 7
        %v2952 = vsub.s32 0, %v2951
        %v2953 = vrot.slane %v2949, %v2952
        %v2954 = vmul.f32 %v2953, %v2663
        %v2955 = vmul.f32 %v2953, %v2668
        %v2956 = vmul.f32 %v2953, %v2673
        %v2957 = vmul.f32 %v2953, %v2678
        %v2958 = vmul.f32 %v2953, %v2683
        %v2959 = vmul.f32 %v2953, %v2688
        %v2960 = vmul.f32 %v2953, %v2693
        %v2961 = vmul.f32 %v2953, %v2698
        %v2962 = vmul.f32 %v2938, %v2948
        %2963 = vrot.lane.b32.xlu0 %v2663, 32
        %v2964 = vpop.permute.xlu0 %2963
        %2965 = vrot.lane.b32.xlu0 %v2668, 32
        %v2966 = vpop.permute.xlu0 %2965
        %2967 = vrot.lane.b32.xlu0 %v2673, 32
        %v2968 = vpop.permute.xlu0 %2967
        %2969 = vrot.lane.b32.xlu0 %v2678, 32
        %v2970 = vpop.permute.xlu0 %2969
        %2971 = vrot.lane.b32.xlu0 %v2683, 32
        %v2972 = vpop.permute.xlu0 %2971
        %2973 = vrot.lane.b32.xlu0 %v2688, 32
        %v2974 = vpop.permute.xlu0 %2973
        %2975 = vrot.lane.b32.xlu0 %v2693, 32
        %v2976 = vpop.permute.xlu0 %2975
        %2977 = vrot.lane.b32.xlu0 %v2698, 32
        %v2978 = vpop.permute.xlu0 %2977
        %v2979 = vlaneseq
        %v2980 = vshrl.u32 %v2979, 7
        %v2981 = vsub.s32 0, %v2980
        %v2982 = vrot.slane %v2962, %v2981
        %v2983 = vmul.f32 %v2982, %v2964
        %v2984 = vmul.f32 %v2982, %v2966
        %v2985 = vmul.f32 %v2982, %v2968
        %v2986 = vmul.f32 %v2982, %v2970
        %v2987 = vmul.f32 %v2982, %v2972
        %v2988 = vmul.f32 %v2982, %v2974
        %v2989 = vmul.f32 %v2982, %v2976
        %v2990 = vmul.f32 %v2982, %v2978
        %v2991 = vadd.f32 %v2954, %v2983
        %v2992 = vadd.f32 %v2955, %v2984
        %v2993 = vadd.f32 %v2956, %v2985
        %v2994 = vadd.f32 %v2957, %v2986
        %v2995 = vadd.f32 %v2958, %v2987
        %v2996 = vadd.f32 %v2959, %v2988
        %v2997 = vadd.f32 %v2960, %v2989
        %v2998 = vadd.f32 %v2961, %v2990
        %v2999 = vmul.f32 %v2941, %v2948
        %3000 = vrot.lane.b32.xlu0 %v2663, 64
        %v3001 = vpop.permute.xlu0 %3000
        %3002 = vrot.lane.b32.xlu0 %v2668, 64
        %v3003 = vpop.permute.xlu0 %3002
        %3004 = vrot.lane.b32.xlu0 %v2673, 64
        %v3005 = vpop.permute.xlu0 %3004
        %3006 = vrot.lane.b32.xlu0 %v2678, 64
        %v3007 = vpop.permute.xlu0 %3006
        %3008 = vrot.lane.b32.xlu0 %v2683, 64
        %v3009 = vpop.permute.xlu0 %3008
        %3010 = vrot.lane.b32.xlu0 %v2688, 64
        %v3011 = vpop.permute.xlu0 %3010
        %3012 = vrot.lane.b32.xlu0 %v2693, 64
        %v3013 = vpop.permute.xlu0 %3012
        %3014 = vrot.lane.b32.xlu0 %v2698, 64
        %v3015 = vpop.permute.xlu0 %3014
        %v3016 = vlaneseq
        %v3017 = vshrl.u32 %v3016, 7
        %v3018 = vsub.s32 0, %v3017
        %v3019 = vrot.slane %v2999, %v3018
        %v3020 = vmul.f32 %v3019, %v3001
        %v3021 = vmul.f32 %v3019, %v3003
        %v3022 = vmul.f32 %v3019, %v3005
        %v3023 = vmul.f32 %v3019, %v3007
        %v3024 = vmul.f32 %v3019, %v3009
        %v3025 = vmul.f32 %v3019, %v3011
        %v3026 = vmul.f32 %v3019, %v3013
        %v3027 = vmul.f32 %v3019, %v3015
        %v3028 = vadd.f32 %v2991, %v3020
        %v3029 = vadd.f32 %v2992, %v3021
        %v3030 = vadd.f32 %v2993, %v3022
        %v3031 = vadd.f32 %v2994, %v3023
        %v3032 = vadd.f32 %v2995, %v3024
        %v3033 = vadd.f32 %v2996, %v3025
        %v3034 = vadd.f32 %v2997, %v3026
        %v3035 = vadd.f32 %v2998, %v3027
        %v3036 = vmul.f32 %v2944, %v2948
        %3037 = vrot.lane.b32.xlu0 %v2663, 96
        %v3038 = vpop.permute.xlu0 %3037
        %3039 = vrot.lane.b32.xlu0 %v2668, 96
        %v3040 = vpop.permute.xlu0 %3039
        %3041 = vrot.lane.b32.xlu0 %v2673, 96
        %v3042 = vpop.permute.xlu0 %3041
        %3043 = vrot.lane.b32.xlu0 %v2678, 96
        %v3044 = vpop.permute.xlu0 %3043
        %3045 = vrot.lane.b32.xlu0 %v2683, 96
        %v3046 = vpop.permute.xlu0 %3045
        %3047 = vrot.lane.b32.xlu0 %v2688, 96
        %v3048 = vpop.permute.xlu0 %3047
        %3049 = vrot.lane.b32.xlu0 %v2693, 96
        %v3050 = vpop.permute.xlu0 %3049
        %3051 = vrot.lane.b32.xlu0 %v2698, 96
        %v3052 = vpop.permute.xlu0 %3051
        %v3053 = vlaneseq
        %v3054 = vshrl.u32 %v3053, 7
        %v3055 = vsub.s32 0, %v3054
        %v3056 = vrot.slane %v3036, %v3055
        %v3057 = vmul.f32 %v3056, %v3038
        %v3058 = vmul.f32 %v3056, %v3040
        %v3059 = vmul.f32 %v3056, %v3042
        %v3060 = vmul.f32 %v3056, %v3044
        %v3061 = vmul.f32 %v3056, %v3046
        %v3062 = vmul.f32 %v3056, %v3048
        %v3063 = vmul.f32 %v3056, %v3050
        %v3064 = vmul.f32 %v3056, %v3052
        %v3065 = vadd.f32 %v3028, %v3057
        %v3066 = vadd.f32 %v3029, %v3058
        %v3067 = vadd.f32 %v3030, %v3059
        %v3068 = vadd.f32 %v3031, %v3060
        %v3069 = vadd.f32 %v3032, %v3061
        %v3070 = vadd.f32 %v3033, %v3062
        %v3071 = vadd.f32 %v3034, %v3063
        %v3072 = vadd.f32 %v3035, %v3064
        %3073 = vmatprep.subr.mxu0 0.0
        %3074 = vmatpush1.msra.mxu0 0.0
        %3075 = vmatprep.subr.mxu0 0.0
        %3076 = vmatpush1.msra.mxu0 0.0
        %3077 = vmatprep.subr.mxu0 0.0
        %3078 = vmatpush1.msra.mxu0 0.0
        %3079 = vmatprep.subr.mxu0 0.0
        %3080 = vmatpush1.msra.mxu0 0.0
        %3081 = vmatprep.subr.mxu0 0.0
        %3082 = vmatpush1.msra.mxu0 0.0
        %3083 = vmatprep.subr.mxu0 0.0
        %3084 = vmatpush1.msra.mxu0 0.0
        %3085 = vmatprep.subr.mxu0 0.0
        %3086 = vmatpush1.msra.mxu0 0.0
        %3087 = vmatprep.subr.mxu0 0.0
        %3088 = vmatpush1.msra.mxu0 0.0
        %3089 = vmatprep.subr.mxu0 0.0
        %3090 = vmatpush1.msra.mxu0 %v3072
        %3091 = vmatprep.subr.mxu0 0.0
        %3092 = vmatpush1.msra.mxu0 %v3071
        %3093 = vmatprep.subr.mxu0 0.0
        %3094 = vmatpush1.msra.mxu0 %v3070
        %3095 = vmatprep.subr.mxu0 0.0
        %3096 = vmatpush1.msra.mxu0 %v3069
        %3097 = vmatprep.subr.mxu0 0.0
        %3098 = vmatpush1.msra.mxu0 %v3068
        %3099 = vmatprep.subr.mxu0 0.0
        %3100 = vmatpush1.msra.mxu0 %v3067
        %3101 = vmatprep.subr.mxu0 0.0
        %3102 = vmatpush1.msra.mxu0 %v3066
        %3103 = vmatprep.subr.mxu0 0.0
        %3104 = vmatpush1.msra.mxu0 %v3065
        %3105 = vmatprep.subr.mxu0 0.0
        %3106 = vmatpush2.msra.mxu0 0.0
        %3107 = vmatprep.subr.mxu0 0.0
        %3108 = vmatpush2.msra.mxu0 0.0
        %3109 = vmatprep.subr.mxu0 0.0
        %3110 = vmatpush2.msra.mxu0 0.0
        %3111 = vmatprep.subr.mxu0 0.0
        %3112 = vmatpush2.msra.mxu0 0.0
        %3113 = vmatprep.subr.mxu0 0.0
        %3114 = vmatpush2.msra.mxu0 0.0
        %3115 = vmatprep.subr.mxu0 0.0
        %3116 = vmatpush2.msra.mxu0 0.0
        %3117 = vmatprep.subr.mxu0 0.0
        %3118 = vmatpush2.msra.mxu0 0.0
        %3119 = vmatprep.subr.mxu0 0.0
        %3120 = vmatpush2.msra.mxu0 0.0
        %3121 = vmatprep.subr.mxu0 0.0
        %3122 = vmatpush2.msra.mxu0 0.0
        %3123 = vmatprep.subr.mxu0 0.0
        %3124 = vmatpush2.msra.mxu0 0.0
        %3125 = vmatprep.subr.mxu0 0.0
        %3126 = vmatpush2.msra.mxu0 0.0
        %3127 = vmatprep.subr.mxu0 0.0
        %3128 = vmatpush2.msra.mxu0 0.0
        %3129 = vmatprep.subr.mxu0 0.0
        %3130 = vmatpush2.msra.mxu0 0.0
        %3131 = vmatprep.subr.mxu0 0.0
        %3132 = vmatpush2.msra.mxu0 0.0
        %3133 = vmatprep.subr.mxu0 0.0
        %3134 = vmatpush2.msra.mxu0 0.0
        %3135 = vmatprep.subr.mxu0 0.0
        %3136 = vmatpush2.msra.mxu0 0.0
        %3137 = vmatprep.mubr.f32.mxu0 0.0
        %3138 = vmatmul.mubr.f32.gmra.mxu0 %v855
        %v3139 = vpop.f32.mrf.mxu0
        %v3140 = vadd.f32 0.0, %v3139
        %v3141 = vpop.f32.mrf.mxu0
        %3142 = vmatprep.mubr.f32.mxu0 0.0
        %3143 = vmatmul.mubr.f32.gmra.mxu0 %v858
        %v3144 = vpop.f32.mrf.mxu0
        %v3145 = vadd.f32 0.0, %v3144
        %v3146 = vpop.f32.mrf.mxu0
        %3147 = vmatprep.mubr.f32.mxu0 0.0
        %3148 = vmatmul.mubr.f32.gmra.mxu0 %v861
        %v3149 = vpop.f32.mrf.mxu0
        %v3150 = vadd.f32 0.0, %v3149
        %v3151 = vpop.f32.mrf.mxu0
        %3152 = vmatprep.mubr.f32.mxu0 0.0
        %3153 = vmatmul.mubr.f32.gmra.mxu0 %v864
        %v3154 = vpop.f32.mrf.mxu0
        %v3155 = vadd.f32 0.0, %v3154
        %v3156 = vpop.f32.mrf.mxu0
        %3157 = vmatprep.mubr.f32.mxu0 0.0
        %3158 = vmatmul.mubr.f32.gmra.mxu0 %v867
        %v3159 = vpop.f32.mrf.mxu0
        %v3160 = vadd.f32 0.0, %v3159
        %v3161 = vpop.f32.mrf.mxu0
        %3162 = vmatprep.mubr.f32.mxu0 0.0
        %3163 = vmatmul.mubr.f32.gmra.mxu0 %v870
        %v3164 = vpop.f32.mrf.mxu0
        %v3165 = vadd.f32 0.0, %v3164
        %v3166 = vpop.f32.mrf.mxu0
        %3167 = vmatprep.mubr.f32.mxu0 0.0
        %3168 = vmatmul.mubr.f32.gmra.mxu0 %v873
        %v3169 = vpop.f32.mrf.mxu0
        %v3170 = vadd.f32 0.0, %v3169
        %v3171 = vpop.f32.mrf.mxu0
        %3172 = vmatprep.mubr.f32.mxu0 0.0
        %3173 = vmatmul.mubr.f32.gmra.mxu0 %v876
        %v3174 = vpop.f32.mrf.mxu0
        %v3175 = vadd.f32 0.0, %v3174
        %v3176 = vpop.f32.mrf.mxu0
        %3177 = vdwg.mxu0
        %3178 = vmatprep.subr.mxu0 0.0
        %3179 = vmatpush1.msra.mxu0 0.0
        %3180 = vmatprep.subr.mxu0 0.0
        %3181 = vmatpush1.msra.mxu0 0.0
        %3182 = vmatprep.subr.mxu0 0.0
        %3183 = vmatpush1.msra.mxu0 0.0
        %3184 = vmatprep.subr.mxu0 0.0
        %3185 = vmatpush1.msra.mxu0 0.0
        %3186 = vmatprep.subr.mxu0 0.0
        %3187 = vmatpush1.msra.mxu0 0.0
        %3188 = vmatprep.subr.mxu0 0.0
        %3189 = vmatpush1.msra.mxu0 0.0
        %3190 = vmatprep.subr.mxu0 0.0
        %3191 = vmatpush1.msra.mxu0 0.0
        %3192 = vmatprep.subr.mxu0 0.0
        %3193 = vmatpush1.msra.mxu0 0.0
        %3194 = vmatprep.subr.mxu0 0.0
        %3195 = vmatpush1.msra.mxu0 %v3072
        %3196 = vmatprep.subr.mxu0 0.0
        %3197 = vmatpush1.msra.mxu0 %v3071
        %3198 = vmatprep.subr.mxu0 0.0
        %3199 = vmatpush1.msra.mxu0 %v3070
        %3200 = vmatprep.subr.mxu0 0.0
        %3201 = vmatpush1.msra.mxu0 %v3069
        %3202 = vmatprep.subr.mxu0 0.0
        %3203 = vmatpush1.msra.mxu0 %v3068
        %3204 = vmatprep.subr.mxu0 0.0
        %3205 = vmatpush1.msra.mxu0 %v3067
        %3206 = vmatprep.subr.mxu0 0.0
        %3207 = vmatpush1.msra.mxu0 %v3066
        %3208 = vmatprep.subr.mxu0 0.0
        %3209 = vmatpush1.msra.mxu0 %v3065
        %3210 = vmatprep.subr.mxu0 0.0
        %3211 = vmatpush2.msra.mxu0 0.0
        %3212 = vmatprep.subr.mxu0 0.0
        %3213 = vmatpush2.msra.mxu0 0.0
        %3214 = vmatprep.subr.mxu0 0.0
        %3215 = vmatpush2.msra.mxu0 0.0
        %3216 = vmatprep.subr.mxu0 0.0
        %3217 = vmatpush2.msra.mxu0 0.0
        %3218 = vmatprep.subr.mxu0 0.0
        %3219 = vmatpush2.msra.mxu0 0.0
        %3220 = vmatprep.subr.mxu0 0.0
        %3221 = vmatpush2.msra.mxu0 0.0
        %3222 = vmatprep.subr.mxu0 0.0
        %3223 = vmatpush2.msra.mxu0 0.0
        %3224 = vmatprep.subr.mxu0 0.0
        %3225 = vmatpush2.msra.mxu0 0.0
        %3226 = vmatprep.subr.mxu0 0.0
        %3227 = vmatpush2.msra.mxu0 0.0
        %3228 = vmatprep.subr.mxu0 0.0
        %3229 = vmatpush2.msra.mxu0 0.0
        %3230 = vmatprep.subr.mxu0 0.0
        %3231 = vmatpush2.msra.mxu0 0.0
        %3232 = vmatprep.subr.mxu0 0.0
        %3233 = vmatpush2.msra.mxu0 0.0
        %3234 = vmatprep.subr.mxu0 0.0
        %3235 = vmatpush2.msra.mxu0 0.0
        %3236 = vmatprep.subr.mxu0 0.0
        %3237 = vmatpush2.msra.mxu0 0.0
        %3238 = vmatprep.subr.mxu0 0.0
        %3239 = vmatpush2.msra.mxu0 0.0
        %3240 = vmatprep.subr.mxu0 0.0
        %3241 = vmatpush2.msra.mxu0 0.0
        %3242 = vmatprep.mubr.f32.mxu0 0.0
        %3243 = vmatmul.mubr.f32.gmra.mxu0 %v993
        %v3244 = vpop.f32.mrf.mxu0
        %v3245 = vadd.f32 0.0, %v3244
        %v3246 = vpop.f32.mrf.mxu0
        %3247 = vmatprep.mubr.f32.mxu0 0.0
        %3248 = vmatmul.mubr.f32.gmra.mxu0 %v996
        %v3249 = vpop.f32.mrf.mxu0
        %v3250 = vadd.f32 0.0, %v3249
        %v3251 = vpop.f32.mrf.mxu0
        %3252 = vmatprep.mubr.f32.mxu0 0.0
        %3253 = vmatmul.mubr.f32.gmra.mxu0 %v999
        %v3254 = vpop.f32.mrf.mxu0
        %v3255 = vadd.f32 0.0, %v3254
        %v3256 = vpop.f32.mrf.mxu0
        %3257 = vmatprep.mubr.f32.mxu0 0.0
        %3258 = vmatmul.mubr.f32.gmra.mxu0 %v1002
        %v3259 = vpop.f32.mrf.mxu0
        %v3260 = vadd.f32 0.0, %v3259
        %v3261 = vpop.f32.mrf.mxu0
        %3262 = vmatprep.mubr.f32.mxu0 0.0
        %3263 = vmatmul.mubr.f32.gmra.mxu0 %v1005
        %v3264 = vpop.f32.mrf.mxu0
        %v3265 = vadd.f32 0.0, %v3264
        %v3266 = vpop.f32.mrf.mxu0
        %3267 = vmatprep.mubr.f32.mxu0 0.0
        %3268 = vmatmul.mubr.f32.gmra.mxu0 %v1008
        %v3269 = vpop.f32.mrf.mxu0
        %v3270 = vadd.f32 0.0, %v3269
        %v3271 = vpop.f32.mrf.mxu0
        %3272 = vmatprep.mubr.f32.mxu0 0.0
        %3273 = vmatmul.mubr.f32.gmra.mxu0 %v1011
        %v3274 = vpop.f32.mrf.mxu0
        %v3275 = vadd.f32 0.0, %v3274
        %v3276 = vpop.f32.mrf.mxu0
        %3277 = vmatprep.mubr.f32.mxu0 0.0
        %3278 = vmatmul.mubr.f32.gmra.mxu0 %v1014
        %v3279 = vpop.f32.mrf.mxu0
        %v3280 = vadd.f32 0.0, %v3279
        %v3281 = vpop.f32.mrf.mxu0
        %3282 = vdwg.mxu0
        %3283 = vmatprep.subr.mxu0 0.0
        %3284 = vmatpush1.msra.mxu0 0.0
        %3285 = vmatprep.subr.mxu0 0.0
        %3286 = vmatpush1.msra.mxu0 0.0
        %3287 = vmatprep.subr.mxu0 0.0
        %3288 = vmatpush1.msra.mxu0 0.0
        %3289 = vmatprep.subr.mxu0 0.0
        %3290 = vmatpush1.msra.mxu0 0.0
        %3291 = vmatprep.subr.mxu0 0.0
        %3292 = vmatpush1.msra.mxu0 0.0
        %3293 = vmatprep.subr.mxu0 0.0
        %3294 = vmatpush1.msra.mxu0 0.0
        %3295 = vmatprep.subr.mxu0 0.0
        %3296 = vmatpush1.msra.mxu0 0.0
        %3297 = vmatprep.subr.mxu0 0.0
        %3298 = vmatpush1.msra.mxu0 0.0
        %3299 = vmatprep.subr.mxu0 0.0
        %3300 = vmatpush1.msra.mxu0 %v3072
        %3301 = vmatprep.subr.mxu0 0.0
        %3302 = vmatpush1.msra.mxu0 %v3071
        %3303 = vmatprep.subr.mxu0 0.0
        %3304 = vmatpush1.msra.mxu0 %v3070
        %3305 = vmatprep.subr.mxu0 0.0
        %3306 = vmatpush1.msra.mxu0 %v3069
        %3307 = vmatprep.subr.mxu0 0.0
        %3308 = vmatpush1.msra.mxu0 %v3068
        %3309 = vmatprep.subr.mxu0 0.0
        %3310 = vmatpush1.msra.mxu0 %v3067
        %3311 = vmatprep.subr.mxu0 0.0
        %3312 = vmatpush1.msra.mxu0 %v3066
        %3313 = vmatprep.subr.mxu0 0.0
        %3314 = vmatpush1.msra.mxu0 %v3065
        %3315 = vmatprep.subr.mxu0 0.0
        %3316 = vmatpush2.msra.mxu0 0.0
        %3317 = vmatprep.subr.mxu0 0.0
        %3318 = vmatpush2.msra.mxu0 0.0
        %3319 = vmatprep.subr.mxu0 0.0
        %3320 = vmatpush2.msra.mxu0 0.0
        %3321 = vmatprep.subr.mxu0 0.0
        %3322 = vmatpush2.msra.mxu0 0.0
        %3323 = vmatprep.subr.mxu0 0.0
        %3324 = vmatpush2.msra.mxu0 0.0
        %3325 = vmatprep.subr.mxu0 0.0
        %3326 = vmatpush2.msra.mxu0 0.0
        %3327 = vmatprep.subr.mxu0 0.0
        %3328 = vmatpush2.msra.mxu0 0.0
        %3329 = vmatprep.subr.mxu0 0.0
        %3330 = vmatpush2.msra.mxu0 0.0
        %3331 = vmatprep.subr.mxu0 0.0
        %3332 = vmatpush2.msra.mxu0 0.0
        %3333 = vmatprep.subr.mxu0 0.0
        %3334 = vmatpush2.msra.mxu0 0.0
        %3335 = vmatprep.subr.mxu0 0.0
        %3336 = vmatpush2.msra.mxu0 0.0
        %3337 = vmatprep.subr.mxu0 0.0
        %3338 = vmatpush2.msra.mxu0 0.0
        %3339 = vmatprep.subr.mxu0 0.0
        %3340 = vmatpush2.msra.mxu0 0.0
        %3341 = vmatprep.subr.mxu0 0.0
        %3342 = vmatpush2.msra.mxu0 0.0
        %3343 = vmatprep.subr.mxu0 0.0
        %3344 = vmatpush2.msra.mxu0 0.0
        %3345 = vmatprep.subr.mxu0 0.0
        %3346 = vmatpush2.msra.mxu0 0.0
        %3347 = vmatprep.mubr.f32.mxu0 0.0
        %3348 = vmatmul.mubr.f32.gmra.mxu0 %v1131
        %v3349 = vpop.f32.mrf.mxu0
        %v3350 = vadd.f32 0.0, %v3349
        %v3351 = vpop.f32.mrf.mxu0
        %3352 = vmatprep.mubr.f32.mxu0 0.0
        %3353 = vmatmul.mubr.f32.gmra.mxu0 %v1134
        %v3354 = vpop.f32.mrf.mxu0
        %v3355 = vadd.f32 0.0, %v3354
        %v3356 = vpop.f32.mrf.mxu0
        %3357 = vmatprep.mubr.f32.mxu0 0.0
        %3358 = vmatmul.mubr.f32.gmra.mxu0 %v1137
        %v3359 = vpop.f32.mrf.mxu0
        %v3360 = vadd.f32 0.0, %v3359
        %v3361 = vpop.f32.mrf.mxu0
        %3362 = vmatprep.mubr.f32.mxu0 0.0
        %3363 = vmatmul.mubr.f32.gmra.mxu0 %v1140
        %v3364 = vpop.f32.mrf.mxu0
        %v3365 = vadd.f32 0.0, %v3364
        %v3366 = vpop.f32.mrf.mxu0
        %3367 = vmatprep.mubr.f32.mxu0 0.0
        %3368 = vmatmul.mubr.f32.gmra.mxu0 %v1143
        %v3369 = vpop.f32.mrf.mxu0
        %v3370 = vadd.f32 0.0, %v3369
        %v3371 = vpop.f32.mrf.mxu0
        %3372 = vmatprep.mubr.f32.mxu0 0.0
        %3373 = vmatmul.mubr.f32.gmra.mxu0 %v1146
        %v3374 = vpop.f32.mrf.mxu0
        %v3375 = vadd.f32 0.0, %v3374
        %v3376 = vpop.f32.mrf.mxu0
        %3377 = vmatprep.mubr.f32.mxu0 0.0
        %3378 = vmatmul.mubr.f32.gmra.mxu0 %v1149
        %v3379 = vpop.f32.mrf.mxu0
        %v3380 = vadd.f32 0.0, %v3379
        %v3381 = vpop.f32.mrf.mxu0
        %3382 = vmatprep.mubr.f32.mxu0 0.0
        %3383 = vmatmul.mubr.f32.gmra.mxu0 %v1152
        %v3384 = vpop.f32.mrf.mxu0
        %v3385 = vadd.f32 0.0, %v3384
        %v3386 = vpop.f32.mrf.mxu0
        %3387 = vdwg.mxu0
        %3388 = vmatprep.subr.mxu0 0.0
        %3389 = vmatpush1.msra.mxu0 0.0
        %3390 = vmatprep.subr.mxu0 0.0
        %3391 = vmatpush1.msra.mxu0 0.0
        %3392 = vmatprep.subr.mxu0 0.0
        %3393 = vmatpush1.msra.mxu0 0.0
        %3394 = vmatprep.subr.mxu0 0.0
        %3395 = vmatpush1.msra.mxu0 0.0
        %3396 = vmatprep.subr.mxu0 0.0
        %3397 = vmatpush1.msra.mxu0 0.0
        %3398 = vmatprep.subr.mxu0 0.0
        %3399 = vmatpush1.msra.mxu0 0.0
        %3400 = vmatprep.subr.mxu0 0.0
        %3401 = vmatpush1.msra.mxu0 0.0
        %3402 = vmatprep.subr.mxu0 0.0
        %3403 = vmatpush1.msra.mxu0 0.0
        %3404 = vmatprep.subr.mxu0 0.0
        %3405 = vmatpush1.msra.mxu0 %v3072
        %3406 = vmatprep.subr.mxu0 0.0
        %3407 = vmatpush1.msra.mxu0 %v3071
        %3408 = vmatprep.subr.mxu0 0.0
        %3409 = vmatpush1.msra.mxu0 %v3070
        %3410 = vmatprep.subr.mxu0 0.0
        %3411 = vmatpush1.msra.mxu0 %v3069
        %3412 = vmatprep.subr.mxu0 0.0
        %3413 = vmatpush1.msra.mxu0 %v3068
        %3414 = vmatprep.subr.mxu0 0.0
        %3415 = vmatpush1.msra.mxu0 %v3067
        %3416 = vmatprep.subr.mxu0 0.0
        %3417 = vmatpush1.msra.mxu0 %v3066
        %3418 = vmatprep.subr.mxu0 0.0
        %3419 = vmatpush1.msra.mxu0 %v3065
        %3420 = vmatprep.subr.mxu0 0.0
        %3421 = vmatpush2.msra.mxu0 0.0
        %3422 = vmatprep.subr.mxu0 0.0
        %3423 = vmatpush2.msra.mxu0 0.0
        %3424 = vmatprep.subr.mxu0 0.0
        %3425 = vmatpush2.msra.mxu0 0.0
        %3426 = vmatprep.subr.mxu0 0.0
        %3427 = vmatpush2.msra.mxu0 0.0
        %3428 = vmatprep.subr.mxu0 0.0
        %3429 = vmatpush2.msra.mxu0 0.0
        %3430 = vmatprep.subr.mxu0 0.0
        %3431 = vmatpush2.msra.mxu0 0.0
        %3432 = vmatprep.subr.mxu0 0.0
        %3433 = vmatpush2.msra.mxu0 0.0
        %3434 = vmatprep.subr.mxu0 0.0
        %3435 = vmatpush2.msra.mxu0 0.0
        %3436 = vmatprep.subr.mxu0 0.0
        %3437 = vmatpush2.msra.mxu0 0.0
        %3438 = vmatprep.subr.mxu0 0.0
        %3439 = vmatpush2.msra.mxu0 0.0
        %3440 = vmatprep.subr.mxu0 0.0
        %3441 = vmatpush2.msra.mxu0 0.0
        %3442 = vmatprep.subr.mxu0 0.0
        %3443 = vmatpush2.msra.mxu0 0.0
        %3444 = vmatprep.subr.mxu0 0.0
        %3445 = vmatpush2.msra.mxu0 0.0
        %3446 = vmatprep.subr.mxu0 0.0
        %3447 = vmatpush2.msra.mxu0 0.0
        %3448 = vmatprep.subr.mxu0 0.0
        %3449 = vmatpush2.msra.mxu0 0.0
        %3450 = vmatprep.subr.mxu0 0.0
        %3451 = vmatpush2.msra.mxu0 0.0
        %3452 = vmatprep.mubr.f32.mxu0 0.0
        %3453 = vmatmul.mubr.f32.gmra.mxu0 %v1269
        %v3454 = vpop.f32.mrf.mxu0
        %v3455 = vadd.f32 0.0, %v3454
        %v3456 = vpop.f32.mrf.mxu0
        %3457 = vmatprep.mubr.f32.mxu0 0.0
        %3458 = vmatmul.mubr.f32.gmra.mxu0 %v1272
        %v3459 = vpop.f32.mrf.mxu0
        %v3460 = vadd.f32 0.0, %v3459
        %v3461 = vpop.f32.mrf.mxu0
        %3462 = vmatprep.mubr.f32.mxu0 0.0
        %3463 = vmatmul.mubr.f32.gmra.mxu0 %v1275
        %v3464 = vpop.f32.mrf.mxu0
        %v3465 = vadd.f32 0.0, %v3464
        %v3466 = vpop.f32.mrf.mxu0
        %3467 = vmatprep.mubr.f32.mxu0 0.0
        %3468 = vmatmul.mubr.f32.gmra.mxu0 %v1278
        %v3469 = vpop.f32.mrf.mxu0
        %v3470 = vadd.f32 0.0, %v3469
        %v3471 = vpop.f32.mrf.mxu0
        %3472 = vmatprep.mubr.f32.mxu0 0.0
        %3473 = vmatmul.mubr.f32.gmra.mxu0 %v1281
        %v3474 = vpop.f32.mrf.mxu0
        %v3475 = vadd.f32 0.0, %v3474
        %v3476 = vpop.f32.mrf.mxu0
        %3477 = vmatprep.mubr.f32.mxu0 0.0
        %3478 = vmatmul.mubr.f32.gmra.mxu0 %v1284
        %v3479 = vpop.f32.mrf.mxu0
        %v3480 = vadd.f32 0.0, %v3479
        %v3481 = vpop.f32.mrf.mxu0
        %3482 = vmatprep.mubr.f32.mxu0 0.0
        %3483 = vmatmul.mubr.f32.gmra.mxu0 %v1287
        %v3484 = vpop.f32.mrf.mxu0
        %v3485 = vadd.f32 0.0, %v3484
        %v3486 = vpop.f32.mrf.mxu0
        %3487 = vmatprep.mubr.f32.mxu0 0.0
        %3488 = vmatmul.mubr.f32.gmra.mxu0 %v1290
        %v3489 = vpop.f32.mrf.mxu0
        %v3490 = vadd.f32 0.0, %v3489
        %v3491 = vpop.f32.mrf.mxu0
        %3492 = vdwg.mxu0
        %3493 = vmatprep.subr.mxu0 0.0
        %3494 = vmatpush1.msra.mxu0 0.0
        %3495 = vmatprep.subr.mxu0 0.0
        %3496 = vmatpush1.msra.mxu0 0.0
        %3497 = vmatprep.subr.mxu0 0.0
        %3498 = vmatpush1.msra.mxu0 0.0
        %3499 = vmatprep.subr.mxu0 0.0
        %3500 = vmatpush1.msra.mxu0 0.0
        %3501 = vmatprep.subr.mxu0 0.0
        %3502 = vmatpush1.msra.mxu0 0.0
        %3503 = vmatprep.subr.mxu0 0.0
        %3504 = vmatpush1.msra.mxu0 0.0
        %3505 = vmatprep.subr.mxu0 0.0
        %3506 = vmatpush1.msra.mxu0 0.0
        %3507 = vmatprep.subr.mxu0 0.0
        %3508 = vmatpush1.msra.mxu0 0.0
        %3509 = vmatprep.subr.mxu0 0.0
        %3510 = vmatpush1.msra.mxu0 %v3072
        %3511 = vmatprep.subr.mxu0 0.0
        %3512 = vmatpush1.msra.mxu0 %v3071
        %3513 = vmatprep.subr.mxu0 0.0
        %3514 = vmatpush1.msra.mxu0 %v3070
        %3515 = vmatprep.subr.mxu0 0.0
        %3516 = vmatpush1.msra.mxu0 %v3069
        %3517 = vmatprep.subr.mxu0 0.0
        %3518 = vmatpush1.msra.mxu0 %v3068
        %3519 = vmatprep.subr.mxu0 0.0
        %3520 = vmatpush1.msra.mxu0 %v3067
        %3521 = vmatprep.subr.mxu0 0.0
        %3522 = vmatpush1.msra.mxu0 %v3066
        %3523 = vmatprep.subr.mxu0 0.0
        %3524 = vmatpush1.msra.mxu0 %v3065
        %3525 = vmatprep.subr.mxu0 0.0
        %3526 = vmatpush2.msra.mxu0 0.0
        %3527 = vmatprep.subr.mxu0 0.0
        %3528 = vmatpush2.msra.mxu0 0.0
        %3529 = vmatprep.subr.mxu0 0.0
        %3530 = vmatpush2.msra.mxu0 0.0
        %3531 = vmatprep.subr.mxu0 0.0
        %3532 = vmatpush2.msra.mxu0 0.0
        %3533 = vmatprep.subr.mxu0 0.0
        %3534 = vmatpush2.msra.mxu0 0.0
        %3535 = vmatprep.subr.mxu0 0.0
        %3536 = vmatpush2.msra.mxu0 0.0
        %3537 = vmatprep.subr.mxu0 0.0
        %3538 = vmatpush2.msra.mxu0 0.0
        %3539 = vmatprep.subr.mxu0 0.0
        %3540 = vmatpush2.msra.mxu0 0.0
        %3541 = vmatprep.subr.mxu0 0.0
        %3542 = vmatpush2.msra.mxu0 0.0
        %3543 = vmatprep.subr.mxu0 0.0
        %3544 = vmatpush2.msra.mxu0 0.0
        %3545 = vmatprep.subr.mxu0 0.0
        %3546 = vmatpush2.msra.mxu0 0.0
        %3547 = vmatprep.subr.mxu0 0.0
        %3548 = vmatpush2.msra.mxu0 0.0
        %3549 = vmatprep.subr.mxu0 0.0
        %3550 = vmatpush2.msra.mxu0 0.0
        %3551 = vmatprep.subr.mxu0 0.0
        %3552 = vmatpush2.msra.mxu0 0.0
        %3553 = vmatprep.subr.mxu0 0.0
        %3554 = vmatpush2.msra.mxu0 0.0
        %3555 = vmatprep.subr.mxu0 0.0
        %3556 = vmatpush2.msra.mxu0 0.0
        %3557 = vmatprep.mubr.f32.mxu0 0.0
        %3558 = vmatmul.mubr.f32.gmra.mxu0 %v1407
        %v3559 = vpop.f32.mrf.mxu0
        %v3560 = vadd.f32 0.0, %v3559
        %v3561 = vpop.f32.mrf.mxu0
        %3562 = vmatprep.mubr.f32.mxu0 0.0
        %3563 = vmatmul.mubr.f32.gmra.mxu0 %v1410
        %v3564 = vpop.f32.mrf.mxu0
        %v3565 = vadd.f32 0.0, %v3564
        %v3566 = vpop.f32.mrf.mxu0
        %3567 = vmatprep.mubr.f32.mxu0 0.0
        %3568 = vmatmul.mubr.f32.gmra.mxu0 %v1413
        %v3569 = vpop.f32.mrf.mxu0
        %v3570 = vadd.f32 0.0, %v3569
        %v3571 = vpop.f32.mrf.mxu0
        %3572 = vmatprep.mubr.f32.mxu0 0.0
        %3573 = vmatmul.mubr.f32.gmra.mxu0 %v1416
        %v3574 = vpop.f32.mrf.mxu0
        %v3575 = vadd.f32 0.0, %v3574
        %v3576 = vpop.f32.mrf.mxu0
        %3577 = vmatprep.mubr.f32.mxu0 0.0
        %3578 = vmatmul.mubr.f32.gmra.mxu0 %v1419
        %v3579 = vpop.f32.mrf.mxu0
        %v3580 = vadd.f32 0.0, %v3579
        %v3581 = vpop.f32.mrf.mxu0
        %3582 = vmatprep.mubr.f32.mxu0 0.0
        %3583 = vmatmul.mubr.f32.gmra.mxu0 %v1422
        %v3584 = vpop.f32.mrf.mxu0
        %v3585 = vadd.f32 0.0, %v3584
        %v3586 = vpop.f32.mrf.mxu0
        %3587 = vmatprep.mubr.f32.mxu0 0.0
        %3588 = vmatmul.mubr.f32.gmra.mxu0 %v1425
        %v3589 = vpop.f32.mrf.mxu0
        %v3590 = vadd.f32 0.0, %v3589
        %v3591 = vpop.f32.mrf.mxu0
        %3592 = vmatprep.mubr.f32.mxu0 0.0
        %3593 = vmatmul.mubr.f32.gmra.mxu0 %v1428
        %v3594 = vpop.f32.mrf.mxu0
        %v3595 = vadd.f32 0.0, %v3594
        %v3596 = vpop.f32.mrf.mxu0
        %3597 = vdwg.mxu0
        %3598 = vmatprep.subr.mxu0 0.0
        %3599 = vmatpush1.msra.mxu0 0.0
        %3600 = vmatprep.subr.mxu0 0.0
        %3601 = vmatpush1.msra.mxu0 0.0
        %3602 = vmatprep.subr.mxu0 0.0
        %3603 = vmatpush1.msra.mxu0 0.0
        %3604 = vmatprep.subr.mxu0 0.0
        %3605 = vmatpush1.msra.mxu0 0.0
        %3606 = vmatprep.subr.mxu0 0.0
        %3607 = vmatpush1.msra.mxu0 0.0
        %3608 = vmatprep.subr.mxu0 0.0
        %3609 = vmatpush1.msra.mxu0 0.0
        %3610 = vmatprep.subr.mxu0 0.0
        %3611 = vmatpush1.msra.mxu0 0.0
        %3612 = vmatprep.subr.mxu0 0.0
        %3613 = vmatpush1.msra.mxu0 0.0
        %3614 = vmatprep.subr.mxu0 0.0
        %3615 = vmatpush1.msra.mxu0 %v3072
        %3616 = vmatprep.subr.mxu0 0.0
        %3617 = vmatpush1.msra.mxu0 %v3071
        %3618 = vmatprep.subr.mxu0 0.0
        %3619 = vmatpush1.msra.mxu0 %v3070
        %3620 = vmatprep.subr.mxu0 0.0
        %3621 = vmatpush1.msra.mxu0 %v3069
        %3622 = vmatprep.subr.mxu0 0.0
        %3623 = vmatpush1.msra.mxu0 %v3068
        %3624 = vmatprep.subr.mxu0 0.0
        %3625 = vmatpush1.msra.mxu0 %v3067
        %3626 = vmatprep.subr.mxu0 0.0
        %3627 = vmatpush1.msra.mxu0 %v3066
        %3628 = vmatprep.subr.mxu0 0.0
        %3629 = vmatpush1.msra.mxu0 %v3065
        %3630 = vmatprep.subr.mxu0 0.0
        %3631 = vmatpush2.msra.mxu0 0.0
        %3632 = vmatprep.subr.mxu0 0.0
        %3633 = vmatpush2.msra.mxu0 0.0
        %3634 = vmatprep.subr.mxu0 0.0
        %3635 = vmatpush2.msra.mxu0 0.0
        %3636 = vmatprep.subr.mxu0 0.0
        %3637 = vmatpush2.msra.mxu0 0.0
        %3638 = vmatprep.subr.mxu0 0.0
        %3639 = vmatpush2.msra.mxu0 0.0
        %3640 = vmatprep.subr.mxu0 0.0
        %3641 = vmatpush2.msra.mxu0 0.0
        %3642 = vmatprep.subr.mxu0 0.0
        %3643 = vmatpush2.msra.mxu0 0.0
        %3644 = vmatprep.subr.mxu0 0.0
        %3645 = vmatpush2.msra.mxu0 0.0
        %3646 = vmatprep.subr.mxu0 0.0
        %3647 = vmatpush2.msra.mxu0 0.0
        %3648 = vmatprep.subr.mxu0 0.0
        %3649 = vmatpush2.msra.mxu0 0.0
        %3650 = vmatprep.subr.mxu0 0.0
        %3651 = vmatpush2.msra.mxu0 0.0
        %3652 = vmatprep.subr.mxu0 0.0
        %3653 = vmatpush2.msra.mxu0 0.0
        %3654 = vmatprep.subr.mxu0 0.0
        %3655 = vmatpush2.msra.mxu0 0.0
        %3656 = vmatprep.subr.mxu0 0.0
        %3657 = vmatpush2.msra.mxu0 0.0
        %3658 = vmatprep.subr.mxu0 0.0
        %3659 = vmatpush2.msra.mxu0 0.0
        %3660 = vmatprep.subr.mxu0 0.0
        %3661 = vmatpush2.msra.mxu0 0.0
        %3662 = vmatprep.mubr.f32.mxu0 0.0
        %3663 = vmatmul.mubr.f32.gmra.mxu0 %v1545
        %v3664 = vpop.f32.mrf.mxu0
        %v3665 = vadd.f32 0.0, %v3664
        %v3666 = vpop.f32.mrf.mxu0
        %3667 = vmatprep.mubr.f32.mxu0 0.0
        %3668 = vmatmul.mubr.f32.gmra.mxu0 %v1548
        %v3669 = vpop.f32.mrf.mxu0
        %v3670 = vadd.f32 0.0, %v3669
        %v3671 = vpop.f32.mrf.mxu0
        %3672 = vmatprep.mubr.f32.mxu0 0.0
        %3673 = vmatmul.mubr.f32.gmra.mxu0 %v1551
        %v3674 = vpop.f32.mrf.mxu0
        %v3675 = vadd.f32 0.0, %v3674
        %v3676 = vpop.f32.mrf.mxu0
        %3677 = vmatprep.mubr.f32.mxu0 0.0
        %3678 = vmatmul.mubr.f32.gmra.mxu0 %v1554
        %v3679 = vpop.f32.mrf.mxu0
        %v3680 = vadd.f32 0.0, %v3679
        %v3681 = vpop.f32.mrf.mxu0
        %3682 = vmatprep.mubr.f32.mxu0 0.0
        %3683 = vmatmul.mubr.f32.gmra.mxu0 %v1557
        %v3684 = vpop.f32.mrf.mxu0
        %v3685 = vadd.f32 0.0, %v3684
        %v3686 = vpop.f32.mrf.mxu0
        %3687 = vmatprep.mubr.f32.mxu0 0.0
        %3688 = vmatmul.mubr.f32.gmra.mxu0 %v1560
        %v3689 = vpop.f32.mrf.mxu0
        %v3690 = vadd.f32 0.0, %v3689
        %v3691 = vpop.f32.mrf.mxu0
        %3692 = vmatprep.mubr.f32.mxu0 0.0
        %3693 = vmatmul.mubr.f32.gmra.mxu0 %v1563
        %v3694 = vpop.f32.mrf.mxu0
        %v3695 = vadd.f32 0.0, %v3694
        %v3696 = vpop.f32.mrf.mxu0
        %3697 = vmatprep.mubr.f32.mxu0 0.0
        %3698 = vmatmul.mubr.f32.gmra.mxu0 %v1566
        %v3699 = vpop.f32.mrf.mxu0
        %v3700 = vadd.f32 0.0, %v3699
        %v3701 = vpop.f32.mrf.mxu0
        %3702 = vdwg.mxu0
        %3703 = vmatprep.subr.mxu0 0.0
        %3704 = vmatpush1.msra.mxu0 0.0
        %3705 = vmatprep.subr.mxu0 0.0
        %3706 = vmatpush1.msra.mxu0 0.0
        %3707 = vmatprep.subr.mxu0 0.0
        %3708 = vmatpush1.msra.mxu0 0.0
        %3709 = vmatprep.subr.mxu0 0.0
        %3710 = vmatpush1.msra.mxu0 0.0
        %3711 = vmatprep.subr.mxu0 0.0
        %3712 = vmatpush1.msra.mxu0 0.0
        %3713 = vmatprep.subr.mxu0 0.0
        %3714 = vmatpush1.msra.mxu0 0.0
        %3715 = vmatprep.subr.mxu0 0.0
        %3716 = vmatpush1.msra.mxu0 0.0
        %3717 = vmatprep.subr.mxu0 0.0
        %3718 = vmatpush1.msra.mxu0 0.0
        %3719 = vmatprep.subr.mxu0 0.0
        %3720 = vmatpush1.msra.mxu0 %v3072
        %3721 = vmatprep.subr.mxu0 0.0
        %3722 = vmatpush1.msra.mxu0 %v3071
        %3723 = vmatprep.subr.mxu0 0.0
        %3724 = vmatpush1.msra.mxu0 %v3070
        %3725 = vmatprep.subr.mxu0 0.0
        %3726 = vmatpush1.msra.mxu0 %v3069
        %3727 = vmatprep.subr.mxu0 0.0
        %3728 = vmatpush1.msra.mxu0 %v3068
        %3729 = vmatprep.subr.mxu0 0.0
        %3730 = vmatpush1.msra.mxu0 %v3067
        %3731 = vmatprep.subr.mxu0 0.0
        %3732 = vmatpush1.msra.mxu0 %v3066
        %3733 = vmatprep.subr.mxu0 0.0
        %3734 = vmatpush1.msra.mxu0 %v3065
        %3735 = vmatprep.subr.mxu0 0.0
        %3736 = vmatpush2.msra.mxu0 0.0
        %3737 = vmatprep.subr.mxu0 0.0
        %3738 = vmatpush2.msra.mxu0 0.0
        %3739 = vmatprep.subr.mxu0 0.0
        %3740 = vmatpush2.msra.mxu0 0.0
        %3741 = vmatprep.subr.mxu0 0.0
        %3742 = vmatpush2.msra.mxu0 0.0
        %3743 = vmatprep.subr.mxu0 0.0
        %3744 = vmatpush2.msra.mxu0 0.0
        %3745 = vmatprep.subr.mxu0 0.0
        %3746 = vmatpush2.msra.mxu0 0.0
        %3747 = vmatprep.subr.mxu0 0.0
        %3748 = vmatpush2.msra.mxu0 0.0
        %3749 = vmatprep.subr.mxu0 0.0
        %3750 = vmatpush2.msra.mxu0 0.0
        %3751 = vmatprep.subr.mxu0 0.0
        %3752 = vmatpush2.msra.mxu0 0.0
        %3753 = vmatprep.subr.mxu0 0.0
        %3754 = vmatpush2.msra.mxu0 0.0
        %3755 = vmatprep.subr.mxu0 0.0
        %3756 = vmatpush2.msra.mxu0 0.0
        %3757 = vmatprep.subr.mxu0 0.0
        %3758 = vmatpush2.msra.mxu0 0.0
        %3759 = vmatprep.subr.mxu0 0.0
        %3760 = vmatpush2.msra.mxu0 0.0
        %3761 = vmatprep.subr.mxu0 0.0
        %3762 = vmatpush2.msra.mxu0 0.0
        %3763 = vmatprep.subr.mxu0 0.0
        %3764 = vmatpush2.msra.mxu0 0.0
        %3765 = vmatprep.subr.mxu0 0.0
        %3766 = vmatpush2.msra.mxu0 0.0
        %3767 = vmatprep.mubr.f32.mxu0 0.0
        %3768 = vmatmul.mubr.f32.gmra.mxu0 %v1683
        %v3769 = vpop.f32.mrf.mxu0
        %v3770 = vadd.f32 0.0, %v3769
        %v3771 = vpop.f32.mrf.mxu0
        %3772 = vmatprep.mubr.f32.mxu0 0.0
        %3773 = vmatmul.mubr.f32.gmra.mxu0 %v1686
        %v3774 = vpop.f32.mrf.mxu0
        %v3775 = vadd.f32 0.0, %v3774
        %v3776 = vpop.f32.mrf.mxu0
        %3777 = vmatprep.mubr.f32.mxu0 0.0
        %3778 = vmatmul.mubr.f32.gmra.mxu0 %v1689
        %v3779 = vpop.f32.mrf.mxu0
        %v3780 = vadd.f32 0.0, %v3779
        %v3781 = vpop.f32.mrf.mxu0
        %3782 = vmatprep.mubr.f32.mxu0 0.0
        %3783 = vmatmul.mubr.f32.gmra.mxu0 %v1692
        %v3784 = vpop.f32.mrf.mxu0
        %v3785 = vadd.f32 0.0, %v3784
        %v3786 = vpop.f32.mrf.mxu0
        %3787 = vmatprep.mubr.f32.mxu0 0.0
        %3788 = vmatmul.mubr.f32.gmra.mxu0 %v1695
        %v3789 = vpop.f32.mrf.mxu0
        %v3790 = vadd.f32 0.0, %v3789
        %v3791 = vpop.f32.mrf.mxu0
        %3792 = vmatprep.mubr.f32.mxu0 0.0
        %3793 = vmatmul.mubr.f32.gmra.mxu0 %v1698
        %v3794 = vpop.f32.mrf.mxu0
        %v3795 = vadd.f32 0.0, %v3794
        %v3796 = vpop.f32.mrf.mxu0
        %3797 = vmatprep.mubr.f32.mxu0 0.0
        %3798 = vmatmul.mubr.f32.gmra.mxu0 %v1701
        %v3799 = vpop.f32.mrf.mxu0
        %v3800 = vadd.f32 0.0, %v3799
        %v3801 = vpop.f32.mrf.mxu0
        %3802 = vmatprep.mubr.f32.mxu0 0.0
        %3803 = vmatmul.mubr.f32.gmra.mxu0 %v1704
        %v3804 = vpop.f32.mrf.mxu0
        %v3805 = vadd.f32 0.0, %v3804
        %v3806 = vpop.f32.mrf.mxu0
        %3807 = vdwg.mxu0
        %3808 = vmatprep.subr.mxu0 0.0
        %3809 = vmatpush1.msra.mxu0 0.0
        %3810 = vmatprep.subr.mxu0 0.0
        %3811 = vmatpush1.msra.mxu0 0.0
        %3812 = vmatprep.subr.mxu0 0.0
        %3813 = vmatpush1.msra.mxu0 0.0
        %3814 = vmatprep.subr.mxu0 0.0
        %3815 = vmatpush1.msra.mxu0 0.0
        %3816 = vmatprep.subr.mxu0 0.0
        %3817 = vmatpush1.msra.mxu0 0.0
        %3818 = vmatprep.subr.mxu0 0.0
        %3819 = vmatpush1.msra.mxu0 0.0
        %3820 = vmatprep.subr.mxu0 0.0
        %3821 = vmatpush1.msra.mxu0 0.0
        %3822 = vmatprep.subr.mxu0 0.0
        %3823 = vmatpush1.msra.mxu0 0.0
        %3824 = vmatprep.subr.mxu0 0.0
        %3825 = vmatpush1.msra.mxu0 %v3072
        %3826 = vmatprep.subr.mxu0 0.0
        %3827 = vmatpush1.msra.mxu0 %v3071
        %3828 = vmatprep.subr.mxu0 0.0
        %3829 = vmatpush1.msra.mxu0 %v3070
        %3830 = vmatprep.subr.mxu0 0.0
        %3831 = vmatpush1.msra.mxu0 %v3069
        %3832 = vmatprep.subr.mxu0 0.0
        %3833 = vmatpush1.msra.mxu0 %v3068
        %3834 = vmatprep.subr.mxu0 0.0
        %3835 = vmatpush1.msra.mxu0 %v3067
        %3836 = vmatprep.subr.mxu0 0.0
        %3837 = vmatpush1.msra.mxu0 %v3066
        %3838 = vmatprep.subr.mxu0 0.0
        %3839 = vmatpush1.msra.mxu0 %v3065
        %3840 = vmatprep.subr.mxu0 0.0
        %3841 = vmatpush2.msra.mxu0 0.0
        %3842 = vmatprep.subr.mxu0 0.0
        %3843 = vmatpush2.msra.mxu0 0.0
        %3844 = vmatprep.subr.mxu0 0.0
        %3845 = vmatpush2.msra.mxu0 0.0
        %3846 = vmatprep.subr.mxu0 0.0
        %3847 = vmatpush2.msra.mxu0 0.0
        %3848 = vmatprep.subr.mxu0 0.0
        %3849 = vmatpush2.msra.mxu0 0.0
        %3850 = vmatprep.subr.mxu0 0.0
        %3851 = vmatpush2.msra.mxu0 0.0
        %3852 = vmatprep.subr.mxu0 0.0
        %3853 = vmatpush2.msra.mxu0 0.0
        %3854 = vmatprep.subr.mxu0 0.0
        %3855 = vmatpush2.msra.mxu0 0.0
        %3856 = vmatprep.subr.mxu0 0.0
        %3857 = vmatpush2.msra.mxu0 0.0
        %3858 = vmatprep.subr.mxu0 0.0
        %3859 = vmatpush2.msra.mxu0 0.0
        %3860 = vmatprep.subr.mxu0 0.0
        %3861 = vmatpush2.msra.mxu0 0.0
        %3862 = vmatprep.subr.mxu0 0.0
        %3863 = vmatpush2.msra.mxu0 0.0
        %3864 = vmatprep.subr.mxu0 0.0
        %3865 = vmatpush2.msra.mxu0 0.0
        %3866 = vmatprep.subr.mxu0 0.0
        %3867 = vmatpush2.msra.mxu0 0.0
        %3868 = vmatprep.subr.mxu0 0.0
        %3869 = vmatpush2.msra.mxu0 0.0
        %3870 = vmatprep.subr.mxu0 0.0
        %3871 = vmatpush2.msra.mxu0 0.0
        %3872 = vmatprep.mubr.f32.mxu0 0.0
        %3873 = vmatmul.mubr.f32.gmra.mxu0 %v1821
        %v3874 = vpop.f32.mrf.mxu0
        %v3875 = vadd.f32 0.0, %v3874
        %v3876 = vpop.f32.mrf.mxu0
        %3877 = vmatprep.mubr.f32.mxu0 0.0
        %3878 = vmatmul.mubr.f32.gmra.mxu0 %v1824
        %v3879 = vpop.f32.mrf.mxu0
        %v3880 = vadd.f32 0.0, %v3879
        %v3881 = vpop.f32.mrf.mxu0
        %3882 = vmatprep.mubr.f32.mxu0 0.0
        %3883 = vmatmul.mubr.f32.gmra.mxu0 %v1827
        %v3884 = vpop.f32.mrf.mxu0
        %v3885 = vadd.f32 0.0, %v3884
        %v3886 = vpop.f32.mrf.mxu0
        %3887 = vmatprep.mubr.f32.mxu0 0.0
        %3888 = vmatmul.mubr.f32.gmra.mxu0 %v1830
        %v3889 = vpop.f32.mrf.mxu0
        %v3890 = vadd.f32 0.0, %v3889
        %v3891 = vpop.f32.mrf.mxu0
        %3892 = vmatprep.mubr.f32.mxu0 0.0
        %3893 = vmatmul.mubr.f32.gmra.mxu0 %v1833
        %v3894 = vpop.f32.mrf.mxu0
        %v3895 = vadd.f32 0.0, %v3894
        %v3896 = vpop.f32.mrf.mxu0
        %3897 = vmatprep.mubr.f32.mxu0 0.0
        %3898 = vmatmul.mubr.f32.gmra.mxu0 %v1836
        %v3899 = vpop.f32.mrf.mxu0
        %v3900 = vadd.f32 0.0, %v3899
        %v3901 = vpop.f32.mrf.mxu0
        %3902 = vmatprep.mubr.f32.mxu0 0.0
        %3903 = vmatmul.mubr.f32.gmra.mxu0 %v1839
        %v3904 = vpop.f32.mrf.mxu0
        %v3905 = vadd.f32 0.0, %v3904
        %v3906 = vpop.f32.mrf.mxu0
        %3907 = vmatprep.mubr.f32.mxu0 0.0
        %3908 = vmatmul.mubr.f32.gmra.mxu0 %v1842
        %v3909 = vpop.f32.mrf.mxu0
        %v3910 = vadd.f32 0.0, %v3909
        %v3911 = vpop.f32.mrf.mxu0
        %3912 = vdwg.mxu0
        %3913 = vmatprep.subr.mxu0 0.0
        %3914 = vmatpush1.msra.mxu0 0.0
        %3915 = vmatprep.subr.mxu0 0.0
        %3916 = vmatpush1.msra.mxu0 0.0
        %3917 = vmatprep.subr.mxu0 0.0
        %3918 = vmatpush1.msra.mxu0 0.0
        %3919 = vmatprep.subr.mxu0 0.0
        %3920 = vmatpush1.msra.mxu0 0.0
        %3921 = vmatprep.subr.mxu0 0.0
        %3922 = vmatpush1.msra.mxu0 0.0
        %3923 = vmatprep.subr.mxu0 0.0
        %3924 = vmatpush1.msra.mxu0 0.0
        %3925 = vmatprep.subr.mxu0 0.0
        %3926 = vmatpush1.msra.mxu0 0.0
        %3927 = vmatprep.subr.mxu0 0.0
        %3928 = vmatpush1.msra.mxu0 0.0
        %3929 = vmatprep.subr.mxu0 0.0
        %3930 = vmatpush1.msra.mxu0 %v3072
        %3931 = vmatprep.subr.mxu0 0.0
        %3932 = vmatpush1.msra.mxu0 %v3071
        %3933 = vmatprep.subr.mxu0 0.0
        %3934 = vmatpush1.msra.mxu0 %v3070
        %3935 = vmatprep.subr.mxu0 0.0
        %3936 = vmatpush1.msra.mxu0 %v3069
        %3937 = vmatprep.subr.mxu0 0.0
        %3938 = vmatpush1.msra.mxu0 %v3068
        %3939 = vmatprep.subr.mxu0 0.0
        %3940 = vmatpush1.msra.mxu0 %v3067
        %3941 = vmatprep.subr.mxu0 0.0
        %3942 = vmatpush1.msra.mxu0 %v3066
        %3943 = vmatprep.subr.mxu0 0.0
        %3944 = vmatpush1.msra.mxu0 %v3065
        %3945 = vmatprep.subr.mxu0 0.0
        %3946 = vmatpush2.msra.mxu0 0.0
        %3947 = vmatprep.subr.mxu0 0.0
        %3948 = vmatpush2.msra.mxu0 0.0
        %3949 = vmatprep.subr.mxu0 0.0
        %3950 = vmatpush2.msra.mxu0 0.0
        %3951 = vmatprep.subr.mxu0 0.0
        %3952 = vmatpush2.msra.mxu0 0.0
        %3953 = vmatprep.subr.mxu0 0.0
        %3954 = vmatpush2.msra.mxu0 0.0
        %3955 = vmatprep.subr.mxu0 0.0
        %3956 = vmatpush2.msra.mxu0 0.0
        %3957 = vmatprep.subr.mxu0 0.0
        %3958 = vmatpush2.msra.mxu0 0.0
        %3959 = vmatprep.subr.mxu0 0.0
        %3960 = vmatpush2.msra.mxu0 0.0
        %3961 = vmatprep.subr.mxu0 0.0
        %3962 = vmatpush2.msra.mxu0 0.0
        %3963 = vmatprep.subr.mxu0 0.0
        %3964 = vmatpush2.msra.mxu0 0.0
        %3965 = vmatprep.subr.mxu0 0.0
        %3966 = vmatpush2.msra.mxu0 0.0
        %3967 = vmatprep.subr.mxu0 0.0
        %3968 = vmatpush2.msra.mxu0 0.0
        %3969 = vmatprep.subr.mxu0 0.0
        %3970 = vmatpush2.msra.mxu0 0.0
        %3971 = vmatprep.subr.mxu0 0.0
        %3972 = vmatpush2.msra.mxu0 0.0
        %3973 = vmatprep.subr.mxu0 0.0
        %3974 = vmatpush2.msra.mxu0 0.0
        %3975 = vmatprep.subr.mxu0 0.0
        %3976 = vmatpush2.msra.mxu0 0.0
        %3977 = vmatprep.mubr.f32.mxu0 0.0
        %3978 = vmatmul.mubr.f32.gmra.mxu0 %v1959
        %v3979 = vpop.f32.mrf.mxu0
        %v3980 = vadd.f32 0.0, %v3979
        %v3981 = vpop.f32.mrf.mxu0
        %3982 = vmatprep.mubr.f32.mxu0 0.0
        %3983 = vmatmul.mubr.f32.gmra.mxu0 %v1962
        %v3984 = vpop.f32.mrf.mxu0
        %v3985 = vadd.f32 0.0, %v3984
        %v3986 = vpop.f32.mrf.mxu0
        %3987 = vmatprep.mubr.f32.mxu0 0.0
        %3988 = vmatmul.mubr.f32.gmra.mxu0 %v1965
        %v3989 = vpop.f32.mrf.mxu0
        %v3990 = vadd.f32 0.0, %v3989
        %v3991 = vpop.f32.mrf.mxu0
        %3992 = vmatprep.mubr.f32.mxu0 0.0
        %3993 = vmatmul.mubr.f32.gmra.mxu0 %v1968
        %v3994 = vpop.f32.mrf.mxu0
        %v3995 = vadd.f32 0.0, %v3994
        %v3996 = vpop.f32.mrf.mxu0
        %3997 = vmatprep.mubr.f32.mxu0 0.0
        %3998 = vmatmul.mubr.f32.gmra.mxu0 %v1971
        %v3999 = vpop.f32.mrf.mxu0
        %v4000 = vadd.f32 0.0, %v3999
        %v4001 = vpop.f32.mrf.mxu0
        %4002 = vmatprep.mubr.f32.mxu0 0.0
        %4003 = vmatmul.mubr.f32.gmra.mxu0 %v1974
        %v4004 = vpop.f32.mrf.mxu0
        %v4005 = vadd.f32 0.0, %v4004
        %v4006 = vpop.f32.mrf.mxu0
        %4007 = vmatprep.mubr.f32.mxu0 0.0
        %4008 = vmatmul.mubr.f32.gmra.mxu0 %v1977
        %v4009 = vpop.f32.mrf.mxu0
        %v4010 = vadd.f32 0.0, %v4009
        %v4011 = vpop.f32.mrf.mxu0
        %4012 = vmatprep.mubr.f32.mxu0 0.0
        %4013 = vmatmul.mubr.f32.gmra.mxu0 %v1980
        %v4014 = vpop.f32.mrf.mxu0
        %v4015 = vadd.f32 0.0, %v4014
        %v4016 = vpop.f32.mrf.mxu0
        %4017 = vdwg.mxu0
        %v4018 = vld [vmem:[#allocation6] sm:$0xff]
        %v4019 = vld [vmem:[#allocation6 + $0x8] sm:$0xff]
        %v4020 = vld [vmem:[#allocation6 + $0x10] sm:$0xff]
        %v4021 = vld [vmem:[#allocation6 + $0x18] sm:$0xff]
        %v4022 = vld [vmem:[#allocation6 + $0x20] sm:$0xff]
        %v4023 = vld [vmem:[#allocation6 + $0x28] sm:$0xff]
        %v4024 = vld [vmem:[#allocation6 + $0x30] sm:$0xff]
        %v4025 = vld [vmem:[#allocation6 + $0x38] sm:$0xff]
        %v4026 = vld [vmem:[#allocation6 + $0x40] sm:$0xff]
        %v4027 = vld [vmem:[#allocation6 + $0x48] sm:$0xff]
        %v4028 = vld [vmem:[#allocation6 + $0x50] sm:$0xff]
        %v4029 = vld [vmem:[#allocation6 + $0x58] sm:$0xff]
        %v4030 = vld [vmem:[#allocation6 + $0x60] sm:$0xff]
        %v4031 = vld [vmem:[#allocation6 + $0x68] sm:$0xff]
        %v4032 = vld [vmem:[#allocation6 + $0x70] sm:$0xff]
        %v4033 = vld [vmem:[#allocation6 + $0x78] sm:$0xff]
        %v4034 = vld [vmem:[#allocation6 + $0x80] sm:$0xff]
        %v4035 = vld [vmem:[#allocation6 + $0x88] sm:$0xff]
        %v4036 = vld [vmem:[#allocation6 + $0x90] sm:$0xff]
        %v4037 = vld [vmem:[#allocation6 + $0x98] sm:$0xff]
        %v4038 = vld [vmem:[#allocation6 + $0xa0] sm:$0xff]
        %v4039 = vld [vmem:[#allocation6 + $0xa8] sm:$0xff]
        %v4040 = vld [vmem:[#allocation6 + $0xb0] sm:$0xff]
        %v4041 = vld [vmem:[#allocation6 + $0xb8] sm:$0xff]
        %v4042 = vld [vmem:[#allocation6 + $0xc0] sm:$0xff]
        %v4043 = vld [vmem:[#allocation6 + $0xc8] sm:$0xff]
        %v4044 = vld [vmem:[#allocation6 + $0xd0] sm:$0xff]
        %v4045 = vld [vmem:[#allocation6 + $0xd8] sm:$0xff]
        %v4046 = vld [vmem:[#allocation6 + $0xe0] sm:$0xff]
        %v4047 = vld [vmem:[#allocation6 + $0xe8] sm:$0xff]
        %v4048 = vld [vmem:[#allocation6 + $0xf0] sm:$0xff]
        %v4049 = vld [vmem:[#allocation6 + $0xf8] sm:$0xff]
        %v4050 = vld [vmem:[#allocation6 + $0x100] sm:$0xff]
        %v4051 = vld [vmem:[#allocation6 + $0x108] sm:$0xff]
        %v4052 = vld [vmem:[#allocation6 + $0x110] sm:$0xff]
        %v4053 = vld [vmem:[#allocation6 + $0x118] sm:$0xff]
        %v4054 = vld [vmem:[#allocation6 + $0x120] sm:$0xff]
        %v4055 = vld [vmem:[#allocation6 + $0x128] sm:$0xff]
        %v4056 = vld [vmem:[#allocation6 + $0x130] sm:$0xff]
        %v4057 = vld [vmem:[#allocation6 + $0x138] sm:$0xff]
        %v4058 = vld [vmem:[#allocation6 + $0x140] sm:$0xff]
        %v4059 = vld [vmem:[#allocation6 + $0x148] sm:$0xff]
        %v4060 = vld [vmem:[#allocation6 + $0x150] sm:$0xff]
        %v4061 = vld [vmem:[#allocation6 + $0x158] sm:$0xff]
        %v4062 = vld [vmem:[#allocation6 + $0x160] sm:$0xff]
        %v4063 = vld [vmem:[#allocation6 + $0x168] sm:$0xff]
        %v4064 = vld [vmem:[#allocation6 + $0x170] sm:$0xff]
        %v4065 = vld [vmem:[#allocation6 + $0x178] sm:$0xff]
        %v4066 = vld [vmem:[#allocation6 + $0x180] sm:$0xff]
        %v4067 = vld [vmem:[#allocation6 + $0x188] sm:$0xff]
        %v4068 = vld [vmem:[#allocation6 + $0x190] sm:$0xff]
        %v4069 = vld [vmem:[#allocation6 + $0x198] sm:$0xff]
        %v4070 = vld [vmem:[#allocation6 + $0x1a0] sm:$0xff]
        %v4071 = vld [vmem:[#allocation6 + $0x1a8] sm:$0xff]
        %v4072 = vld [vmem:[#allocation6 + $0x1b0] sm:$0xff]
        %v4073 = vld [vmem:[#allocation6 + $0x1b8] sm:$0xff]
        %v4074 = vld [vmem:[#allocation6 + $0x1c0] sm:$0xff]
        %v4075 = vld [vmem:[#allocation6 + $0x1c8] sm:$0xff]
        %v4076 = vld [vmem:[#allocation6 + $0x1d0] sm:$0xff]
        %v4077 = vld [vmem:[#allocation6 + $0x1d8] sm:$0xff]
        %v4078 = vld [vmem:[#allocation6 + $0x1e0] sm:$0xff]
        %v4079 = vld [vmem:[#allocation6 + $0x1e8] sm:$0xff]
        %v4080 = vld [vmem:[#allocation6 + $0x1f0] sm:$0xff]
        %v4081 = vld [vmem:[#allocation6 + $0x1f8] sm:$0xff]
        %v4082 = vld [vmem:[#allocation6 + $0x200] sm:$0xff]
        %v4083 = vld [vmem:[#allocation6 + $0x208] sm:$0xff]
        %v4084 = vld [vmem:[#allocation6 + $0x210] sm:$0xff]
        %v4085 = vld [vmem:[#allocation6 + $0x218] sm:$0xff]
        %v4086 = vld [vmem:[#allocation6 + $0x220] sm:$0xff]
        %v4087 = vld [vmem:[#allocation6 + $0x228] sm:$0xff]
        %v4088 = vld [vmem:[#allocation6 + $0x230] sm:$0xff]
        %v4089 = vld [vmem:[#allocation6 + $0x238] sm:$0xff]
        %v4090 = vld [vmem:[#allocation6 + $0x240] sm:$0xff]
        %v4091 = vld [vmem:[#allocation6 + $0x248] sm:$0xff]
        %v4092 = vld [vmem:[#allocation6 + $0x250] sm:$0xff]
        %v4093 = vld [vmem:[#allocation6 + $0x258] sm:$0xff]
        %v4094 = vld [vmem:[#allocation6 + $0x260] sm:$0xff]
        %v4095 = vld [vmem:[#allocation6 + $0x268] sm:$0xff]
        %v4096 = vld [vmem:[#allocation6 + $0x270] sm:$0xff]
        %v4097 = vld [vmem:[#allocation6 + $0x278] sm:$0xff]
        %v4098 = vld [vmem:[#allocation6 + $0x280] sm:$0xff]
        %v4099 = vld [vmem:[#allocation6 + $0x288] sm:$0xff]
        %v4100 = vld [vmem:[#allocation6 + $0x290] sm:$0xff]
        %v4101 = vld [vmem:[#allocation6 + $0x298] sm:$0xff]
        %v4102 = vld [vmem:[#allocation6 + $0x2a0] sm:$0xff]
        %v4103 = vld [vmem:[#allocation6 + $0x2a8] sm:$0xff]
        %v4104 = vld [vmem:[#allocation6 + $0x2b0] sm:$0xff]
        %v4105 = vld [vmem:[#allocation6 + $0x2b8] sm:$0xff]
        %v4106 = vld [vmem:[#allocation6 + $0x2c0] sm:$0xff]
        %v4107 = vld [vmem:[#allocation6 + $0x2c8] sm:$0xff]
        %v4108 = vld [vmem:[#allocation6 + $0x2d0] sm:$0xff]
        %v4109 = vld [vmem:[#allocation6 + $0x2d8] sm:$0xff]
        %v4110 = vld [vmem:[#allocation6 + $0x2e0] sm:$0xff]
        %v4111 = vld [vmem:[#allocation6 + $0x2e8] sm:$0xff]
        %v4112 = vld [vmem:[#allocation6 + $0x2f0] sm:$0xff]
        %v4113 = vld [vmem:[#allocation6 + $0x2f8] sm:$0xff]
        %v4114 = vld [vmem:[#allocation6 + $0x300] sm:$0xff]
        %v4115 = vld [vmem:[#allocation6 + $0x308] sm:$0xff]
        %v4116 = vld [vmem:[#allocation6 + $0x310] sm:$0xff]
        %v4117 = vld [vmem:[#allocation6 + $0x318] sm:$0xff]
        %v4118 = vld [vmem:[#allocation6 + $0x320] sm:$0xff]
        %v4119 = vld [vmem:[#allocation6 + $0x328] sm:$0xff]
        %v4120 = vld [vmem:[#allocation6 + $0x330] sm:$0xff]
        %v4121 = vld [vmem:[#allocation6 + $0x338] sm:$0xff]
        %v4122 = vld [vmem:[#allocation6 + $0x340] sm:$0xff]
        %v4123 = vld [vmem:[#allocation6 + $0x348] sm:$0xff]
        %v4124 = vld [vmem:[#allocation6 + $0x350] sm:$0xff]
        %v4125 = vld [vmem:[#allocation6 + $0x358] sm:$0xff]
        %v4126 = vld [vmem:[#allocation6 + $0x360] sm:$0xff]
        %v4127 = vld [vmem:[#allocation6 + $0x368] sm:$0xff]
        %v4128 = vld [vmem:[#allocation6 + $0x370] sm:$0xff]
        %v4129 = vld [vmem:[#allocation6 + $0x378] sm:$0xff]
        %v4130 = vld [vmem:[#allocation6 + $0x380] sm:$0xff]
        %v4131 = vld [vmem:[#allocation6 + $0x388] sm:$0xff]
        %v4132 = vld [vmem:[#allocation6 + $0x390] sm:$0xff]
        %v4133 = vld [vmem:[#allocation6 + $0x398] sm:$0xff]
        %v4134 = vld [vmem:[#allocation6 + $0x3a0] sm:$0xff]
        %v4135 = vld [vmem:[#allocation6 + $0x3a8] sm:$0xff]
        %v4136 = vld [vmem:[#allocation6 + $0x3b0] sm:$0xff]
        %v4137 = vld [vmem:[#allocation6 + $0x3b8] sm:$0xff]
        %v4138 = vld [vmem:[#allocation6 + $0x3c0] sm:$0xff]
        %v4139 = vld [vmem:[#allocation6 + $0x3c8] sm:$0xff]
        %v4140 = vld [vmem:[#allocation6 + $0x3d0] sm:$0xff]
        %v4141 = vld [vmem:[#allocation6 + $0x3d8] sm:$0xff]
        %v4142 = vld [vmem:[#allocation6 + $0x3e0] sm:$0xff]
        %v4143 = vld [vmem:[#allocation6 + $0x3e8] sm:$0xff]
        %v4144 = vld [vmem:[#allocation6 + $0x3f0] sm:$0xff]
        %v4145 = vld [vmem:[#allocation6 + $0x3f8] sm:$0xff]
        %v4146 = vld [vmem:[#allocation6 + $0x400] sm:$0xff]
        %v4147 = vld [vmem:[#allocation6 + $0x408] sm:$0xff]
        %v4148 = vld [vmem:[#allocation6 + $0x410] sm:$0xff]
        %v4149 = vld [vmem:[#allocation6 + $0x418] sm:$0xff]
        %v4150 = vld [vmem:[#allocation6 + $0x420] sm:$0xff]
        %v4151 = vld [vmem:[#allocation6 + $0x428] sm:$0xff]
        %v4152 = vld [vmem:[#allocation6 + $0x430] sm:$0xff]
        %v4153 = vld [vmem:[#allocation6 + $0x438] sm:$0xff]
        %v4154 = vld [vmem:[#allocation6 + $0x440] sm:$0xff]
        %v4155 = vld [vmem:[#allocation6 + $0x448] sm:$0xff]
        %v4156 = vld [vmem:[#allocation6 + $0x450] sm:$0xff]
        %v4157 = vld [vmem:[#allocation6 + $0x458] sm:$0xff]
        %v4158 = vld [vmem:[#allocation6 + $0x460] sm:$0xff]
        %v4159 = vld [vmem:[#allocation6 + $0x468] sm:$0xff]
        %v4160 = vld [vmem:[#allocation6 + $0x470] sm:$0xff]
        %v4161 = vld [vmem:[#allocation6 + $0x478] sm:$0xff]
        %v4162 = vld [vmem:[%s10] sm:$0x1]
        %v4164 = vlaneseq
        %v4165 = vshrl.u32 %v4164, 7
        %v4166 = vsub.s32 0, %v4165
        %v4167 = vrot.slane %v4162, %v4166
        %4169 = vmatprep.subr.mxu0 0.0
        %4170 = vmatpush1.msra.mxu0 %v4033
        %4171 = vmatprep.subr.mxu0 0.0
        %4172 = vmatpush1.msra.mxu0 %v4032
        %4173 = vmatprep.subr.mxu0 0.0
        %4174 = vmatpush1.msra.mxu0 %v4031
        %4175 = vmatprep.subr.mxu0 0.0
        %4176 = vmatpush1.msra.mxu0 %v4030
        %4177 = vmatprep.subr.mxu0 0.0
        %4178 = vmatpush1.msra.mxu0 %v4029
        %4179 = vmatprep.subr.mxu0 0.0
        %4180 = vmatpush1.msra.mxu0 %v4028
        %4181 = vmatprep.subr.mxu0 0.0
        %4182 = vmatpush1.msra.mxu0 %v4027
        %4183 = vmatprep.subr.mxu0 0.0
        %4184 = vmatpush1.msra.mxu0 %v4026
        %4185 = vmatprep.subr.mxu0 0.0
        %4186 = vmatpush1.msra.mxu0 %v4025
        %4187 = vmatprep.subr.mxu0 0.0
        %4188 = vmatpush1.msra.mxu0 %v4024
        %4189 = vmatprep.subr.mxu0 0.0
        %4190 = vmatpush1.msra.mxu0 %v4023
        %4191 = vmatprep.subr.mxu0 0.0
        %4192 = vmatpush1.msra.mxu0 %v4022
        %4193 = vmatprep.subr.mxu0 0.0
        %4194 = vmatpush1.msra.mxu0 %v4021
        %4195 = vmatprep.subr.mxu0 0.0
        %4196 = vmatpush1.msra.mxu0 %v4020
        %4197 = vmatprep.subr.mxu0 0.0
        %4198 = vmatpush1.msra.mxu0 %v4019
        %4199 = vmatprep.subr.mxu0 0.0
        %4200 = vmatpush1.msra.mxu0 %v4018
        %4201 = vmatprep.subr.mxu0 0.0
        %4202 = vmatpush2.msra.mxu0 %v4049
        %4203 = vmatprep.subr.mxu0 0.0
        %4204 = vmatpush2.msra.mxu0 %v4048
        %4205 = vmatprep.subr.mxu0 0.0
        %4206 = vmatpush2.msra.mxu0 %v4047
        %4207 = vmatprep.subr.mxu0 0.0
        %4208 = vmatpush2.msra.mxu0 %v4046
        %4209 = vmatprep.subr.mxu0 0.0
        %4210 = vmatpush2.msra.mxu0 %v4045
        %4211 = vmatprep.subr.mxu0 0.0
        %4212 = vmatpush2.msra.mxu0 %v4044
        %4213 = vmatprep.subr.mxu0 0.0
        %4214 = vmatpush2.msra.mxu0 %v4043
        %4215 = vmatprep.subr.mxu0 0.0
        %4216 = vmatpush2.msra.mxu0 %v4042
        %4217 = vmatprep.subr.mxu0 0.0
        %4218 = vmatpush2.msra.mxu0 %v4041
        %4219 = vmatprep.subr.mxu0 0.0
        %4220 = vmatpush2.msra.mxu0 %v4040
        %4221 = vmatprep.subr.mxu0 0.0
        %4222 = vmatpush2.msra.mxu0 %v4039
        %4223 = vmatprep.subr.mxu0 0.0
        %4224 = vmatpush2.msra.mxu0 %v4038
        %4225 = vmatprep.subr.mxu0 0.0
        %4226 = vmatpush2.msra.mxu0 %v4037
        %4227 = vmatprep.subr.mxu0 0.0
        %4228 = vmatpush2.msra.mxu0 %v4036
        %4229 = vmatprep.subr.mxu0 0.0
        %4230 = vmatpush2.msra.mxu0 %v4035
        %4231 = vmatprep.subr.mxu0 0.0
        %4232 = vmatpush2.msra.mxu0 %v4034
        %4233 = vmatprep.mubr.f32.mxu0 %v3245
        %4234 = vmatmul.mubr.f32.gmra.mxu0 %v3140
        %v4235 = vpop.f32.mrf.mxu0
        %v4236 = vadd.f32 %v4167, %v4235
        %v4237 = vpop.f32.mrf.mxu0
        %4238 = vmatprep.mubr.f32.mxu0 %v3250
        %4239 = vmatmul.mubr.f32.gmra.mxu0 %v3145
        %v4240 = vpop.f32.mrf.mxu0
        %v4241 = vadd.f32 %v4167, %v4240
        %v4242 = vpop.f32.mrf.mxu0
        %4243 = vmatprep.mubr.f32.mxu0 %v3255
        %4244 = vmatmul.mubr.f32.gmra.mxu0 %v3150
        %v4245 = vpop.f32.mrf.mxu0
        %v4246 = vadd.f32 %v4167, %v4245
        %v4247 = vpop.f32.mrf.mxu0
        %4248 = vmatprep.mubr.f32.mxu0 %v3260
        %4249 = vmatmul.mubr.f32.gmra.mxu0 %v3155
        %v4250 = vpop.f32.mrf.mxu0
        %v4251 = vadd.f32 %v4167, %v4250
        %v4252 = vpop.f32.mrf.mxu0
        %4253 = vmatprep.mubr.f32.mxu0 %v3265
        %4254 = vmatmul.mubr.f32.gmra.mxu0 %v3160
        %v4255 = vpop.f32.mrf.mxu0
        %v4256 = vadd.f32 %v4167, %v4255
        %v4257 = vpop.f32.mrf.mxu0
        %4258 = vmatprep.mubr.f32.mxu0 %v3270
        %4259 = vmatmul.mubr.f32.gmra.mxu0 %v3165
        %v4260 = vpop.f32.mrf.mxu0
        %v4261 = vadd.f32 %v4167, %v4260
        %v4262 = vpop.f32.mrf.mxu0
        %4263 = vmatprep.mubr.f32.mxu0 %v3275
        %4264 = vmatmul.mubr.f32.gmra.mxu0 %v3170
        %v4265 = vpop.f32.mrf.mxu0
        %v4266 = vadd.f32 %v4167, %v4265
        %v4267 = vpop.f32.mrf.mxu0
        %4268 = vmatprep.mubr.f32.mxu0 %v3280
        %4269 = vmatmul.mubr.f32.gmra.mxu0 %v3175
        %v4270 = vpop.f32.mrf.mxu0
        %v4271 = vadd.f32 %v4167, %v4270
        %v4272 = vpop.f32.mrf.mxu0
        %4273 = vdwg.mxu0
        %4274 = vmatprep.subr.mxu0 0.0
        %4275 = vmatpush1.msra.mxu0 %v4065
        %4276 = vmatprep.subr.mxu0 0.0
        %4277 = vmatpush1.msra.mxu0 %v4064
        %4278 = vmatprep.subr.mxu0 0.0
        %4279 = vmatpush1.msra.mxu0 %v4063
        %4280 = vmatprep.subr.mxu0 0.0
        %4281 = vmatpush1.msra.mxu0 %v4062
        %4282 = vmatprep.subr.mxu0 0.0
        %4283 = vmatpush1.msra.mxu0 %v4061
        %4284 = vmatprep.subr.mxu0 0.0
        %4285 = vmatpush1.msra.mxu0 %v4060
        %4286 = vmatprep.subr.mxu0 0.0
        %4287 = vmatpush1.msra.mxu0 %v4059
        %4288 = vmatprep.subr.mxu0 0.0
        %4289 = vmatpush1.msra.mxu0 %v4058
        %4290 = vmatprep.subr.mxu0 0.0
        %4291 = vmatpush1.msra.mxu0 %v4057
        %4292 = vmatprep.subr.mxu0 0.0
        %4293 = vmatpush1.msra.mxu0 %v4056
        %4294 = vmatprep.subr.mxu0 0.0
        %4295 = vmatpush1.msra.mxu0 %v4055
        %4296 = vmatprep.subr.mxu0 0.0
        %4297 = vmatpush1.msra.mxu0 %v4054
        %4298 = vmatprep.subr.mxu0 0.0
        %4299 = vmatpush1.msra.mxu0 %v4053
        %4300 = vmatprep.subr.mxu0 0.0
        %4301 = vmatpush1.msra.mxu0 %v4052
        %4302 = vmatprep.subr.mxu0 0.0
        %4303 = vmatpush1.msra.mxu0 %v4051
        %4304 = vmatprep.subr.mxu0 0.0
        %4305 = vmatpush1.msra.mxu0 %v4050
        %4306 = vmatprep.subr.mxu0 0.0
        %4307 = vmatpush2.msra.mxu0 %v4081
        %4308 = vmatprep.subr.mxu0 0.0
        %4309 = vmatpush2.msra.mxu0 %v4080
        %4310 = vmatprep.subr.mxu0 0.0
        %4311 = vmatpush2.msra.mxu0 %v4079
        %4312 = vmatprep.subr.mxu0 0.0
        %4313 = vmatpush2.msra.mxu0 %v4078
        %4314 = vmatprep.subr.mxu0 0.0
        %4315 = vmatpush2.msra.mxu0 %v4077
        %4316 = vmatprep.subr.mxu0 0.0
        %4317 = vmatpush2.msra.mxu0 %v4076
        %4318 = vmatprep.subr.mxu0 0.0
        %4319 = vmatpush2.msra.mxu0 %v4075
        %4320 = vmatprep.subr.mxu0 0.0
        %4321 = vmatpush2.msra.mxu0 %v4074
        %4322 = vmatprep.subr.mxu0 0.0
        %4323 = vmatpush2.msra.mxu0 %v4073
        %4324 = vmatprep.subr.mxu0 0.0
        %4325 = vmatpush2.msra.mxu0 %v4072
        %4326 = vmatprep.subr.mxu0 0.0
        %4327 = vmatpush2.msra.mxu0 %v4071
        %4328 = vmatprep.subr.mxu0 0.0
        %4329 = vmatpush2.msra.mxu0 %v4070
        %4330 = vmatprep.subr.mxu0 0.0
        %4331 = vmatpush2.msra.mxu0 %v4069
        %4332 = vmatprep.subr.mxu0 0.0
        %4333 = vmatpush2.msra.mxu0 %v4068
        %4334 = vmatprep.subr.mxu0 0.0
        %4335 = vmatpush2.msra.mxu0 %v4067
        %4336 = vmatprep.subr.mxu0 0.0
        %4337 = vmatpush2.msra.mxu0 %v4066
        %4338 = vmatprep.mubr.f32.mxu0 %v3455
        %4339 = vmatmul.mubr.f32.gmra.mxu0 %v3350
        %v4340 = vpop.f32.mrf.mxu0
        %v4341 = vadd.f32 %v4236, %v4340
        %v4342 = vpop.f32.mrf.mxu0
        %4343 = vmatprep.mubr.f32.mxu0 %v3460
        %4344 = vmatmul.mubr.f32.gmra.mxu0 %v3355
        %v4345 = vpop.f32.mrf.mxu0
        %v4346 = vadd.f32 %v4241, %v4345
        %v4347 = vpop.f32.mrf.mxu0
        %4348 = vmatprep.mubr.f32.mxu0 %v3465
        %4349 = vmatmul.mubr.f32.gmra.mxu0 %v3360
        %v4350 = vpop.f32.mrf.mxu0
        %v4351 = vadd.f32 %v4246, %v4350
        %v4352 = vpop.f32.mrf.mxu0
        %4353 = vmatprep.mubr.f32.mxu0 %v3470
        %4354 = vmatmul.mubr.f32.gmra.mxu0 %v3365
        %v4355 = vpop.f32.mrf.mxu0
        %v4356 = vadd.f32 %v4251, %v4355
        %v4357 = vpop.f32.mrf.mxu0
        %4358 = vmatprep.mubr.f32.mxu0 %v3475
        %4359 = vmatmul.mubr.f32.gmra.mxu0 %v3370
        %v4360 = vpop.f32.mrf.mxu0
        %v4361 = vadd.f32 %v4256, %v4360
        %v4362 = vpop.f32.mrf.mxu0
        %4363 = vmatprep.mubr.f32.mxu0 %v3480
        %4364 = vmatmul.mubr.f32.gmra.mxu0 %v3375
        %v4365 = vpop.f32.mrf.mxu0
        %v4366 = vadd.f32 %v4261, %v4365
        %v4367 = vpop.f32.mrf.mxu0
        %4368 = vmatprep.mubr.f32.mxu0 %v3485
        %4369 = vmatmul.mubr.f32.gmra.mxu0 %v3380
        %v4370 = vpop.f32.mrf.mxu0
        %v4371 = vadd.f32 %v4266, %v4370
        %v4372 = vpop.f32.mrf.mxu0
        %4373 = vmatprep.mubr.f32.mxu0 %v3490
        %4374 = vmatmul.mubr.f32.gmra.mxu0 %v3385
        %v4375 = vpop.f32.mrf.mxu0
        %v4376 = vadd.f32 %v4271, %v4375
        %v4377 = vpop.f32.mrf.mxu0
        %4378 = vdwg.mxu0
        %4379 = vmatprep.subr.mxu0 0.0
        %4380 = vmatpush1.msra.mxu0 %v4097
        %4381 = vmatprep.subr.mxu0 0.0
        %4382 = vmatpush1.msra.mxu0 %v4096
        %4383 = vmatprep.subr.mxu0 0.0
        %4384 = vmatpush1.msra.mxu0 %v4095
        %4385 = vmatprep.subr.mxu0 0.0
        %4386 = vmatpush1.msra.mxu0 %v4094
        %4387 = vmatprep.subr.mxu0 0.0
        %4388 = vmatpush1.msra.mxu0 %v4093
        %4389 = vmatprep.subr.mxu0 0.0
        %4390 = vmatpush1.msra.mxu0 %v4092
        %4391 = vmatprep.subr.mxu0 0.0
        %4392 = vmatpush1.msra.mxu0 %v4091
        %4393 = vmatprep.subr.mxu0 0.0
        %4394 = vmatpush1.msra.mxu0 %v4090
        %4395 = vmatprep.subr.mxu0 0.0
        %4396 = vmatpush1.msra.mxu0 %v4089
        %4397 = vmatprep.subr.mxu0 0.0
        %4398 = vmatpush1.msra.mxu0 %v4088
        %4399 = vmatprep.subr.mxu0 0.0
        %4400 = vmatpush1.msra.mxu0 %v4087
        %4401 = vmatprep.subr.mxu0 0.0
        %4402 = vmatpush1.msra.mxu0 %v4086
        %4403 = vmatprep.subr.mxu0 0.0
        %4404 = vmatpush1.msra.mxu0 %v4085
        %4405 = vmatprep.subr.mxu0 0.0
        %4406 = vmatpush1.msra.mxu0 %v4084
        %4407 = vmatprep.subr.mxu0 0.0
        %4408 = vmatpush1.msra.mxu0 %v4083
        %4409 = vmatprep.subr.mxu0 0.0
        %4410 = vmatpush1.msra.mxu0 %v4082
        %4411 = vmatprep.subr.mxu0 0.0
        %4412 = vmatpush2.msra.mxu0 %v4113
        %4413 = vmatprep.subr.mxu0 0.0
        %4414 = vmatpush2.msra.mxu0 %v4112
        %4415 = vmatprep.subr.mxu0 0.0
        %4416 = vmatpush2.msra.mxu0 %v4111
        %4417 = vmatprep.subr.mxu0 0.0
        %4418 = vmatpush2.msra.mxu0 %v4110
        %4419 = vmatprep.subr.mxu0 0.0
        %4420 = vmatpush2.msra.mxu0 %v4109
        %4421 = vmatprep.subr.mxu0 0.0
        %4422 = vmatpush2.msra.mxu0 %v4108
        %4423 = vmatprep.subr.mxu0 0.0
        %4424 = vmatpush2.msra.mxu0 %v4107
        %4425 = vmatprep.subr.mxu0 0.0
        %4426 = vmatpush2.msra.mxu0 %v4106
        %4427 = vmatprep.subr.mxu0 0.0
        %4428 = vmatpush2.msra.mxu0 %v4105
        %4429 = vmatprep.subr.mxu0 0.0
        %4430 = vmatpush2.msra.mxu0 %v4104
        %4431 = vmatprep.subr.mxu0 0.0
        %4432 = vmatpush2.msra.mxu0 %v4103
        %4433 = vmatprep.subr.mxu0 0.0
        %4434 = vmatpush2.msra.mxu0 %v4102
        %4435 = vmatprep.subr.mxu0 0.0
        %4436 = vmatpush2.msra.mxu0 %v4101
        %4437 = vmatprep.subr.mxu0 0.0
        %4438 = vmatpush2.msra.mxu0 %v4100
        %4439 = vmatprep.subr.mxu0 0.0
        %4440 = vmatpush2.msra.mxu0 %v4099
        %4441 = vmatprep.subr.mxu0 0.0
        %4442 = vmatpush2.msra.mxu0 %v4098
        %4443 = vmatprep.mubr.f32.mxu0 %v3665
        %4444 = vmatmul.mubr.f32.gmra.mxu0 %v3560
        %v4445 = vpop.f32.mrf.mxu0
        %v4446 = vadd.f32 %v4341, %v4445
        %v4447 = vpop.f32.mrf.mxu0
        %4448 = vmatprep.mubr.f32.mxu0 %v3670
        %4449 = vmatmul.mubr.f32.gmra.mxu0 %v3565
        %v4450 = vpop.f32.mrf.mxu0
        %v4451 = vadd.f32 %v4346, %v4450
        %v4452 = vpop.f32.mrf.mxu0
        %4453 = vmatprep.mubr.f32.mxu0 %v3675
        %4454 = vmatmul.mubr.f32.gmra.mxu0 %v3570
        %v4455 = vpop.f32.mrf.mxu0
        %v4456 = vadd.f32 %v4351, %v4455
        %v4457 = vpop.f32.mrf.mxu0
        %4458 = vmatprep.mubr.f32.mxu0 %v3680
        %4459 = vmatmul.mubr.f32.gmra.mxu0 %v3575
        %v4460 = vpop.f32.mrf.mxu0
        %v4461 = vadd.f32 %v4356, %v4460
        %v4462 = vpop.f32.mrf.mxu0
        %4463 = vmatprep.mubr.f32.mxu0 %v3685
        %4464 = vmatmul.mubr.f32.gmra.mxu0 %v3580
        %v4465 = vpop.f32.mrf.mxu0
        %v4466 = vadd.f32 %v4361, %v4465
        %v4467 = vpop.f32.mrf.mxu0
        %4468 = vmatprep.mubr.f32.mxu0 %v3690
        %4469 = vmatmul.mubr.f32.gmra.mxu0 %v3585
        %v4470 = vpop.f32.mrf.mxu0
        %v4471 = vadd.f32 %v4366, %v4470
        %v4472 = vpop.f32.mrf.mxu0
        %4473 = vmatprep.mubr.f32.mxu0 %v3695
        %4474 = vmatmul.mubr.f32.gmra.mxu0 %v3590
        %v4475 = vpop.f32.mrf.mxu0
        %v4476 = vadd.f32 %v4371, %v4475
        %v4477 = vpop.f32.mrf.mxu0
        %4478 = vmatprep.mubr.f32.mxu0 %v3700
        %4479 = vmatmul.mubr.f32.gmra.mxu0 %v3595
        %v4480 = vpop.f32.mrf.mxu0
        %v4481 = vadd.f32 %v4376, %v4480
        %v4482 = vpop.f32.mrf.mxu0
        %4483 = vdwg.mxu0
        %4484 = vmatprep.subr.mxu0 0.0
        %4485 = vmatpush1.msra.mxu0 %v4129
        %4486 = vmatprep.subr.mxu0 0.0
        %4487 = vmatpush1.msra.mxu0 %v4128
        %4488 = vmatprep.subr.mxu0 0.0
        %4489 = vmatpush1.msra.mxu0 %v4127
        %4490 = vmatprep.subr.mxu0 0.0
        %4491 = vmatpush1.msra.mxu0 %v4126
        %4492 = vmatprep.subr.mxu0 0.0
        %4493 = vmatpush1.msra.mxu0 %v4125
        %4494 = vmatprep.subr.mxu0 0.0
        %4495 = vmatpush1.msra.mxu0 %v4124
        %4496 = vmatprep.subr.mxu0 0.0
        %4497 = vmatpush1.msra.mxu0 %v4123
        %4498 = vmatprep.subr.mxu0 0.0
        %4499 = vmatpush1.msra.mxu0 %v4122
        %4500 = vmatprep.subr.mxu0 0.0
        %4501 = vmatpush1.msra.mxu0 %v4121
        %4502 = vmatprep.subr.mxu0 0.0
        %4503 = vmatpush1.msra.mxu0 %v4120
        %4504 = vmatprep.subr.mxu0 0.0
        %4505 = vmatpush1.msra.mxu0 %v4119
        %4506 = vmatprep.subr.mxu0 0.0
        %4507 = vmatpush1.msra.mxu0 %v4118
        %4508 = vmatprep.subr.mxu0 0.0
        %4509 = vmatpush1.msra.mxu0 %v4117
        %4510 = vmatprep.subr.mxu0 0.0
        %4511 = vmatpush1.msra.mxu0 %v4116
        %4512 = vmatprep.subr.mxu0 0.0
        %4513 = vmatpush1.msra.mxu0 %v4115
        %4514 = vmatprep.subr.mxu0 0.0
        %4515 = vmatpush1.msra.mxu0 %v4114
        %4516 = vmatprep.subr.mxu0 0.0
        %4517 = vmatpush2.msra.mxu0 %v4145
        %4518 = vmatprep.subr.mxu0 0.0
        %4519 = vmatpush2.msra.mxu0 %v4144
        %4520 = vmatprep.subr.mxu0 0.0
        %4521 = vmatpush2.msra.mxu0 %v4143
        %4522 = vmatprep.subr.mxu0 0.0
        %4523 = vmatpush2.msra.mxu0 %v4142
        %4524 = vmatprep.subr.mxu0 0.0
        %4525 = vmatpush2.msra.mxu0 %v4141
        %4526 = vmatprep.subr.mxu0 0.0
        %4527 = vmatpush2.msra.mxu0 %v4140
        %4528 = vmatprep.subr.mxu0 0.0
        %4529 = vmatpush2.msra.mxu0 %v4139
        %4530 = vmatprep.subr.mxu0 0.0
        %4531 = vmatpush2.msra.mxu0 %v4138
        %4532 = vmatprep.subr.mxu0 0.0
        %4533 = vmatpush2.msra.mxu0 %v4137
        %4534 = vmatprep.subr.mxu0 0.0
        %4535 = vmatpush2.msra.mxu0 %v4136
        %4536 = vmatprep.subr.mxu0 0.0
        %4537 = vmatpush2.msra.mxu0 %v4135
        %4538 = vmatprep.subr.mxu0 0.0
        %4539 = vmatpush2.msra.mxu0 %v4134
        %4540 = vmatprep.subr.mxu0 0.0
        %4541 = vmatpush2.msra.mxu0 %v4133
        %4542 = vmatprep.subr.mxu0 0.0
        %4543 = vmatpush2.msra.mxu0 %v4132
        %4544 = vmatprep.subr.mxu0 0.0
        %4545 = vmatpush2.msra.mxu0 %v4131
        %4546 = vmatprep.subr.mxu0 0.0
        %4547 = vmatpush2.msra.mxu0 %v4130
        %4548 = vmatprep.mubr.f32.mxu0 %v3875
        %4549 = vmatmul.mubr.f32.gmra.mxu0 %v3770
        %v4550 = vpop.f32.mrf.mxu0
        %v4551 = vadd.f32 %v4446, %v4550
        %v4552 = vpop.f32.mrf.mxu0
        %4553 = vmatprep.mubr.f32.mxu0 %v3880
        %4554 = vmatmul.mubr.f32.gmra.mxu0 %v3775
        %v4555 = vpop.f32.mrf.mxu0
        %v4556 = vadd.f32 %v4451, %v4555
        %v4557 = vpop.f32.mrf.mxu0
        %4558 = vmatprep.mubr.f32.mxu0 %v3885
        %4559 = vmatmul.mubr.f32.gmra.mxu0 %v3780
        %v4560 = vpop.f32.mrf.mxu0
        %v4561 = vadd.f32 %v4456, %v4560
        %v4562 = vpop.f32.mrf.mxu0
        %4563 = vmatprep.mubr.f32.mxu0 %v3890
        %4564 = vmatmul.mubr.f32.gmra.mxu0 %v3785
        %v4565 = vpop.f32.mrf.mxu0
        %v4566 = vadd.f32 %v4461, %v4565
        %v4567 = vpop.f32.mrf.mxu0
        %4568 = vmatprep.mubr.f32.mxu0 %v3895
        %4569 = vmatmul.mubr.f32.gmra.mxu0 %v3790
        %v4570 = vpop.f32.mrf.mxu0
        %v4571 = vadd.f32 %v4466, %v4570
        %v4572 = vpop.f32.mrf.mxu0
        %4573 = vmatprep.mubr.f32.mxu0 %v3900
        %4574 = vmatmul.mubr.f32.gmra.mxu0 %v3795
        %v4575 = vpop.f32.mrf.mxu0
        %v4576 = vadd.f32 %v4471, %v4575
        %v4577 = vpop.f32.mrf.mxu0
        %4578 = vmatprep.mubr.f32.mxu0 %v3905
        %4579 = vmatmul.mubr.f32.gmra.mxu0 %v3800
        %v4580 = vpop.f32.mrf.mxu0
        %v4581 = vadd.f32 %v4476, %v4580
        %v4582 = vpop.f32.mrf.mxu0
        %4583 = vmatprep.mubr.f32.mxu0 %v3910
        %4584 = vmatmul.mubr.f32.gmra.mxu0 %v3805
        %v4585 = vpop.f32.mrf.mxu0
        %v4586 = vadd.f32 %v4481, %v4585
        %v4587 = vpop.f32.mrf.mxu0
        %4588 = vdwg.mxu0
        %4589 = vmatprep.subr.mxu0 0.0
        %4590 = vmatpush1.msra.mxu0 %v4161
        %4591 = vmatprep.subr.mxu0 0.0
        %4592 = vmatpush1.msra.mxu0 %v4160
        %4593 = vmatprep.subr.mxu0 0.0
        %4594 = vmatpush1.msra.mxu0 %v4159
        %4595 = vmatprep.subr.mxu0 0.0
        %4596 = vmatpush1.msra.mxu0 %v4158
        %4597 = vmatprep.subr.mxu0 0.0
        %4598 = vmatpush1.msra.mxu0 %v4157
        %4599 = vmatprep.subr.mxu0 0.0
        %4600 = vmatpush1.msra.mxu0 %v4156
        %4601 = vmatprep.subr.mxu0 0.0
        %4602 = vmatpush1.msra.mxu0 %v4155
        %4603 = vmatprep.subr.mxu0 0.0
        %4604 = vmatpush1.msra.mxu0 %v4154
        %4605 = vmatprep.subr.mxu0 0.0
        %4606 = vmatpush1.msra.mxu0 %v4153
        %4607 = vmatprep.subr.mxu0 0.0
        %4608 = vmatpush1.msra.mxu0 %v4152
        %4609 = vmatprep.subr.mxu0 0.0
        %4610 = vmatpush1.msra.mxu0 %v4151
        %4611 = vmatprep.subr.mxu0 0.0
        %4612 = vmatpush1.msra.mxu0 %v4150
        %4613 = vmatprep.subr.mxu0 0.0
        %4614 = vmatpush1.msra.mxu0 %v4149
        %4615 = vmatprep.subr.mxu0 0.0
        %4616 = vmatpush1.msra.mxu0 %v4148
        %4617 = vmatprep.subr.mxu0 0.0
        %4618 = vmatpush1.msra.mxu0 %v4147
        %4619 = vmatprep.subr.mxu0 0.0
        %4620 = vmatpush1.msra.mxu0 %v4146
        %4621 = vmatprep.subr.mxu0 0.0
        %4622 = vmatpush2.msra.mxu0 0.0
        %4623 = vmatprep.subr.mxu0 0.0
        %4624 = vmatpush2.msra.mxu0 0.0
        %4625 = vmatprep.subr.mxu0 0.0
        %4626 = vmatpush2.msra.mxu0 0.0
        %4627 = vmatprep.subr.mxu0 0.0
        %4628 = vmatpush2.msra.mxu0 0.0
        %4629 = vmatprep.subr.mxu0 0.0
        %4630 = vmatpush2.msra.mxu0 0.0
        %4631 = vmatprep.subr.mxu0 0.0
        %4632 = vmatpush2.msra.mxu0 0.0
        %4633 = vmatprep.subr.mxu0 0.0
        %4634 = vmatpush2.msra.mxu0 0.0
        %4635 = vmatprep.subr.mxu0 0.0
        %4636 = vmatpush2.msra.mxu0 0.0
        %4637 = vmatprep.subr.mxu0 0.0
        %4638 = vmatpush2.msra.mxu0 0.0
        %4639 = vmatprep.subr.mxu0 0.0
        %4640 = vmatpush2.msra.mxu0 0.0
        %4641 = vmatprep.subr.mxu0 0.0
        %4642 = vmatpush2.msra.mxu0 0.0
        %4643 = vmatprep.subr.mxu0 0.0
        %4644 = vmatpush2.msra.mxu0 0.0
        %4645 = vmatprep.subr.mxu0 0.0
        %4646 = vmatpush2.msra.mxu0 0.0
        %4647 = vmatprep.subr.mxu0 0.0
        %4648 = vmatpush2.msra.mxu0 0.0
        %4649 = vmatprep.subr.mxu0 0.0
        %4650 = vmatpush2.msra.mxu0 0.0
        %4651 = vmatprep.subr.mxu0 0.0
        %4652 = vmatpush2.msra.mxu0 0.0
        %4653 = vmatprep.mubr.f32.mxu0 0.0
        %4654 = vmatmul.mubr.f32.gmra.mxu0 %v3980
        %v4655 = vpop.f32.mrf.mxu0
        %v4656 = vadd.f32 %v4551, %v4655
        %v4657 = vpop.f32.mrf.mxu0
        %4658 = vmatprep.mubr.f32.mxu0 0.0
        %4659 = vmatmul.mubr.f32.gmra.mxu0 %v3985
        %v4660 = vpop.f32.mrf.mxu0
        %v4661 = vadd.f32 %v4556, %v4660
        %v4662 = vpop.f32.mrf.mxu0
        %4663 = vmatprep.mubr.f32.mxu0 0.0
        %4664 = vmatmul.mubr.f32.gmra.mxu0 %v3990
        %v4665 = vpop.f32.mrf.mxu0
        %v4666 = vadd.f32 %v4561, %v4665
        %v4667 = vpop.f32.mrf.mxu0
        %4668 = vmatprep.mubr.f32.mxu0 0.0
        %4669 = vmatmul.mubr.f32.gmra.mxu0 %v3995
        %v4670 = vpop.f32.mrf.mxu0
        %v4671 = vadd.f32 %v4566, %v4670
        %v4672 = vpop.f32.mrf.mxu0
        %4673 = vmatprep.mubr.f32.mxu0 0.0
        %4674 = vmatmul.mubr.f32.gmra.mxu0 %v4000
        %v4675 = vpop.f32.mrf.mxu0
        %v4676 = vadd.f32 %v4571, %v4675
        %v4677 = vpop.f32.mrf.mxu0
        %4678 = vmatprep.mubr.f32.mxu0 0.0
        %4679 = vmatmul.mubr.f32.gmra.mxu0 %v4005
        %v4680 = vpop.f32.mrf.mxu0
        %v4681 = vadd.f32 %v4576, %v4680
        %v4682 = vpop.f32.mrf.mxu0
        %4683 = vmatprep.mubr.f32.mxu0 0.0
        %4684 = vmatmul.mubr.f32.gmra.mxu0 %v4010
        %v4685 = vpop.f32.mrf.mxu0
        %v4686 = vadd.f32 %v4581, %v4685
        %v4687 = vpop.f32.mrf.mxu0
        %4688 = vmatprep.mubr.f32.mxu0 0.0
        %4689 = vmatmul.mubr.f32.gmra.mxu0 %v4015
        %v4690 = vpop.f32.mrf.mxu0
        %v4691 = vadd.f32 %v4586, %v4690
        %v4692 = vpop.f32.mrf.mxu0
        %4693 = vdwg.mxu0
        %4694 = vst [vmem:[%s447] sm:$0xff] %v4656
        %4695 = vst [vmem:[%s447 + $0x8] sm:$0xff] %v4661
        %4696 = vst [vmem:[%s447 + $0x10] sm:$0xff] %v4666
        %4697 = vst [vmem:[%s447 + $0x18] sm:$0xff] %v4671
        %4698 = vst [vmem:[%s447 + $0x20] sm:$0xff] %v4676
        %4699 = vst [vmem:[%s447 + $0x28] sm:$0xff] %v4681
        %4700 = vst [vmem:[%s447 + $0x30] sm:$0xff] %v4686
        %4701 = vst [vmem:[%s447 + $0x38] sm:$0xff] %v4691
        %p4702 = scmp.lt.s32.totalorder %s24, 1
        %s4703 = scalar_select %p4702, %s24, 1
        %s4704 = smul.addr %s4703, 8
        %s4705 = smul.addr %s4704, 8
        %s4706 = scalar_lea.vmem %s11, %s4705
        // Predicated region
        $region77: #{cross_attention_forward.1} parent=63 // pred_check
          %p4707 = pneg %p283
        $region78: #{cross_attention_forward.1} parent=63 // pred_check_branch
          %4709 = sbr.rel (%p4707) target = $region80
        $region79: #{cross_attention_forward.1} parent=63 // pred_region
          _
        $region80: #{cross_attention_forward.1} parent=63 // pred_fallthru
          _
      $region64: #{cross_attention_forward.1} parent=5 // pred_fallthru
        _
      %p4710 = scmp.le.s32.totalorder 2, %s19
      // Predicated region
      $region81: #{cross_attention_forward.1} parent=5 // pred_check
        %p4711 = pneg %p4710
      $region82: #{cross_attention_forward.1} parent=5 // pred_check_branch
        %4713 = sbr.rel (%p4711) target = $region84
      $region83: #{cross_attention_forward.1} parent=5 // pred_region
        %s4714 = ssub.s32 %s19, 2
        // Predicated region
        $region85: #{cross_attention_forward.1} parent=83 // pred_check
          %p4715 = pneg %p289
        $region86: #{cross_attention_forward.1} parent=83 // pred_check_branch
          %4717 = sbr.rel (%p4715) target = $region88
        $region87: #{cross_attention_forward.1} parent=83 // pred_region
          %p4718 = scmp.lt.s32.totalorder %s25, 1
          %s4719 = scalar_select %p4718, %s25, 1
          %s4720 = smul.addr %s4719, 8
          %s4721 = smul.addr %s4720, 8
          %s4722 = scalar_lea.vmem %s11, %s4721
        $region88: #{cross_attention_forward.1} parent=83 // pred_fallthru
          _
      $region84: #{cross_attention_forward.1} parent=5 // pred_fallthru
        _
    $region6: #{cross_attention_forward.1} parent=1 // loop_footer
      %s23 = sadd.s32 1, %s19
    $region7: #{cross_attention_forward.1} parent=1 // loop_footer_branch
      %18 = sbr.rel target = $region3
    $region8: #{cross_attention_forward.1} parent=1 // loop_exit
      _
    %4723 = vsyncpa [#allocation3], 1
    %s4724 = scalar_lea.sflag [#allocation3], 1
    %4725 = vsyncpa %s4724, 1
    %4726 = vsyncpa [#allocation5], 1

</llo_original>
